<compile_context>
chip_gen: v6e
topology: v6e:2x2x1
jax: 0.10.0
libtpu: 0.0.40
codegen_flags: <defaults>
</compile_context>

<pallas_src>
import functools

import jax
import jax.numpy as jnp
from jax import lax
from jax.experimental import pallas as pl
from jax.experimental.pallas import tpu as pltpu

LANE = 128
SUBLANE = 8


def _round_up(n, m):
    return ((n + m - 1) // m) * m


def rnn_chunk_kernel(hidden_size, output_size, block_t,
                     xw_ref, h0_ref, wh_ref, out_ref, state_ref):
    """One time-chunk of the recurrence.

    xw_ref   : [TC, BB, P]  pre-projected inputs (x @ Wx + b) for this chunk
    h0_ref   : [BB, P]      initial hidden packed into lanes [0:H]   (resident)
    wh_ref   : [P, P]       fused hidden weights (rows [H:P] zero)   (resident)
    out_ref  : [TC, BB, P]  lanes [0:H]=hidden_t, [H:H+O]=log-probs_t
    state_ref: [BB, P]      recurrent state carried across time chunks
    """
    t_chunk = pl.program_id(1)

    @pl.when(t_chunk == 0)
    def _():
        state_ref[...] = h0_ref[...]

    wh = wh_ref[...]  # resident weights, loaded once per chunk

    # Serial recurrence: state is a register carry; each step is exactly one
    # MXU matmul + one add + one store. Wh rows >= H are zero, so the logit /
    # pad lanes of the carried slab cannot contaminate the next hidden state.
    def step(t, state):
        acc = xw_ref[t] + jnp.dot(state.astype(wh.dtype), wh,
                                  preferred_element_type=jnp.float32)
        out_ref[t] = acc
        return acc

    state_ref[...] = lax.fori_loop(0, block_t, step, state_ref[...],
                                   unroll=True)

    # Deferred, vectorised log-softmax over the whole chunk (off the serial
    # critical path): logit lanes [H:H+O] -> log-probs; hidden/pad lanes keep
    # the raw accumulator so the final hidden can be sliced out by the wrapper.
    acc_all = out_ref[...]
    lane = lax.broadcasted_iota(jnp.int32, acc_all.shape, 2)
    is_logit = jnp.logical_and(lane >= hidden_size,
                               lane < hidden_size + output_size)
    masked = jnp.where(is_logit, acc_all, -jnp.inf)
    m = jnp.max(masked, axis=-1, keepdims=True)
    lse = jnp.log(jnp.sum(jnp.exp(masked - m), axis=-1, keepdims=True))
    out_ref[...] = jnp.where(is_logit, acc_all - m - lse, acc_all)


def prepare_params(w_i2h, b_i2h, w_i2o, b_i2o, dot_dtype=jnp.float32):
    """One-time parameter prep (hoisted out of the forward path).

    w_i2h: [H, I+H], w_i2o: [O, I+H]  (PyTorch Linear layout [out, in]).
    dot_dtype: matmul-operand dtype (jnp.bfloat16 for native MXU on v6e/v7x;
               the recurrent state and the log-softmax always stay float32).
    """
    H, C = w_i2h.shape
    O = w_i2o.shape[0]
    I = C - H
    P = _round_up(H + O, LANE)

    w_fused = jnp.concatenate(
        [jnp.transpose(w_i2h), jnp.transpose(w_i2o)], axis=1
    ).astype(jnp.float32)                                           # [I+H, H+O]
    wx = jnp.zeros((I, P), jnp.float32).at[:, :H + O].set(w_fused[:I])
    wh = jnp.zeros((P, P), jnp.float32).at[:H, :H + O].set(w_fused[I:])
    b = jnp.zeros((1, P), jnp.float32).at[0, :H + O].set(
        jnp.concatenate([b_i2h, b_i2o]).astype(jnp.float32))
    # Note (v7x): Wh is P x P resident in VMEM; for large H+O keep it bf16 and
    # tile its output-lane dim against the 64 MiB VMEM budget.
    return dict(wx=wx.astype(dot_dtype), wh=wh.astype(dot_dtype), b=b,
                input_size=I, hidden_size=H, output_size=O, padded=P)


def rnn_sequence(x_seq, h0, params, *, block_t=32, block_b=8):
    """Run the whole recurrence in ONE pallas_call.

    x_seq: [T, B, I], h0: [B, H]
    Returns (log_probs [T, B, O], final_hidden [B, H]).
    """
    I = params["input_size"]
    H = params["hidden_size"]
    O = params["output_size"]
    P = params["padded"]
    wx, wh, b = params["wx"], params["wh"], params["b"]

    T, B, _ = x_seq.shape
    Bp = _round_up(max(B, SUBLANE), SUBLANE)
    BB = max(SUBLANE, (min(block_b, Bp) // SUBLANE) * SUBLANE)
    while Bp % BB:                       # batch blocks must tile the padded batch
        BB -= SUBLANE
    TC = max(1, min(block_t, T))
    Tp = _round_up(T, TC)
    nb, nt = Bp // BB, Tp // TC

    x_pad = jnp.zeros((Tp, Bp, I), jnp.float32).at[:T, :B, :].set(
        x_seq.astype(jnp.float32))
    h0_pad = jnp.zeros((Bp, P), jnp.float32).at[:B, :H].set(
        h0.astype(jnp.float32))

    # Hoisted input projection: one big [Tp*Bp, I] x [I, P] matmul (plain XLA),
    # off the serial critical path; the kernel streams xw instead of x.
    xw = jnp.einsum("tbi,ip->tbp", x_pad.astype(wx.dtype), wx,
                    preferred_element_type=jnp.float32,
                    precision=lax.Precision.HIGHEST) + b

    kernel = functools.partial(rnn_chunk_kernel, H, O, TC)

    flops = Tp * Bp * (2 * P * P + 8 * P)
    transcendentals = Tp * Bp * (P + 1)
    bytes_accessed = 4 * (2 * Tp * Bp * P + Bp * P + P * P)

    slab = pl.pallas_call(
        kernel,
        out_shape=jax.ShapeDtypeStruct((Tp, Bp, P), jnp.float32),
        grid_spec=pltpu.PrefetchScalarGridSpec(
            num_scalar_prefetch=0,
            grid=(nb, nt),
            in_specs=[
                pl.BlockSpec((TC, BB, P), lambda bb, tt: (tt, bb, 0)),  # xw chunk
                pl.BlockSpec((BB, P), lambda bb, tt: (bb, 0)),          # h0 (resident)
                pl.BlockSpec((P, P), lambda bb, tt: (0, 0)),            # Wh (resident)
            ],
            out_specs=pl.BlockSpec((TC, BB, P), lambda bb, tt: (tt, bb, 0)),
            scratch_shapes=[pltpu.VMEM((BB, P), jnp.float32)],  # recurrent state
        ),
        compiler_params=pltpu.CompilerParams(
            # batch blocks are independent (v7x second TensorCore when nb >= 2);
            # time chunks are a true recurrence and must stay sequential.
            dimension_semantics=("parallel", "arbitrary")),
        cost_estimate=pl.CostEstimate(
            flops=flops,
            transcendentals=transcendentals,
            bytes_accessed=bytes_accessed),
    )(xw, h0_pad, wh)

    log_probs = slab[:T, :B, H:H + O]
    final_hidden = slab[T - 1, :B, :H]
    return log_probs, final_hidden


def rnn_forward(x, h, params):
    """Exact analogue of RNN.forward(input, hidden): one step.

    x: [B, I], h: [B, H] -> (log_softmax(i2o(cat(x,h))), i2h(cat(x,h)))
    """
    log_probs, hidden = rnn_sequence(x[None], h, params)
    return log_probs[0], hidden


def init_params(key, input_size, hidden_size, output_size):
    """Deterministic init mirroring nn.Linear default (uniform +/- 1/sqrt(fan_in))."""
    k1, k2, k3, k4 = jax.random.split(key, 4)
    fan_in = input_size + hidden_size
    bound = 1.0 / jnp.sqrt(fan_in)
    w_i2h = jax.random.uniform(k1, (hidden_size, fan_in), jnp.float32, -bound, bound)
    b_i2h = jax.random.uniform(k2, (hidden_size,), jnp.float32, -bound, bound)
    w_i2o = jax.random.uniform(k3, (output_size, fan_in), jnp.float32, -bound, bound)
    b_i2o = jax.random.uniform(k4, (output_size,), jnp.float32, -bound, bound)
    return w_i2h, b_i2h, w_i2o, b_i2o


if __name__ == "__main__":
    # Keep XLA-side reference / projection matmuls in full f32 for tight checks.
    jax.config.update("jax_default_matmul_precision", "highest")

    key = jax.random.PRNGKey(0)
    B, I, H, O, T = 2, 16, 32, 8, 8

    kx, kp = jax.random.split(key, 2)
    x_seq = jax.random.normal(kx, (T, B, I), jnp.float32)
    h0 = jnp.zeros((B, H), jnp.float32)   # mirrors initHidden(), broadcast to batch

    w_i2h, b_i2h, w_i2o, b_i2o = init_params(kp, I, H, O)

    # ---------------- f32 path (exact semantics) ----------------
    params = prepare_params(w_i2h, b_i2h, w_i2o, b_i2o)
    log_probs, h_final = rnn_sequence(x_seq, h0, params)
    log_probs = jax.block_until_ready(log_probs)
    h_final = jax.block_until_ready(h_final)

    # Single-step API identical to the module's forward signature.
    out1, hid1 = rnn_forward(x_seq[0], h0, params)
    out1 = jax.block_until_ready(out1)
    hid1 = jax.block_until_ready(hid1)

    # Pure-JAX reference: loop the PyTorch module's forward.
    h = h0
    ref_outs = []
    for t in range(T):
        comb = jnp.concatenate([x_seq[t], h], axis=1)
        h = comb @ w_i2h.T + b_i2h
        logits = comb @ w_i2o.T + b_i2o
        ref_outs.append(jax.nn.log_softmax(logits, axis=1))
    ref_outs = jnp.stack(ref_outs)

    assert jnp.allclose(log_probs, ref_outs, atol=1e-4), "sequence output mismatch"
    assert jnp.allclose(h_final, h, atol=1e-4), "final hidden mismatch"
    assert jnp.allclose(out1, ref_outs[0], atol=1e-4), "single-step output mismatch"
    comb0 = jnp.concatenate([x_seq[0], h0], axis=1)
    assert jnp.allclose(hid1, comb0 @ w_i2h.T + b_i2h, atol=1e-4), \
        "single-step hidden mismatch"

    # ------- bf16-weight path (native MXU on v6e/v7x; state/softmax stay f32) -------
    params_bf16 = prepare_params(w_i2h, b_i2h, w_i2o, b_i2o,
                                 dot_dtype=jnp.bfloat16)
    lp_bf16, h_bf16 = rnn_sequence(x_seq, h0, params_bf16)
    lp_bf16 = jax.block_until_ready(lp_bf16)
    h_bf16 = jax.block_until_ready(h_bf16)
    assert bool(jnp.isfinite(lp_bf16).all()) and bool(jnp.isfinite(h_bf16).all()), \
        "bf16 path produced non-finite values"
    assert jnp.allclose(lp_bf16, ref_outs, atol=0.25), "bf16 output diverged"

    print("KERNEL_OK")
</pallas_src>

<mosaic_0001>
module attributes {stable_mosaic.version = 11 : i64} {
  func.func @rnn_chunk_kernel(%arg0: i32, %arg1: i32, %arg2: memref<8x8x128xf32, #tpu.memory_space<vmem>>, %arg3: memref<8x128xf32, #tpu.memory_space<vmem>>, %arg4: memref<128x128xf32, #tpu.memory_space<vmem>>, %arg5: memref<8x8x128xf32, #tpu.memory_space<vmem>>, %arg6: memref<8x128xf32, #tpu.memory_space<vmem>>) attributes {dimension_semantics = [#tpu.dimension_semantics<parallel>, #tpu.dimension_semantics<arbitrary>], iteration_bounds = array<i64: 1, 1>, scalar_prefetch = 0 : i64, scratch_operands = 1 : i64, tpu.core_type = #tpu.core_type<tc>, window_params = [{transform_indices = @transform_0, window_bounds = array<i64: 8, 8, 128>}, {transform_indices = @transform_1, window_bounds = array<i64: 8, 128>}, {pipeline_mode = #tpu.pipeline_mode<synchronous>, transform_indices = @transform_2, window_bounds = array<i64: 128, 128>}, {transform_indices = @transform_3, window_bounds = array<i64: 8, 8, 128>}]} {
    %c0_i32 = arith.constant 0 : i32
    %0 = arith.cmpi eq, %arg1, %c0_i32 : i32
    %1 = arith.extui %0 : i1 to i32
    %c0_i32_0 = arith.constant 0 : i32
    %2 = arith.cmpi ne, %1, %c0_i32_0 : i32
    scf.if %2 {
      %c0_55 = arith.constant 0 : index
      %c0_56 = arith.constant 0 : index
      %101 = vector.load %arg3[%c0_55, %c0_56] : memref<8x128xf32, #tpu.memory_space<vmem>>, vector<8x128xf32>
      %c0_57 = arith.constant 0 : index
      %c0_58 = arith.constant 0 : index
      %102 = vector.load %arg6[%c0_57, %c0_58] : memref<8x128xf32, #tpu.memory_space<vmem>>, vector<8x128xf32>
      tpu.vector_store %arg6[%c0_57, %c0_58], %101 {strides = array<i32>} : memref<8x128xf32, #tpu.memory_space<vmem>>, vector<8x128xf32>,
    } else {
    }
    %c0 = arith.constant 0 : index
    %c0_1 = arith.constant 0 : index
    %3 = vector.load %arg4[%c0, %c0_1] : memref<128x128xf32, #tpu.memory_space<vmem>>, vector<128x128xf32>
    %c0_2 = arith.constant 0 : index
    %c0_3 = arith.constant 0 : index
    %4 = vector.load %arg6[%c0_2, %c0_3] : memref<8x128xf32, #tpu.memory_space<vmem>>, vector<8x128xf32>
    %c0_i32_4 = arith.constant 0 : i32
    %5 = arith.index_cast %c0_i32_4 : i32 to index
    %c0_5 = arith.constant 0 : index
    %c0_6 = arith.constant 0 : index
    %6 = vector.load %arg2[%5, %c0_5, %c0_6] : memref<8x8x128xf32, #tpu.memory_space<vmem>>, vector<1x8x128xf32>
    %7 = vector.shape_cast %6 : vector<1x8x128xf32> to vector<8x128xf32>
    %cst = arith.constant dense<0.000000e+00> : vector<8x128xf32>
    %8 = tpu.matmul %4, %3, %cst {dimension_numbers = #tpu.dot_dimension_numbers<[1], [0], [0], [1], [0, 0, 1, 1], [], []>, precision = #tpu.contract_precision<fp32>} : vector<8x128xf32>, vector<128x128xf32>, vector<8x128xf32> -> vector<8x128xf32>
    %9 = arith.addf %7, %8 : vector<8x128xf32>
    %10 = arith.index_cast %c0_i32_4 : i32 to index
    %c0_7 = arith.constant 0 : index
    %c0_8 = arith.constant 0 : index
    %11 = vector.load %arg5[%10, %c0_7, %c0_8] : memref<8x8x128xf32, #tpu.memory_space<vmem>>, vector<1x8x128xf32>
    %12 = vector.shape_cast %11 : vector<1x8x128xf32> to vector<8x128xf32>
    %13 = vector.shape_cast %9 : vector<8x128xf32> to vector<1x8x128xf32>
    tpu.vector_store %arg5[%10, %c0_7, %c0_8], %13 {strides = array<i32>} : memref<8x8x128xf32, #tpu.memory_space<vmem>>, vector<1x8x128xf32>,
    %c1_i32 = arith.constant 1 : i32
    %14 = arith.index_cast %c1_i32 : i32 to index
    %c0_9 = arith.constant 0 : index
    %c0_10 = arith.constant 0 : index
    %15 = vector.load %arg2[%14, %c0_9, %c0_10] : memref<8x8x128xf32, #tpu.memory_space<vmem>>, vector<1x8x128xf32>
    %16 = vector.shape_cast %15 : vector<1x8x128xf32> to vector<8x128xf32>
    %cst_11 = arith.constant dense<0.000000e+00> : vector<8x128xf32>
    %17 = tpu.matmul %9, %3, %cst_11 {dimension_numbers = #tpu.dot_dimension_numbers<[1], [0], [0], [1], [0, 0, 1, 1], [], []>, precision = #tpu.contract_precision<fp32>} : vector<8x128xf32>, vector<128x128xf32>, vector<8x128xf32> -> vector<8x128xf32>
    %18 = arith.addf %16, %17 : vector<8x128xf32>
    %19 = arith.index_cast %c1_i32 : i32 to index
    %c0_12 = arith.constant 0 : index
    %c0_13 = arith.constant 0 : index
    %20 = vector.load %arg5[%19, %c0_12, %c0_13] : memref<8x8x128xf32, #tpu.memory_space<vmem>>, vector<1x8x128xf32>
    %21 = vector.shape_cast %20 : vector<1x8x128xf32> to vector<8x128xf32>
    %22 = vector.shape_cast %18 : vector<8x128xf32> to vector<1x8x128xf32>
    tpu.vector_store %arg5[%19, %c0_12, %c0_13], %22 {strides = array<i32>} : memref<8x8x128xf32, #tpu.memory_space<vmem>>, vector<1x8x128xf32>,
    %c2_i32 = arith.constant 2 : i32
    %23 = arith.index_cast %c2_i32 : i32 to index
    %c0_14 = arith.constant 0 : index
    %c0_15 = arith.constant 0 : index
    %24 = vector.load %arg2[%23, %c0_14, %c0_15] : memref<8x8x128xf32, #tpu.memory_space<vmem>>, vector<1x8x128xf32>
    %25 = vector.shape_cast %24 : vector<1x8x128xf32> to vector<8x128xf32>
    %cst_16 = arith.constant dense<0.000000e+00> : vector<8x128xf32>
    %26 = tpu.matmul %18, %3, %cst_16 {dimension_numbers = #tpu.dot_dimension_numbers<[1], [0], [0], [1], [0, 0, 1, 1], [], []>, precision = #tpu.contract_precision<fp32>} : vector<8x128xf32>, vector<128x128xf32>, vector<8x128xf32> -> vector<8x128xf32>
    %27 = arith.addf %25, %26 : vector<8x128xf32>
    %28 = arith.index_cast %c2_i32 : i32 to index
    %c0_17 = arith.constant 0 : index
    %c0_18 = arith.constant 0 : index
    %29 = vector.load %arg5[%28, %c0_17, %c0_18] : memref<8x8x128xf32, #tpu.memory_space<vmem>>, vector<1x8x128xf32>
    %30 = vector.shape_cast %29 : vector<1x8x128xf32> to vector<8x128xf32>
    %31 = vector.shape_cast %27 : vector<8x128xf32> to vector<1x8x128xf32>
    tpu.vector_store %arg5[%28, %c0_17, %c0_18], %31 {strides = array<i32>} : memref<8x8x128xf32, #tpu.memory_space<vmem>>, vector<1x8x128xf32>,
    %c3_i32 = arith.constant 3 : i32
    %32 = arith.index_cast %c3_i32 : i32 to index
    %c0_19 = arith.constant 0 : index
    %c0_20 = arith.constant 0 : index
    %33 = vector.load %arg2[%32, %c0_19, %c0_20] : memref<8x8x128xf32, #tpu.memory_space<vmem>>, vector<1x8x128xf32>
    %34 = vector.shape_cast %33 : vector<1x8x128xf32> to vector<8x128xf32>
    %cst_21 = arith.constant dense<0.000000e+00> : vector<8x128xf32>
    %35 = tpu.matmul %27, %3, %cst_21 {dimension_numbers = #tpu.dot_dimension_numbers<[1], [0], [0], [1], [0, 0, 1, 1], [], []>, precision = #tpu.contract_precision<fp32>} : vector<8x128xf32>, vector<128x128xf32>, vector<8x128xf32> -> vector<8x128xf32>
    %36 = arith.addf %34, %35 : vector<8x128xf32>
    %37 = arith.index_cast %c3_i32 : i32 to index
    %c0_22 = arith.constant 0 : index
    %c0_23 = arith.constant 0 : index
    %38 = vector.load %arg5[%37, %c0_22, %c0_23] : memref<8x8x128xf32, #tpu.memory_space<vmem>>, vector<1x8x128xf32>
    %39 = vector.shape_cast %38 : vector<1x8x128xf32> to vector<8x128xf32>
    %40 = vector.shape_cast %36 : vector<8x128xf32> to vector<1x8x128xf32>
    tpu.vector_store %arg5[%37, %c0_22, %c0_23], %40 {strides = array<i32>} : memref<8x8x128xf32, #tpu.memory_space<vmem>>, vector<1x8x128xf32>,
    %c4_i32 = arith.constant 4 : i32
    %41 = arith.index_cast %c4_i32 : i32 to index
    %c0_24 = arith.constant 0 : index
    %c0_25 = arith.constant 0 : index
    %42 = vector.load %arg2[%41, %c0_24, %c0_25] : memref<8x8x128xf32, #tpu.memory_space<vmem>>, vector<1x8x128xf32>
    %43 = vector.shape_cast %42 : vector<1x8x128xf32> to vector<8x128xf32>
    %cst_26 = arith.constant dense<0.000000e+00> : vector<8x128xf32>
    %44 = tpu.matmul %36, %3, %cst_26 {dimension_numbers = #tpu.dot_dimension_numbers<[1], [0], [0], [1], [0, 0, 1, 1], [], []>, precision = #tpu.contract_precision<fp32>} : vector<8x128xf32>, vector<128x128xf32>, vector<8x128xf32> -> vector<8x128xf32>
    %45 = arith.addf %43, %44 : vector<8x128xf32>
    %46 = arith.index_cast %c4_i32 : i32 to index
    %c0_27 = arith.constant 0 : index
    %c0_28 = arith.constant 0 : index
    %47 = vector.load %arg5[%46, %c0_27, %c0_28] : memref<8x8x128xf32, #tpu.memory_space<vmem>>, vector<1x8x128xf32>
    %48 = vector.shape_cast %47 : vector<1x8x128xf32> to vector<8x128xf32>
    %49 = vector.shape_cast %45 : vector<8x128xf32> to vector<1x8x128xf32>
    tpu.vector_store %arg5[%46, %c0_27, %c0_28], %49 {strides = array<i32>} : memref<8x8x128xf32, #tpu.memory_space<vmem>>, vector<1x8x128xf32>,
    %c5_i32 = arith.constant 5 : i32
    %50 = arith.index_cast %c5_i32 : i32 to index
    %c0_29 = arith.constant 0 : index
    %c0_30 = arith.constant 0 : index
    %51 = vector.load %arg2[%50, %c0_29, %c0_30] : memref<8x8x128xf32, #tpu.memory_space<vmem>>, vector<1x8x128xf32>
    %52 = vector.shape_cast %51 : vector<1x8x128xf32> to vector<8x128xf32>
    %cst_31 = arith.constant dense<0.000000e+00> : vector<8x128xf32>
    %53 = tpu.matmul %45, %3, %cst_31 {dimension_numbers = #tpu.dot_dimension_numbers<[1], [0], [0], [1], [0, 0, 1, 1], [], []>, precision = #tpu.contract_precision<fp32>} : vector<8x128xf32>, vector<128x128xf32>, vector<8x128xf32> -> vector<8x128xf32>
    %54 = arith.addf %52, %53 : vector<8x128xf32>
    %55 = arith.index_cast %c5_i32 : i32 to index
    %c0_32 = arith.constant 0 : index
    %c0_33 = arith.constant 0 : index
    %56 = vector.load %arg5[%55, %c0_32, %c0_33] : memref<8x8x128xf32, #tpu.memory_space<vmem>>, vector<1x8x128xf32>
    %57 = vector.shape_cast %56 : vector<1x8x128xf32> to vector<8x128xf32>
    %58 = vector.shape_cast %54 : vector<8x128xf32> to vector<1x8x128xf32>
    tpu.vector_store %arg5[%55, %c0_32, %c0_33], %58 {strides = array<i32>} : memref<8x8x128xf32, #tpu.memory_space<vmem>>, vector<1x8x128xf32>,
    %c6_i32 = arith.constant 6 : i32
    %59 = arith.index_cast %c6_i32 : i32 to index
    %c0_34 = arith.constant 0 : index
    %c0_35 = arith.constant 0 : index
    %60 = vector.load %arg2[%59, %c0_34, %c0_35] : memref<8x8x128xf32, #tpu.memory_space<vmem>>, vector<1x8x128xf32>
    %61 = vector.shape_cast %60 : vector<1x8x128xf32> to vector<8x128xf32>
    %cst_36 = arith.constant dense<0.000000e+00> : vector<8x128xf32>
    %62 = tpu.matmul %54, %3, %cst_36 {dimension_numbers = #tpu.dot_dimension_numbers<[1], [0], [0], [1], [0, 0, 1, 1], [], []>, precision = #tpu.contract_precision<fp32>} : vector<8x128xf32>, vector<128x128xf32>, vector<8x128xf32> -> vector<8x128xf32>
    %63 = arith.addf %61, %62 : vector<8x128xf32>
    %64 = arith.index_cast %c6_i32 : i32 to index
    %c0_37 = arith.constant 0 : index
    %c0_38 = arith.constant 0 : index
    %65 = vector.load %arg5[%64, %c0_37, %c0_38] : memref<8x8x128xf32, #tpu.memory_space<vmem>>, vector<1x8x128xf32>
    %66 = vector.shape_cast %65 : vector<1x8x128xf32> to vector<8x128xf32>
    %67 = vector.shape_cast %63 : vector<8x128xf32> to vector<1x8x128xf32>
    tpu.vector_store %arg5[%64, %c0_37, %c0_38], %67 {strides = array<i32>} : memref<8x8x128xf32, #tpu.memory_space<vmem>>, vector<1x8x128xf32>,
    %c7_i32 = arith.constant 7 : i32
    %68 = arith.index_cast %c7_i32 : i32 to index
    %c0_39 = arith.constant 0 : index
    %c0_40 = arith.constant 0 : index
    %69 = vector.load %arg2[%68, %c0_39, %c0_40] : memref<8x8x128xf32, #tpu.memory_space<vmem>>, vector<1x8x128xf32>
    %70 = vector.shape_cast %69 : vector<1x8x128xf32> to vector<8x128xf32>
    %cst_41 = arith.constant dense<0.000000e+00> : vector<8x128xf32>
    %71 = tpu.matmul %63, %3, %cst_41 {dimension_numbers = #tpu.dot_dimension_numbers<[1], [0], [0], [1], [0, 0, 1, 1], [], []>, precision = #tpu.contract_precision<fp32>} : vector<8x128xf32>, vector<128x128xf32>, vector<8x128xf32> -> vector<8x128xf32>
    %72 = arith.addf %70, %71 : vector<8x128xf32>
    %73 = arith.index_cast %c7_i32 : i32 to index
    %c0_42 = arith.constant 0 : index
    %c0_43 = arith.constant 0 : index
    %74 = vector.load %arg5[%73, %c0_42, %c0_43] : memref<8x8x128xf32, #tpu.memory_space<vmem>>, vector<1x8x128xf32>
    %75 = vector.shape_cast %74 : vector<1x8x128xf32> to vector<8x128xf32>
    %76 = vector.shape_cast %72 : vector<8x128xf32> to vector<1x8x128xf32>
    tpu.vector_store %arg5[%73, %c0_42, %c0_43], %76 {strides = array<i32>} : memref<8x8x128xf32, #tpu.memory_space<vmem>>, vector<1x8x128xf32>,
    %c8_i32 = arith.constant 8 : i32
    %c0_44 = arith.constant 0 : index
    %c0_45 = arith.constant 0 : index
    %77 = vector.load %arg6[%c0_44, %c0_45] : memref<8x128xf32, #tpu.memory_space<vmem>>, vector<8x128xf32>
    tpu.vector_store %arg6[%c0_44, %c0_45], %72 {strides = array<i32>} : memref<8x128xf32, #tpu.memory_space<vmem>>, vector<8x128xf32>,
    %c0_46 = arith.constant 0 : index
    %c0_47 = arith.constant 0 : index
    %c0_48 = arith.constant 0 : index
    %78 = vector.load %arg5[%c0_46, %c0_47, %c0_48] : memref<8x8x128xf32, #tpu.memory_space<vmem>>, vector<8x8x128xf32>
    %79 = tpu.iota {dimensions = array<i32: 2>} : vector<8x8x128xi32>
    %c32_i32 = arith.constant 32 : i32
    %80 = vector.broadcast %c32_i32 : i32 to vector<8x8x128xi32>
    %81 = arith.cmpi sge, %79, %80 : vector<8x8x128xi32>
    %c40_i32 = arith.constant 40 : i32
    %82 = vector.broadcast %c40_i32 : i32 to vector<8x8x128xi32>
    %83 = arith.cmpi slt, %79, %82 : vector<8x8x128xi32>
    %84 = arith.andi %81, %83 : vector<8x8x128xi1>
    %cst_49 = arith.constant 0xFF800000 : f32
    %85 = vector.broadcast %cst_49 : f32 to vector<8x8x128xf32>
    %86 = arith.select %84, %78, %85 : vector<8x8x128xi1>, vector<8x8x128xf32>
    %cst_50 = arith.constant dense<0xFF800000> : vector<8x8xf32>
    %87 = vector.multi_reduction <maximumf>, %86, %cst_50 [2] : vector<8x8x128xf32> to vector<8x8xf32>
    %88 = vector.shape_cast %87 : vector<8x8xf32> to vector<8x8x1xf32>
    %89 = vector.broadcast %88 : vector<8x8x1xf32> to vector<8x8x128xf32>
    %90 = arith.subf %86, %89 : vector<8x8x128xf32>
    %91 = math.exp %90 : vector<8x8x128xf32>
    %cst_51 = arith.constant dense<0.000000e+00> : vector<8x8xf32>
    %92 = vector.multi_reduction <add>, %91, %cst_51 [2] : vector<8x8x128xf32> to vector<8x8xf32>
    %93 = vector.shape_cast %92 : vector<8x8xf32> to vector<8x8x1xf32>
    %94 = math.log %93 : vector<8x8x1xf32>
    %95 = vector.broadcast %88 : vector<8x8x1xf32> to vector<8x8x128xf32>
    %96 = arith.subf %78, %95 : vector<8x8x128xf32>
    %97 = vector.broadcast %94 : vector<8x8x1xf32> to vector<8x8x128xf32>
    %98 = arith.subf %96, %97 : vector<8x8x128xf32>
    %99 = arith.select %84, %98, %78 : vector<8x8x128xi1>, vector<8x8x128xf32>
    %c0_52 = arith.constant 0 : index
    %c0_53 = arith.constant 0 : index
    %c0_54 = arith.constant 0 : index
    %100 = vector.load %arg5[%c0_52, %c0_53, %c0_54] : memref<8x8x128xf32, #tpu.memory_space<vmem>>, vector<8x8x128xf32>
    tpu.vector_store %arg5[%c0_52, %c0_53, %c0_54], %99 {strides = array<i32>} : memref<8x8x128xf32, #tpu.memory_space<vmem>>, vector<8x8x128xf32>,
    return
  }
  func.func @transform_0(%arg0: i32, %arg1: i32) -> (i32, i32, i32) {
    %c0_i32 = arith.constant 0 : i32
    %c0_i32_0 = arith.constant 0 : i32
    return %arg1, %arg0, %c0_i32 : i32, i32, i32
  }
  func.func @transform_1(%arg0: i32, %arg1: i32) -> (i32, i32) {
    %c0_i32 = arith.constant 0 : i32
    %c0_i32_0 = arith.constant 0 : i32
    return %arg0, %c0_i32 : i32, i32
  }
  func.func @transform_2(%arg0: i32, %arg1: i32) -> (i32, i32) {
    %c0_i32 = arith.constant 0 : i32
    %c0_i32_0 = arith.constant 0 : i32
    %c0_i32_1 = arith.constant 0 : i32
    return %c0_i32, %c0_i32_0 : i32, i32
  }
  func.func @transform_3(%arg0: i32, %arg1: i32) -> (i32, i32, i32) {
    %c0_i32 = arith.constant 0 : i32
    %c0_i32_0 = arith.constant 0 : i32
    return %arg1, %arg0, %c0_i32 : i32, i32, i32
  }
}

</mosaic_0001>

<llo_original>
// kernel: tpu_custom_call.1
$region0: #{tpu_custom_call.1}
  #allocation0 [shape = 'u32[]', space=smem, size = 0x4, offset = 0x4, fixed_abs, tag = 'smem constant byte address 0x4 - core index']
  #allocation1 [shape = 'u32[144,128]{1,0:T(1,128)}', space=vmem, size = 0x12000, scoped, tag = 'internal scratch']
  #allocation2 [shape = 'f32[8,128]{1,0:T(8,128)}', space=vmem, size = 0x1000, scoped, tag = 'scratch operand']
  %s0 = inlined_call_operand.hbm [shape: f32[8,8,128], index: 0, kind: input, shape index: {}]
  %s1 = inlined_call_operand.hbm [shape: f32[8,128], index: 1, kind: input, shape index: {}]
  %s2 = inlined_call_operand.hbm [shape: f32[128,128], index: 2, kind: input, shape index: {}]
  %s3 = inlined_call_operand.hbm [shape: f32[8,8,128], index: 3, kind: output, shape index: {}]
  %s4 = sld [smem:[#allocation0]]
  $region38: #{tpu_custom_call.1} parent=0
    _
  %s6 = ssub.s32 1, %s4
  %s7 = scalar_select 0, %s6, %s4
  $region1: #{tpu_custom_call.1} parent=0
    #allocation3 [shape = 'u8[32768]{0}', space=vmem, size = 0x8000, scoped, tag = 'input window, operand 0, single buffered']
    #allocation4 [shape = 's32[1]{0}', space=sflag, size = 0x4, scoped, tag = 'scoped memory for tpu_custom_call.1']
    #allocation5 [shape = 's32[1]{0}', space=sflag, size = 0x4, scoped, tag = 'scoped memory for tpu_custom_call.1']
    #allocation6 [shape = 'u8[4096]{0}', space=vmem, size = 0x1000, scoped, tag = 'input window, operand 1, single buffered']
    #allocation7 [shape = 's32[1]{0}', space=sflag, size = 0x4, scoped, tag = 'scoped memory for tpu_custom_call.1']
    #allocation8 [shape = 'u8[65536]{0}', space=vmem, size = 0x10000, scoped, tag = 'input window, operand 2, single buffered']
    #allocation9 [shape = 'u8[32768]{0}', space=vmem, size = 0x8000, scoped, tag = 'output window, operand 0, single buffered']
    %8 = vsyncpa [#allocation4], 0
    %9 = vsyncpa [#allocation7], 0
    %10 = vsyncpa [#allocation5], 0
    // Predicated region
    $region2: #{tpu_custom_call.1} parent=1 // pred_check
      _
    $region3: #{tpu_custom_call.1} parent=1 // pred_check_branch
      %12 = sbr.rel (0) target = $region5
    $region4: #{tpu_custom_call.1} parent=1 // pred_region
      %s14 = ssub.s32 1024, 1024
      %15 = vsyncadd [#allocation4], %s14
      %s16 = sshll.u32 [#allocation3], 4
      %s17 = int_to_ptr.vmem [resolvable:$true] %s16
      %22 = dma.hbm_to_vmem [thread:$0]  %s0, 1024, %s17, [#allocation4], 128, 128, 8
    $region5: #{tpu_custom_call.1} parent=1 // pred_fallthru
      _
    // Predicated region
    $region6: #{tpu_custom_call.1} parent=1 // pred_check
      _
    $region7: #{tpu_custom_call.1} parent=1 // pred_check_branch
      %24 = sbr.rel (0) target = $region9
    $region8: #{tpu_custom_call.1} parent=1 // pred_region
      %s26 = ssub.s32 128, 128
      %27 = vsyncadd [#allocation7], %s26
      %s29 = sshll.u32 [#allocation6], 4
      %s30 = int_to_ptr.vmem [resolvable:$true] %s29
      %32 = dma.hbm_to_vmem [thread:$0]  %s1, 128, %s30, [#allocation7]
    $region9: #{tpu_custom_call.1} parent=1 // pred_fallthru
      _
    // Predicated region
    $region10: #{tpu_custom_call.1} parent=1 // pred_check
      _
    $region11: #{tpu_custom_call.1} parent=1 // pred_check_branch
      %34 = sbr.rel (0) target = $region13
    $region12: #{tpu_custom_call.1} parent=1 // pred_region
      %s36 = ssub.s32 2048, 2048
      %37 = vsyncadd [#allocation7], %s36
      %s38 = sshll.u32 [#allocation8], 4
      %s39 = int_to_ptr.vmem [resolvable:$true] %s38
      %44 = dma.hbm_to_vmem [thread:$0]  %s2, 2048, %s39, [#allocation7], 128, 128, 8
    $region13: #{tpu_custom_call.1} parent=1 // pred_fallthru
      _
    // Predicated region
    $region14: #{tpu_custom_call.1} parent=1 // pred_check
      _
    $region15: #{tpu_custom_call.1} parent=1 // pred_check_branch
      %46 = sbr.rel (0) target = $region17
    $region16: #{tpu_custom_call.1} parent=1 // pred_region
      %47 = dma.done [#allocation4], 1024
    $region17: #{tpu_custom_call.1} parent=1 // pred_fallthru
      _
    // Predicated region
    $region18: #{tpu_custom_call.1} parent=1 // pred_check
      _
    $region19: #{tpu_custom_call.1} parent=1 // pred_check_branch
      %49 = sbr.rel (0) target = $region21
    $region20: #{tpu_custom_call.1} parent=1 // pred_region
      %50 = dma.done [#allocation7], 128
    $region21: #{tpu_custom_call.1} parent=1 // pred_fallthru
      _
    // Predicated region
    $region22: #{tpu_custom_call.1} parent=1 // pred_check
      _
    $region23: #{tpu_custom_call.1} parent=1 // pred_check_branch
      %52 = sbr.rel (0) target = $region25
    $region24: #{tpu_custom_call.1} parent=1 // pred_region
      %53 = dma.done [#allocation7], 2048
    $region25: #{tpu_custom_call.1} parent=1 // pred_fallthru
      _
    %p54 = scmp.eq.s32.totalorder 0, 0
    // Predicated region
    $region26: #{tpu_custom_call.1} parent=1 // pred_check
      %p55 = pneg %p54
    $region27: #{tpu_custom_call.1} parent=1 // pred_check_branch
      %57 = sbr.rel (%p55) target = $region29
    $region28: #{tpu_custom_call.1} parent=1 // pred_region
      %v58 = vld [vmem:[#allocation6] sm:$0xff]
      %59 = vst [vmem:[#allocation2] sm:$0xff] %v58
    $region29: #{tpu_custom_call.1} parent=1 // pred_fallthru
      _
    %v60 = vld [vmem:[#allocation8] sm:$0xff]
    %v61 = vld [vmem:[#allocation8 + $0x8] sm:$0xff]
    %v62 = vld [vmem:[#allocation8 + $0x10] sm:$0xff]
    %v63 = vld [vmem:[#allocation8 + $0x18] sm:$0xff]
    %v64 = vld [vmem:[#allocation8 + $0x20] sm:$0xff]
    %v65 = vld [vmem:[#allocation8 + $0x28] sm:$0xff]
    %v66 = vld [vmem:[#allocation8 + $0x30] sm:$0xff]
    %v67 = vld [vmem:[#allocation8 + $0x38] sm:$0xff]
    %v68 = vld [vmem:[#allocation8 + $0x40] sm:$0xff]
    %v69 = vld [vmem:[#allocation8 + $0x48] sm:$0xff]
    %v70 = vld [vmem:[#allocation8 + $0x50] sm:$0xff]
    %v71 = vld [vmem:[#allocation8 + $0x58] sm:$0xff]
    %v72 = vld [vmem:[#allocation8 + $0x60] sm:$0xff]
    %v73 = vld [vmem:[#allocation8 + $0x68] sm:$0xff]
    %v74 = vld [vmem:[#allocation8 + $0x70] sm:$0xff]
    %v75 = vld [vmem:[#allocation8 + $0x78] sm:$0xff]
    %v76 = vld [vmem:[#allocation2] sm:$0xff]
    %v77 = vld [vmem:[#allocation3] sm:$0xff]
    %78 = vmatprep.subr.mxu0 0.0
    %v79 = vand.u32 %v75, 4294901760
    %80 = vmatpush1.msra.mxu0 %v79
    %81 = vmatprep.subr.mxu0 0.0
    %v82 = vand.u32 %v74, 4294901760
    %83 = vmatpush1.msra.mxu0 %v82
    %84 = vmatprep.subr.mxu0 0.0
    %v85 = vand.u32 %v73, 4294901760
    %86 = vmatpush1.msra.mxu0 %v85
    %87 = vmatprep.subr.mxu0 0.0
    %v88 = vand.u32 %v72, 4294901760
    %89 = vmatpush1.msra.mxu0 %v88
    %90 = vmatprep.subr.mxu0 0.0
    %v91 = vand.u32 %v71, 4294901760
    %92 = vmatpush1.msra.mxu0 %v91
    %93 = vmatprep.subr.mxu0 0.0
    %v94 = vand.u32 %v70, 4294901760
    %95 = vmatpush1.msra.mxu0 %v94
    %96 = vmatprep.subr.mxu0 0.0
    %v97 = vand.u32 %v69, 4294901760
    %98 = vmatpush1.msra.mxu0 %v97
    %99 = vmatprep.subr.mxu0 0.0
    %v100 = vand.u32 %v68, 4294901760
    %101 = vmatpush1.msra.mxu0 %v100
    %102 = vmatprep.subr.mxu0 0.0
    %v103 = vand.u32 %v67, 4294901760
    %104 = vmatpush1.msra.mxu0 %v103
    %105 = vmatprep.subr.mxu0 0.0
    %v106 = vand.u32 %v66, 4294901760
    %107 = vmatpush1.msra.mxu0 %v106
    %108 = vmatprep.subr.mxu0 0.0
    %v109 = vand.u32 %v65, 4294901760
    %110 = vmatpush1.msra.mxu0 %v109
    %111 = vmatprep.subr.mxu0 0.0
    %v112 = vand.u32 %v64, 4294901760
    %113 = vmatpush1.msra.mxu0 %v112
    %114 = vmatprep.subr.mxu0 0.0
    %v115 = vand.u32 %v63, 4294901760
    %116 = vmatpush1.msra.mxu0 %v115
    %117 = vmatprep.subr.mxu0 0.0
    %v118 = vand.u32 %v62, 4294901760
    %119 = vmatpush1.msra.mxu0 %v118
    %120 = vmatprep.subr.mxu0 0.0
    %v121 = vand.u32 %v61, 4294901760
    %122 = vmatpush1.msra.mxu0 %v121
    %123 = vmatprep.subr.mxu0 0.0
    %v124 = vand.u32 %v60, 4294901760
    %125 = vmatpush1.msra.mxu0 %v124
    %126 = vmatprep.subr.mxu0 0.0
    %127 = vmatpush2.msra.mxu0 0.0
    %128 = vmatprep.subr.mxu0 0.0
    %129 = vmatpush2.msra.mxu0 0.0
    %130 = vmatprep.subr.mxu0 0.0
    %131 = vmatpush2.msra.mxu0 0.0
    %132 = vmatprep.subr.mxu0 0.0
    %133 = vmatpush2.msra.mxu0 0.0
    %134 = vmatprep.subr.mxu0 0.0
    %135 = vmatpush2.msra.mxu0 0.0
    %136 = vmatprep.subr.mxu0 0.0
    %137 = vmatpush2.msra.mxu0 0.0
    %138 = vmatprep.subr.mxu0 0.0
    %139 = vmatpush2.msra.mxu0 0.0
    %140 = vmatprep.subr.mxu0 0.0
    %141 = vmatpush2.msra.mxu0 0.0
    %142 = vmatprep.subr.mxu0 0.0
    %143 = vmatpush2.msra.mxu0 0.0
    %144 = vmatprep.subr.mxu0 0.0
    %145 = vmatpush2.msra.mxu0 0.0
    %146 = vmatprep.subr.mxu0 0.0
    %147 = vmatpush2.msra.mxu0 0.0
    %148 = vmatprep.subr.mxu0 0.0
    %149 = vmatpush2.msra.mxu0 0.0
    %150 = vmatprep.subr.mxu0 0.0
    %151 = vmatpush2.msra.mxu0 0.0
    %152 = vmatprep.subr.mxu0 0.0
    %153 = vmatpush2.msra.mxu0 0.0
    %154 = vmatprep.subr.mxu0 0.0
    %155 = vmatpush2.msra.mxu0 0.0
    %156 = vmatprep.subr.mxu0 0.0
    %157 = vmatpush2.msra.mxu0 0.0
    %158 = vmatprep.mubr.f32.mxu0 0.0
    %v159 = vand.u32 %v76, 4294901760
    %v160 = vsub.f32 %v76, %v159
    %v161 = vand.u32 %v160, 4294901760
    %v162 = vsub.f32 %v160, %v161
    %v163 = vand.u32 %v162, 4294901760
    %164 = vmatmul.mubr.f32.gmra.mxu0 %v163
    %v165 = vpop.f32.mrf.mxu0
    %v166 = vadd.f32 0.0, %v165
    %v167 = vpop.f32.mrf.mxu0
    %168 = vdwg.mxu0
    %169 = vmatprep.subr.mxu0 0.0
    %v170 = vand.u32 %v75, 4294901760
    %v171 = vsub.f32 %v75, %v170
    %v172 = vand.u32 %v171, 4294901760
    %v173 = vsub.f32 %v171, %v172
    %v174 = vand.u32 %v173, 4294901760
    %175 = vmatpush1.msra.mxu0 %v174
    %176 = vmatprep.subr.mxu0 0.0
    %v177 = vand.u32 %v74, 4294901760
    %v178 = vsub.f32 %v74, %v177
    %v179 = vand.u32 %v178, 4294901760
    %v180 = vsub.f32 %v178, %v179
    %v181 = vand.u32 %v180, 4294901760
    %182 = vmatpush1.msra.mxu0 %v181
    %183 = vmatprep.subr.mxu0 0.0
    %v184 = vand.u32 %v73, 4294901760
    %v185 = vsub.f32 %v73, %v184
    %v186 = vand.u32 %v185, 4294901760
    %v187 = vsub.f32 %v185, %v186
    %v188 = vand.u32 %v187, 4294901760
    %189 = vmatpush1.msra.mxu0 %v188
    %190 = vmatprep.subr.mxu0 0.0
    %v191 = vand.u32 %v72, 4294901760
    %v192 = vsub.f32 %v72, %v191
    %v193 = vand.u32 %v192, 4294901760
    %v194 = vsub.f32 %v192, %v193
    %v195 = vand.u32 %v194, 4294901760
    %196 = vmatpush1.msra.mxu0 %v195
    %197 = vmatprep.subr.mxu0 0.0
    %v198 = vand.u32 %v71, 4294901760
    %v199 = vsub.f32 %v71, %v198
    %v200 = vand.u32 %v199, 4294901760
    %v201 = vsub.f32 %v199, %v200
    %v202 = vand.u32 %v201, 4294901760
    %203 = vmatpush1.msra.mxu0 %v202
    %204 = vmatprep.subr.mxu0 0.0
    %v205 = vand.u32 %v70, 4294901760
    %v206 = vsub.f32 %v70, %v205
    %v207 = vand.u32 %v206, 4294901760
    %v208 = vsub.f32 %v206, %v207
    %v209 = vand.u32 %v208, 4294901760
    %210 = vmatpush1.msra.mxu0 %v209
    %211 = vmatprep.subr.mxu0 0.0
    %v212 = vand.u32 %v69, 4294901760
    %v213 = vsub.f32 %v69, %v212
    %v214 = vand.u32 %v213, 4294901760
    %v215 = vsub.f32 %v213, %v214
    %v216 = vand.u32 %v215, 4294901760
    %217 = vmatpush1.msra.mxu0 %v216
    %218 = vmatprep.subr.mxu0 0.0
    %v219 = vand.u32 %v68, 4294901760
    %v220 = vsub.f32 %v68, %v219
    %v221 = vand.u32 %v220, 4294901760
    %v222 = vsub.f32 %v220, %v221
    %v223 = vand.u32 %v222, 4294901760
    %224 = vmatpush1.msra.mxu0 %v223
    %225 = vmatprep.subr.mxu0 0.0
    %v226 = vand.u32 %v67, 4294901760
    %v227 = vsub.f32 %v67, %v226
    %v228 = vand.u32 %v227, 4294901760
    %v229 = vsub.f32 %v227, %v228
    %v230 = vand.u32 %v229, 4294901760
    %231 = vmatpush1.msra.mxu0 %v230
    %232 = vmatprep.subr.mxu0 0.0
    %v233 = vand.u32 %v66, 4294901760
    %v234 = vsub.f32 %v66, %v233
    %v235 = vand.u32 %v234, 4294901760
    %v236 = vsub.f32 %v234, %v235
    %v237 = vand.u32 %v236, 4294901760
    %238 = vmatpush1.msra.mxu0 %v237
    %239 = vmatprep.subr.mxu0 0.0
    %v240 = vand.u32 %v65, 4294901760
    %v241 = vsub.f32 %v65, %v240
    %v242 = vand.u32 %v241, 4294901760
    %v243 = vsub.f32 %v241, %v242
    %v244 = vand.u32 %v243, 4294901760
    %245 = vmatpush1.msra.mxu0 %v244
    %246 = vmatprep.subr.mxu0 0.0
    %v247 = vand.u32 %v64, 4294901760
    %v248 = vsub.f32 %v64, %v247
    %v249 = vand.u32 %v248, 4294901760
    %v250 = vsub.f32 %v248, %v249
    %v251 = vand.u32 %v250, 4294901760
    %252 = vmatpush1.msra.mxu0 %v251
    %253 = vmatprep.subr.mxu0 0.0
    %v254 = vand.u32 %v63, 4294901760
    %v255 = vsub.f32 %v63, %v254
    %v256 = vand.u32 %v255, 4294901760
    %v257 = vsub.f32 %v255, %v256
    %v258 = vand.u32 %v257, 4294901760
    %259 = vmatpush1.msra.mxu0 %v258
    %260 = vmatprep.subr.mxu0 0.0
    %v261 = vand.u32 %v62, 4294901760
    %v262 = vsub.f32 %v62, %v261
    %v263 = vand.u32 %v262, 4294901760
    %v264 = vsub.f32 %v262, %v263
    %v265 = vand.u32 %v264, 4294901760
    %266 = vmatpush1.msra.mxu0 %v265
    %267 = vmatprep.subr.mxu0 0.0
    %v268 = vand.u32 %v61, 4294901760
    %v269 = vsub.f32 %v61, %v268
    %v270 = vand.u32 %v269, 4294901760
    %v271 = vsub.f32 %v269, %v270
    %v272 = vand.u32 %v271, 4294901760
    %273 = vmatpush1.msra.mxu0 %v272
    %274 = vmatprep.subr.mxu0 0.0
    %v275 = vand.u32 %v60, 4294901760
    %v276 = vsub.f32 %v60, %v275
    %v277 = vand.u32 %v276, 4294901760
    %v278 = vsub.f32 %v276, %v277
    %v279 = vand.u32 %v278, 4294901760
    %280 = vmatpush1.msra.mxu0 %v279
    %281 = vmatprep.subr.mxu0 0.0
    %282 = vmatpush2.msra.mxu0 0.0
    %283 = vmatprep.subr.mxu0 0.0
    %284 = vmatpush2.msra.mxu0 0.0
    %285 = vmatprep.subr.mxu0 0.0
    %286 = vmatpush2.msra.mxu0 0.0
    %287 = vmatprep.subr.mxu0 0.0
    %288 = vmatpush2.msra.mxu0 0.0
    %289 = vmatprep.subr.mxu0 0.0
    %290 = vmatpush2.msra.mxu0 0.0
    %291 = vmatprep.subr.mxu0 0.0
    %292 = vmatpush2.msra.mxu0 0.0
    %293 = vmatprep.subr.mxu0 0.0
    %294 = vmatpush2.msra.mxu0 0.0
    %295 = vmatprep.subr.mxu0 0.0
    %296 = vmatpush2.msra.mxu0 0.0
    %297 = vmatprep.subr.mxu0 0.0
    %298 = vmatpush2.msra.mxu0 0.0
    %299 = vmatprep.subr.mxu0 0.0
    %300 = vmatpush2.msra.mxu0 0.0
    %301 = vmatprep.subr.mxu0 0.0
    %302 = vmatpush2.msra.mxu0 0.0
    %303 = vmatprep.subr.mxu0 0.0
    %304 = vmatpush2.msra.mxu0 0.0
    %305 = vmatprep.subr.mxu0 0.0
    %306 = vmatpush2.msra.mxu0 0.0
    %307 = vmatprep.subr.mxu0 0.0
    %308 = vmatpush2.msra.mxu0 0.0
    %309 = vmatprep.subr.mxu0 0.0
    %310 = vmatpush2.msra.mxu0 0.0
    %311 = vmatprep.subr.mxu0 0.0
    %312 = vmatpush2.msra.mxu0 0.0
    %313 = vmatprep.mubr.f32.mxu0 0.0
    %v314 = vand.u32 %v76, 4294901760
    %315 = vmatmul.mubr.f32.gmra.mxu0 %v314
    %v316 = vpop.f32.mrf.mxu0
    %v317 = vadd.f32 %v166, %v316
    %v318 = vpop.f32.mrf.mxu0
    %319 = vdwg.mxu0
    %320 = vmatprep.subr.mxu0 0.0
    %v321 = vand.u32 %v75, 4294901760
    %v322 = vsub.f32 %v75, %v321
    %323 = vmatpush1.msra.mxu0 %v322
    %324 = vmatprep.subr.mxu0 0.0
    %v325 = vand.u32 %v74, 4294901760
    %v326 = vsub.f32 %v74, %v325
    %327 = vmatpush1.msra.mxu0 %v326
    %328 = vmatprep.subr.mxu0 0.0
    %v329 = vand.u32 %v73, 4294901760
    %v330 = vsub.f32 %v73, %v329
    %331 = vmatpush1.msra.mxu0 %v330
    %332 = vmatprep.subr.mxu0 0.0
    %v333 = vand.u32 %v72, 4294901760
    %v334 = vsub.f32 %v72, %v333
    %335 = vmatpush1.msra.mxu0 %v334
    %336 = vmatprep.subr.mxu0 0.0
    %v337 = vand.u32 %v71, 4294901760
    %v338 = vsub.f32 %v71, %v337
    %339 = vmatpush1.msra.mxu0 %v338
    %340 = vmatprep.subr.mxu0 0.0
    %v341 = vand.u32 %v70, 4294901760
    %v342 = vsub.f32 %v70, %v341
    %343 = vmatpush1.msra.mxu0 %v342
    %344 = vmatprep.subr.mxu0 0.0
    %v345 = vand.u32 %v69, 4294901760
    %v346 = vsub.f32 %v69, %v345
    %347 = vmatpush1.msra.mxu0 %v346
    %348 = vmatprep.subr.mxu0 0.0
    %v349 = vand.u32 %v68, 4294901760
    %v350 = vsub.f32 %v68, %v349
    %351 = vmatpush1.msra.mxu0 %v350
    %352 = vmatprep.subr.mxu0 0.0
    %v353 = vand.u32 %v67, 4294901760
    %v354 = vsub.f32 %v67, %v353
    %355 = vmatpush1.msra.mxu0 %v354
    %356 = vmatprep.subr.mxu0 0.0
    %v357 = vand.u32 %v66, 4294901760
    %v358 = vsub.f32 %v66, %v357
    %359 = vmatpush1.msra.mxu0 %v358
    %360 = vmatprep.subr.mxu0 0.0
    %v361 = vand.u32 %v65, 4294901760
    %v362 = vsub.f32 %v65, %v361
    %363 = vmatpush1.msra.mxu0 %v362
    %364 = vmatprep.subr.mxu0 0.0
    %v365 = vand.u32 %v64, 4294901760
    %v366 = vsub.f32 %v64, %v365
    %367 = vmatpush1.msra.mxu0 %v366
    %368 = vmatprep.subr.mxu0 0.0
    %v369 = vand.u32 %v63, 4294901760
    %v370 = vsub.f32 %v63, %v369
    %371 = vmatpush1.msra.mxu0 %v370
    %372 = vmatprep.subr.mxu0 0.0
    %v373 = vand.u32 %v62, 4294901760
    %v374 = vsub.f32 %v62, %v373
    %375 = vmatpush1.msra.mxu0 %v374
    %376 = vmatprep.subr.mxu0 0.0
    %v377 = vand.u32 %v61, 4294901760
    %v378 = vsub.f32 %v61, %v377
    %379 = vmatpush1.msra.mxu0 %v378
    %380 = vmatprep.subr.mxu0 0.0
    %v381 = vand.u32 %v60, 4294901760
    %v382 = vsub.f32 %v60, %v381
    %383 = vmatpush1.msra.mxu0 %v382
    %384 = vmatprep.subr.mxu0 0.0
    %385 = vmatpush2.msra.mxu0 0.0
    %386 = vmatprep.subr.mxu0 0.0
    %387 = vmatpush2.msra.mxu0 0.0
    %388 = vmatprep.subr.mxu0 0.0
    %389 = vmatpush2.msra.mxu0 0.0
    %390 = vmatprep.subr.mxu0 0.0
    %391 = vmatpush2.msra.mxu0 0.0
    %392 = vmatprep.subr.mxu0 0.0
    %393 = vmatpush2.msra.mxu0 0.0
    %394 = vmatprep.subr.mxu0 0.0
    %395 = vmatpush2.msra.mxu0 0.0
    %396 = vmatprep.subr.mxu0 0.0
    %397 = vmatpush2.msra.mxu0 0.0
    %398 = vmatprep.subr.mxu0 0.0
    %399 = vmatpush2.msra.mxu0 0.0
    %400 = vmatprep.subr.mxu0 0.0
    %401 = vmatpush2.msra.mxu0 0.0
    %402 = vmatprep.subr.mxu0 0.0
    %403 = vmatpush2.msra.mxu0 0.0
    %404 = vmatprep.subr.mxu0 0.0
    %405 = vmatpush2.msra.mxu0 0.0
    %406 = vmatprep.subr.mxu0 0.0
    %407 = vmatpush2.msra.mxu0 0.0
    %408 = vmatprep.subr.mxu0 0.0
    %409 = vmatpush2.msra.mxu0 0.0
    %410 = vmatprep.subr.mxu0 0.0
    %411 = vmatpush2.msra.mxu0 0.0
    %412 = vmatprep.subr.mxu0 0.0
    %413 = vmatpush2.msra.mxu0 0.0
    %414 = vmatprep.subr.mxu0 0.0
    %415 = vmatpush2.msra.mxu0 0.0
    %416 = vmatprep.mubr.f32.mxu0 0.0
    %v417 = vand.u32 %v76, 4294901760
    %v418 = vsub.f32 %v76, %v417
    %419 = vmatmul.mubr.f32.gmra.mxu0 %v418
    %v420 = vpop.f32.mrf.mxu0
    %v421 = vadd.f32 %v317, %v420
    %v422 = vpop.f32.mrf.mxu0
    %423 = vdwg.mxu0
    %424 = vmatprep.subr.mxu0 0.0
    %v425 = vand.u32 %v75, 4294901760
    %426 = vmatpush1.msra.mxu0 %v425
    %427 = vmatprep.subr.mxu0 0.0
    %v428 = vand.u32 %v74, 4294901760
    %429 = vmatpush1.msra.mxu0 %v428
    %430 = vmatprep.subr.mxu0 0.0
    %v431 = vand.u32 %v73, 4294901760
    %432 = vmatpush1.msra.mxu0 %v431
    %433 = vmatprep.subr.mxu0 0.0
    %v434 = vand.u32 %v72, 4294901760
    %435 = vmatpush1.msra.mxu0 %v434
    %436 = vmatprep.subr.mxu0 0.0
    %v437 = vand.u32 %v71, 4294901760
    %438 = vmatpush1.msra.mxu0 %v437
    %439 = vmatprep.subr.mxu0 0.0
    %v440 = vand.u32 %v70, 4294901760
    %441 = vmatpush1.msra.mxu0 %v440
    %442 = vmatprep.subr.mxu0 0.0
    %v443 = vand.u32 %v69, 4294901760
    %444 = vmatpush1.msra.mxu0 %v443
    %445 = vmatprep.subr.mxu0 0.0
    %v446 = vand.u32 %v68, 4294901760
    %447 = vmatpush1.msra.mxu0 %v446
    %448 = vmatprep.subr.mxu0 0.0
    %v449 = vand.u32 %v67, 4294901760
    %450 = vmatpush1.msra.mxu0 %v449
    %451 = vmatprep.subr.mxu0 0.0
    %v452 = vand.u32 %v66, 4294901760
    %453 = vmatpush1.msra.mxu0 %v452
    %454 = vmatprep.subr.mxu0 0.0
    %v455 = vand.u32 %v65, 4294901760
    %456 = vmatpush1.msra.mxu0 %v455
    %457 = vmatprep.subr.mxu0 0.0
    %v458 = vand.u32 %v64, 4294901760
    %459 = vmatpush1.msra.mxu0 %v458
    %460 = vmatprep.subr.mxu0 0.0
    %v461 = vand.u32 %v63, 4294901760
    %462 = vmatpush1.msra.mxu0 %v461
    %463 = vmatprep.subr.mxu0 0.0
    %v464 = vand.u32 %v62, 4294901760
    %465 = vmatpush1.msra.mxu0 %v464
    %466 = vmatprep.subr.mxu0 0.0
    %v467 = vand.u32 %v61, 4294901760
    %468 = vmatpush1.msra.mxu0 %v467
    %469 = vmatprep.subr.mxu0 0.0
    %v470 = vand.u32 %v60, 4294901760
    %471 = vmatpush1.msra.mxu0 %v470
    %472 = vmatprep.subr.mxu0 0.0
    %473 = vmatpush2.msra.mxu0 0.0
    %474 = vmatprep.subr.mxu0 0.0
    %475 = vmatpush2.msra.mxu0 0.0
    %476 = vmatprep.subr.mxu0 0.0
    %477 = vmatpush2.msra.mxu0 0.0
    %478 = vmatprep.subr.mxu0 0.0
    %479 = vmatpush2.msra.mxu0 0.0
    %480 = vmatprep.subr.mxu0 0.0
    %481 = vmatpush2.msra.mxu0 0.0
    %482 = vmatprep.subr.mxu0 0.0
    %483 = vmatpush2.msra.mxu0 0.0
    %484 = vmatprep.subr.mxu0 0.0
    %485 = vmatpush2.msra.mxu0 0.0
    %486 = vmatprep.subr.mxu0 0.0
    %487 = vmatpush2.msra.mxu0 0.0
    %488 = vmatprep.subr.mxu0 0.0
    %489 = vmatpush2.msra.mxu0 0.0
    %490 = vmatprep.subr.mxu0 0.0
    %491 = vmatpush2.msra.mxu0 0.0
    %492 = vmatprep.subr.mxu0 0.0
    %493 = vmatpush2.msra.mxu0 0.0
    %494 = vmatprep.subr.mxu0 0.0
    %495 = vmatpush2.msra.mxu0 0.0
    %496 = vmatprep.subr.mxu0 0.0
    %497 = vmatpush2.msra.mxu0 0.0
    %498 = vmatprep.subr.mxu0 0.0
    %499 = vmatpush2.msra.mxu0 0.0
    %500 = vmatprep.subr.mxu0 0.0
    %501 = vmatpush2.msra.mxu0 0.0
    %502 = vmatprep.subr.mxu0 0.0
    %503 = vmatpush2.msra.mxu0 0.0
    %504 = vmatprep.mubr.f32.mxu0 0.0
    %v505 = vand.u32 %v76, 4294901760
    %v506 = vsub.f32 %v76, %v505
    %v507 = vand.u32 %v506, 4294901760
    %508 = vmatmul.mubr.f32.gmra.mxu0 %v507
    %v509 = vpop.f32.mrf.mxu0
    %v510 = vadd.f32 %v421, %v509
    %v511 = vpop.f32.mrf.mxu0
    %512 = vdwg.mxu0
    %513 = vmatprep.subr.mxu0 0.0
    %v514 = vand.u32 %v75, 4294901760
    %v515 = vsub.f32 %v75, %v514
    %v516 = vand.u32 %v515, 4294901760
    %517 = vmatpush1.msra.mxu0 %v516
    %518 = vmatprep.subr.mxu0 0.0
    %v519 = vand.u32 %v74, 4294901760
    %v520 = vsub.f32 %v74, %v519
    %v521 = vand.u32 %v520, 4294901760
    %522 = vmatpush1.msra.mxu0 %v521
    %523 = vmatprep.subr.mxu0 0.0
    %v524 = vand.u32 %v73, 4294901760
    %v525 = vsub.f32 %v73, %v524
    %v526 = vand.u32 %v525, 4294901760
    %527 = vmatpush1.msra.mxu0 %v526
    %528 = vmatprep.subr.mxu0 0.0
    %v529 = vand.u32 %v72, 4294901760
    %v530 = vsub.f32 %v72, %v529
    %v531 = vand.u32 %v530, 4294901760
    %532 = vmatpush1.msra.mxu0 %v531
    %533 = vmatprep.subr.mxu0 0.0
    %v534 = vand.u32 %v71, 4294901760
    %v535 = vsub.f32 %v71, %v534
    %v536 = vand.u32 %v535, 4294901760
    %537 = vmatpush1.msra.mxu0 %v536
    %538 = vmatprep.subr.mxu0 0.0
    %v539 = vand.u32 %v70, 4294901760
    %v540 = vsub.f32 %v70, %v539
    %v541 = vand.u32 %v540, 4294901760
    %542 = vmatpush1.msra.mxu0 %v541
    %543 = vmatprep.subr.mxu0 0.0
    %v544 = vand.u32 %v69, 4294901760
    %v545 = vsub.f32 %v69, %v544
    %v546 = vand.u32 %v545, 4294901760
    %547 = vmatpush1.msra.mxu0 %v546
    %548 = vmatprep.subr.mxu0 0.0
    %v549 = vand.u32 %v68, 4294901760
    %v550 = vsub.f32 %v68, %v549
    %v551 = vand.u32 %v550, 4294901760
    %552 = vmatpush1.msra.mxu0 %v551
    %553 = vmatprep.subr.mxu0 0.0
    %v554 = vand.u32 %v67, 4294901760
    %v555 = vsub.f32 %v67, %v554
    %v556 = vand.u32 %v555, 4294901760
    %557 = vmatpush1.msra.mxu0 %v556
    %558 = vmatprep.subr.mxu0 0.0
    %v559 = vand.u32 %v66, 4294901760
    %v560 = vsub.f32 %v66, %v559
    %v561 = vand.u32 %v560, 4294901760
    %562 = vmatpush1.msra.mxu0 %v561
    %563 = vmatprep.subr.mxu0 0.0
    %v564 = vand.u32 %v65, 4294901760
    %v565 = vsub.f32 %v65, %v564
    %v566 = vand.u32 %v565, 4294901760
    %567 = vmatpush1.msra.mxu0 %v566
    %568 = vmatprep.subr.mxu0 0.0
    %v569 = vand.u32 %v64, 4294901760
    %v570 = vsub.f32 %v64, %v569
    %v571 = vand.u32 %v570, 4294901760
    %572 = vmatpush1.msra.mxu0 %v571
    %573 = vmatprep.subr.mxu0 0.0
    %v574 = vand.u32 %v63, 4294901760
    %v575 = vsub.f32 %v63, %v574
    %v576 = vand.u32 %v575, 4294901760
    %577 = vmatpush1.msra.mxu0 %v576
    %578 = vmatprep.subr.mxu0 0.0
    %v579 = vand.u32 %v62, 4294901760
    %v580 = vsub.f32 %v62, %v579
    %v581 = vand.u32 %v580, 4294901760
    %582 = vmatpush1.msra.mxu0 %v581
    %583 = vmatprep.subr.mxu0 0.0
    %v584 = vand.u32 %v61, 4294901760
    %v585 = vsub.f32 %v61, %v584
    %v586 = vand.u32 %v585, 4294901760
    %587 = vmatpush1.msra.mxu0 %v586
    %588 = vmatprep.subr.mxu0 0.0
    %v589 = vand.u32 %v60, 4294901760
    %v590 = vsub.f32 %v60, %v589
    %v591 = vand.u32 %v590, 4294901760
    %592 = vmatpush1.msra.mxu0 %v591
    %593 = vmatprep.subr.mxu0 0.0
    %594 = vmatpush2.msra.mxu0 0.0
    %595 = vmatprep.subr.mxu0 0.0
    %596 = vmatpush2.msra.mxu0 0.0
    %597 = vmatprep.subr.mxu0 0.0
    %598 = vmatpush2.msra.mxu0 0.0
    %599 = vmatprep.subr.mxu0 0.0
    %600 = vmatpush2.msra.mxu0 0.0
    %601 = vmatprep.subr.mxu0 0.0
    %602 = vmatpush2.msra.mxu0 0.0
    %603 = vmatprep.subr.mxu0 0.0
    %604 = vmatpush2.msra.mxu0 0.0
    %605 = vmatprep.subr.mxu0 0.0
    %606 = vmatpush2.msra.mxu0 0.0
    %607 = vmatprep.subr.mxu0 0.0
    %608 = vmatpush2.msra.mxu0 0.0
    %609 = vmatprep.subr.mxu0 0.0
    %610 = vmatpush2.msra.mxu0 0.0
    %611 = vmatprep.subr.mxu0 0.0
    %612 = vmatpush2.msra.mxu0 0.0
    %613 = vmatprep.subr.mxu0 0.0
    %614 = vmatpush2.msra.mxu0 0.0
    %615 = vmatprep.subr.mxu0 0.0
    %616 = vmatpush2.msra.mxu0 0.0
    %617 = vmatprep.subr.mxu0 0.0
    %618 = vmatpush2.msra.mxu0 0.0
    %619 = vmatprep.subr.mxu0 0.0
    %620 = vmatpush2.msra.mxu0 0.0
    %621 = vmatprep.subr.mxu0 0.0
    %622 = vmatpush2.msra.mxu0 0.0
    %623 = vmatprep.subr.mxu0 0.0
    %624 = vmatpush2.msra.mxu0 0.0
    %625 = vmatprep.mubr.f32.mxu0 0.0
    %v626 = vand.u32 %v76, 4294901760
    %627 = vmatmul.mubr.f32.gmra.mxu0 %v626
    %v628 = vpop.f32.mrf.mxu0
    %v629 = vadd.f32 %v510, %v628
    %v630 = vpop.f32.mrf.mxu0
    %631 = vdwg.mxu0
    %632 = vmatprep.subr.mxu0 0.0
    %v633 = vand.u32 %v75, 4294901760
    %634 = vmatpush1.msra.mxu0 %v633
    %635 = vmatprep.subr.mxu0 0.0
    %v636 = vand.u32 %v74, 4294901760
    %637 = vmatpush1.msra.mxu0 %v636
    %638 = vmatprep.subr.mxu0 0.0
    %v639 = vand.u32 %v73, 4294901760
    %640 = vmatpush1.msra.mxu0 %v639
    %641 = vmatprep.subr.mxu0 0.0
    %v642 = vand.u32 %v72, 4294901760
    %643 = vmatpush1.msra.mxu0 %v642
    %644 = vmatprep.subr.mxu0 0.0
    %v645 = vand.u32 %v71, 4294901760
    %646 = vmatpush1.msra.mxu0 %v645
    %647 = vmatprep.subr.mxu0 0.0
    %v648 = vand.u32 %v70, 4294901760
    %649 = vmatpush1.msra.mxu0 %v648
    %650 = vmatprep.subr.mxu0 0.0
    %v651 = vand.u32 %v69, 4294901760
    %652 = vmatpush1.msra.mxu0 %v651
    %653 = vmatprep.subr.mxu0 0.0
    %v654 = vand.u32 %v68, 4294901760
    %655 = vmatpush1.msra.mxu0 %v654
    %656 = vmatprep.subr.mxu0 0.0
    %v657 = vand.u32 %v67, 4294901760
    %658 = vmatpush1.msra.mxu0 %v657
    %659 = vmatprep.subr.mxu0 0.0
    %v660 = vand.u32 %v66, 4294901760
    %661 = vmatpush1.msra.mxu0 %v660
    %662 = vmatprep.subr.mxu0 0.0
    %v663 = vand.u32 %v65, 4294901760
    %664 = vmatpush1.msra.mxu0 %v663
    %665 = vmatprep.subr.mxu0 0.0
    %v666 = vand.u32 %v64, 4294901760
    %667 = vmatpush1.msra.mxu0 %v666
    %668 = vmatprep.subr.mxu0 0.0
    %v669 = vand.u32 %v63, 4294901760
    %670 = vmatpush1.msra.mxu0 %v669
    %671 = vmatprep.subr.mxu0 0.0
    %v672 = vand.u32 %v62, 4294901760
    %673 = vmatpush1.msra.mxu0 %v672
    %674 = vmatprep.subr.mxu0 0.0
    %v675 = vand.u32 %v61, 4294901760
    %676 = vmatpush1.msra.mxu0 %v675
    %677 = vmatprep.subr.mxu0 0.0
    %v678 = vand.u32 %v60, 4294901760
    %679 = vmatpush1.msra.mxu0 %v678
    %680 = vmatprep.subr.mxu0 0.0
    %681 = vmatpush2.msra.mxu0 0.0
    %682 = vmatprep.subr.mxu0 0.0
    %683 = vmatpush2.msra.mxu0 0.0
    %684 = vmatprep.subr.mxu0 0.0
    %685 = vmatpush2.msra.mxu0 0.0
    %686 = vmatprep.subr.mxu0 0.0
    %687 = vmatpush2.msra.mxu0 0.0
    %688 = vmatprep.subr.mxu0 0.0
    %689 = vmatpush2.msra.mxu0 0.0
    %690 = vmatprep.subr.mxu0 0.0
    %691 = vmatpush2.msra.mxu0 0.0
    %692 = vmatprep.subr.mxu0 0.0
    %693 = vmatpush2.msra.mxu0 0.0
    %694 = vmatprep.subr.mxu0 0.0
    %695 = vmatpush2.msra.mxu0 0.0
    %696 = vmatprep.subr.mxu0 0.0
    %697 = vmatpush2.msra.mxu0 0.0
    %698 = vmatprep.subr.mxu0 0.0
    %699 = vmatpush2.msra.mxu0 0.0
    %700 = vmatprep.subr.mxu0 0.0
    %701 = vmatpush2.msra.mxu0 0.0
    %702 = vmatprep.subr.mxu0 0.0
    %703 = vmatpush2.msra.mxu0 0.0
    %704 = vmatprep.subr.mxu0 0.0
    %705 = vmatpush2.msra.mxu0 0.0
    %706 = vmatprep.subr.mxu0 0.0
    %707 = vmatpush2.msra.mxu0 0.0
    %708 = vmatprep.subr.mxu0 0.0
    %709 = vmatpush2.msra.mxu0 0.0
    %710 = vmatprep.subr.mxu0 0.0
    %711 = vmatpush2.msra.mxu0 0.0
    %712 = vmatprep.mubr.f32.mxu0 0.0
    %v713 = vand.u32 %v76, 4294901760
    %714 = vmatmul.mubr.f32.gmra.mxu0 %v713
    %v715 = vpop.f32.mrf.mxu0
    %v716 = vadd.f32 %v629, %v715
    %v717 = vpop.f32.mrf.mxu0
    %718 = vdwg.mxu0
    %v719 = vadd.f32 %v77, %v716
    %720 = vst [vmem:[#allocation9] sm:$0xff] %v719
    %s721 = scalar_lea.vmem [#allocation3], 8
    %v722 = vld [vmem:[%s721] sm:$0xff]
    %723 = vmatprep.subr.mxu0 0.0
    %v724 = vand.u32 %v75, 4294901760
    %725 = vmatpush1.msra.mxu0 %v724
    %726 = vmatprep.subr.mxu0 0.0
    %v727 = vand.u32 %v74, 4294901760
    %728 = vmatpush1.msra.mxu0 %v727
    %729 = vmatprep.subr.mxu0 0.0
    %v730 = vand.u32 %v73, 4294901760
    %731 = vmatpush1.msra.mxu0 %v730
    %732 = vmatprep.subr.mxu0 0.0
    %v733 = vand.u32 %v72, 4294901760
    %734 = vmatpush1.msra.mxu0 %v733
    %735 = vmatprep.subr.mxu0 0.0
    %v736 = vand.u32 %v71, 4294901760
    %737 = vmatpush1.msra.mxu0 %v736
    %738 = vmatprep.subr.mxu0 0.0
    %v739 = vand.u32 %v70, 4294901760
    %740 = vmatpush1.msra.mxu0 %v739
    %741 = vmatprep.subr.mxu0 0.0
    %v742 = vand.u32 %v69, 4294901760
    %743 = vmatpush1.msra.mxu0 %v742
    %744 = vmatprep.subr.mxu0 0.0
    %v745 = vand.u32 %v68, 4294901760
    %746 = vmatpush1.msra.mxu0 %v745
    %747 = vmatprep.subr.mxu0 0.0
    %v748 = vand.u32 %v67, 4294901760
    %749 = vmatpush1.msra.mxu0 %v748
    %750 = vmatprep.subr.mxu0 0.0
    %v751 = vand.u32 %v66, 4294901760
    %752 = vmatpush1.msra.mxu0 %v751
    %753 = vmatprep.subr.mxu0 0.0
    %v754 = vand.u32 %v65, 4294901760
    %755 = vmatpush1.msra.mxu0 %v754
    %756 = vmatprep.subr.mxu0 0.0
    %v757 = vand.u32 %v64, 4294901760
    %758 = vmatpush1.msra.mxu0 %v757
    %759 = vmatprep.subr.mxu0 0.0
    %v760 = vand.u32 %v63, 4294901760
    %761 = vmatpush1.msra.mxu0 %v760
    %762 = vmatprep.subr.mxu0 0.0
    %v763 = vand.u32 %v62, 4294901760
    %764 = vmatpush1.msra.mxu0 %v763
    %765 = vmatprep.subr.mxu0 0.0
    %v766 = vand.u32 %v61, 4294901760
    %767 = vmatpush1.msra.mxu0 %v766
    %768 = vmatprep.subr.mxu0 0.0
    %v769 = vand.u32 %v60, 4294901760
    %770 = vmatpush1.msra.mxu0 %v769
    %771 = vmatprep.subr.mxu0 0.0
    %772 = vmatpush2.msra.mxu0 0.0
    %773 = vmatprep.subr.mxu0 0.0
    %774 = vmatpush2.msra.mxu0 0.0
    %775 = vmatprep.subr.mxu0 0.0
    %776 = vmatpush2.msra.mxu0 0.0
    %777 = vmatprep.subr.mxu0 0.0
    %778 = vmatpush2.msra.mxu0 0.0
    %779 = vmatprep.subr.mxu0 0.0
    %780 = vmatpush2.msra.mxu0 0.0
    %781 = vmatprep.subr.mxu0 0.0
    %782 = vmatpush2.msra.mxu0 0.0
    %783 = vmatprep.subr.mxu0 0.0
    %784 = vmatpush2.msra.mxu0 0.0
    %785 = vmatprep.subr.mxu0 0.0
    %786 = vmatpush2.msra.mxu0 0.0
    %787 = vmatprep.subr.mxu0 0.0
    %788 = vmatpush2.msra.mxu0 0.0
    %789 = vmatprep.subr.mxu0 0.0
    %790 = vmatpush2.msra.mxu0 0.0
    %791 = vmatprep.subr.mxu0 0.0
    %792 = vmatpush2.msra.mxu0 0.0
    %793 = vmatprep.subr.mxu0 0.0
    %794 = vmatpush2.msra.mxu0 0.0
    %795 = vmatprep.subr.mxu0 0.0
    %796 = vmatpush2.msra.mxu0 0.0
    %797 = vmatprep.subr.mxu0 0.0
    %798 = vmatpush2.msra.mxu0 0.0
    %799 = vmatprep.subr.mxu0 0.0
    %800 = vmatpush2.msra.mxu0 0.0
    %801 = vmatprep.subr.mxu0 0.0
    %802 = vmatpush2.msra.mxu0 0.0
    %803 = vmatprep.mubr.f32.mxu0 0.0
    %v804 = vand.u32 %v719, 4294901760
    %v805 = vsub.f32 %v719, %v804
    %v806 = vand.u32 %v805, 4294901760
    %v807 = vsub.f32 %v805, %v806
    %v808 = vand.u32 %v807, 4294901760
    %809 = vmatmul.mubr.f32.gmra.mxu0 %v808
    %v810 = vpop.f32.mrf.mxu0
    %v811 = vadd.f32 0.0, %v810
    %v812 = vpop.f32.mrf.mxu0
    %813 = vdwg.mxu0
    %814 = vmatprep.subr.mxu0 0.0
    %v815 = vand.u32 %v75, 4294901760
    %v816 = vsub.f32 %v75, %v815
    %v817 = vand.u32 %v816, 4294901760
    %v818 = vsub.f32 %v816, %v817
    %v819 = vand.u32 %v818, 4294901760
    %820 = vmatpush1.msra.mxu0 %v819
    %821 = vmatprep.subr.mxu0 0.0
    %v822 = vand.u32 %v74, 4294901760
    %v823 = vsub.f32 %v74, %v822
    %v824 = vand.u32 %v823, 4294901760
    %v825 = vsub.f32 %v823, %v824
    %v826 = vand.u32 %v825, 4294901760
    %827 = vmatpush1.msra.mxu0 %v826
    %828 = vmatprep.subr.mxu0 0.0
    %v829 = vand.u32 %v73, 4294901760
    %v830 = vsub.f32 %v73, %v829
    %v831 = vand.u32 %v830, 4294901760
    %v832 = vsub.f32 %v830, %v831
    %v833 = vand.u32 %v832, 4294901760
    %834 = vmatpush1.msra.mxu0 %v833
    %835 = vmatprep.subr.mxu0 0.0
    %v836 = vand.u32 %v72, 4294901760
    %v837 = vsub.f32 %v72, %v836
    %v838 = vand.u32 %v837, 4294901760
    %v839 = vsub.f32 %v837, %v838
    %v840 = vand.u32 %v839, 4294901760
    %841 = vmatpush1.msra.mxu0 %v840
    %842 = vmatprep.subr.mxu0 0.0
    %v843 = vand.u32 %v71, 4294901760
    %v844 = vsub.f32 %v71, %v843
    %v845 = vand.u32 %v844, 4294901760
    %v846 = vsub.f32 %v844, %v845
    %v847 = vand.u32 %v846, 4294901760
    %848 = vmatpush1.msra.mxu0 %v847
    %849 = vmatprep.subr.mxu0 0.0
    %v850 = vand.u32 %v70, 4294901760
    %v851 = vsub.f32 %v70, %v850
    %v852 = vand.u32 %v851, 4294901760
    %v853 = vsub.f32 %v851, %v852
    %v854 = vand.u32 %v853, 4294901760
    %855 = vmatpush1.msra.mxu0 %v854
    %856 = vmatprep.subr.mxu0 0.0
    %v857 = vand.u32 %v69, 4294901760
    %v858 = vsub.f32 %v69, %v857
    %v859 = vand.u32 %v858, 4294901760
    %v860 = vsub.f32 %v858, %v859
    %v861 = vand.u32 %v860, 4294901760
    %862 = vmatpush1.msra.mxu0 %v861
    %863 = vmatprep.subr.mxu0 0.0
    %v864 = vand.u32 %v68, 4294901760
    %v865 = vsub.f32 %v68, %v864
    %v866 = vand.u32 %v865, 4294901760
    %v867 = vsub.f32 %v865, %v866
    %v868 = vand.u32 %v867, 4294901760
    %869 = vmatpush1.msra.mxu0 %v868
    %870 = vmatprep.subr.mxu0 0.0
    %v871 = vand.u32 %v67, 4294901760
    %v872 = vsub.f32 %v67, %v871
    %v873 = vand.u32 %v872, 4294901760
    %v874 = vsub.f32 %v872, %v873
    %v875 = vand.u32 %v874, 4294901760
    %876 = vmatpush1.msra.mxu0 %v875
    %877 = vmatprep.subr.mxu0 0.0
    %v878 = vand.u32 %v66, 4294901760
    %v879 = vsub.f32 %v66, %v878
    %v880 = vand.u32 %v879, 4294901760
    %v881 = vsub.f32 %v879, %v880
    %v882 = vand.u32 %v881, 4294901760
    %883 = vmatpush1.msra.mxu0 %v882
    %884 = vmatprep.subr.mxu0 0.0
    %v885 = vand.u32 %v65, 4294901760
    %v886 = vsub.f32 %v65, %v885
    %v887 = vand.u32 %v886, 4294901760
    %v888 = vsub.f32 %v886, %v887
    %v889 = vand.u32 %v888, 4294901760
    %890 = vmatpush1.msra.mxu0 %v889
    %891 = vmatprep.subr.mxu0 0.0
    %v892 = vand.u32 %v64, 4294901760
    %v893 = vsub.f32 %v64, %v892
    %v894 = vand.u32 %v893, 4294901760
    %v895 = vsub.f32 %v893, %v894
    %v896 = vand.u32 %v895, 4294901760
    %897 = vmatpush1.msra.mxu0 %v896
    %898 = vmatprep.subr.mxu0 0.0
    %v899 = vand.u32 %v63, 4294901760
    %v900 = vsub.f32 %v63, %v899
    %v901 = vand.u32 %v900, 4294901760
    %v902 = vsub.f32 %v900, %v901
    %v903 = vand.u32 %v902, 4294901760
    %904 = vmatpush1.msra.mxu0 %v903
    %905 = vmatprep.subr.mxu0 0.0
    %v906 = vand.u32 %v62, 4294901760
    %v907 = vsub.f32 %v62, %v906
    %v908 = vand.u32 %v907, 4294901760
    %v909 = vsub.f32 %v907, %v908
    %v910 = vand.u32 %v909, 4294901760
    %911 = vmatpush1.msra.mxu0 %v910
    %912 = vmatprep.subr.mxu0 0.0
    %v913 = vand.u32 %v61, 4294901760
    %v914 = vsub.f32 %v61, %v913
    %v915 = vand.u32 %v914, 4294901760
    %v916 = vsub.f32 %v914, %v915
    %v917 = vand.u32 %v916, 4294901760
    %918 = vmatpush1.msra.mxu0 %v917
    %919 = vmatprep.subr.mxu0 0.0
    %v920 = vand.u32 %v60, 4294901760
    %v921 = vsub.f32 %v60, %v920
    %v922 = vand.u32 %v921, 4294901760
    %v923 = vsub.f32 %v921, %v922
    %v924 = vand.u32 %v923, 4294901760
    %925 = vmatpush1.msra.mxu0 %v924
    %926 = vmatprep.subr.mxu0 0.0
    %927 = vmatpush2.msra.mxu0 0.0
    %928 = vmatprep.subr.mxu0 0.0
    %929 = vmatpush2.msra.mxu0 0.0
    %930 = vmatprep.subr.mxu0 0.0
    %931 = vmatpush2.msra.mxu0 0.0
    %932 = vmatprep.subr.mxu0 0.0
    %933 = vmatpush2.msra.mxu0 0.0
    %934 = vmatprep.subr.mxu0 0.0
    %935 = vmatpush2.msra.mxu0 0.0
    %936 = vmatprep.subr.mxu0 0.0
    %937 = vmatpush2.msra.mxu0 0.0
    %938 = vmatprep.subr.mxu0 0.0
    %939 = vmatpush2.msra.mxu0 0.0
    %940 = vmatprep.subr.mxu0 0.0
    %941 = vmatpush2.msra.mxu0 0.0
    %942 = vmatprep.subr.mxu0 0.0
    %943 = vmatpush2.msra.mxu0 0.0
    %944 = vmatprep.subr.mxu0 0.0
    %945 = vmatpush2.msra.mxu0 0.0
    %946 = vmatprep.subr.mxu0 0.0
    %947 = vmatpush2.msra.mxu0 0.0
    %948 = vmatprep.subr.mxu0 0.0
    %949 = vmatpush2.msra.mxu0 0.0
    %950 = vmatprep.subr.mxu0 0.0
    %951 = vmatpush2.msra.mxu0 0.0
    %952 = vmatprep.subr.mxu0 0.0
    %953 = vmatpush2.msra.mxu0 0.0
    %954 = vmatprep.subr.mxu0 0.0
    %955 = vmatpush2.msra.mxu0 0.0
    %956 = vmatprep.subr.mxu0 0.0
    %957 = vmatpush2.msra.mxu0 0.0
    %958 = vmatprep.mubr.f32.mxu0 0.0
    %v959 = vand.u32 %v719, 4294901760
    %960 = vmatmul.mubr.f32.gmra.mxu0 %v959
    %v961 = vpop.f32.mrf.mxu0
    %v962 = vadd.f32 %v811, %v961
    %v963 = vpop.f32.mrf.mxu0
    %964 = vdwg.mxu0
    %965 = vmatprep.subr.mxu0 0.0
    %v966 = vand.u32 %v75, 4294901760
    %v967 = vsub.f32 %v75, %v966
    %968 = vmatpush1.msra.mxu0 %v967
    %969 = vmatprep.subr.mxu0 0.0
    %v970 = vand.u32 %v74, 4294901760
    %v971 = vsub.f32 %v74, %v970
    %972 = vmatpush1.msra.mxu0 %v971
    %973 = vmatprep.subr.mxu0 0.0
    %v974 = vand.u32 %v73, 4294901760
    %v975 = vsub.f32 %v73, %v974
    %976 = vmatpush1.msra.mxu0 %v975
    %977 = vmatprep.subr.mxu0 0.0
    %v978 = vand.u32 %v72, 4294901760
    %v979 = vsub.f32 %v72, %v978
    %980 = vmatpush1.msra.mxu0 %v979
    %981 = vmatprep.subr.mxu0 0.0
    %v982 = vand.u32 %v71, 4294901760
    %v983 = vsub.f32 %v71, %v982
    %984 = vmatpush1.msra.mxu0 %v983
    %985 = vmatprep.subr.mxu0 0.0
    %v986 = vand.u32 %v70, 4294901760
    %v987 = vsub.f32 %v70, %v986
    %988 = vmatpush1.msra.mxu0 %v987
    %989 = vmatprep.subr.mxu0 0.0
    %v990 = vand.u32 %v69, 4294901760
    %v991 = vsub.f32 %v69, %v990
    %992 = vmatpush1.msra.mxu0 %v991
    %993 = vmatprep.subr.mxu0 0.0
    %v994 = vand.u32 %v68, 4294901760
    %v995 = vsub.f32 %v68, %v994
    %996 = vmatpush1.msra.mxu0 %v995
    %997 = vmatprep.subr.mxu0 0.0
    %v998 = vand.u32 %v67, 4294901760
    %v999 = vsub.f32 %v67, %v998
    %1000 = vmatpush1.msra.mxu0 %v999
    %1001 = vmatprep.subr.mxu0 0.0
    %v1002 = vand.u32 %v66, 4294901760
    %v1003 = vsub.f32 %v66, %v1002
    %1004 = vmatpush1.msra.mxu0 %v1003
    %1005 = vmatprep.subr.mxu0 0.0
    %v1006 = vand.u32 %v65, 4294901760
    %v1007 = vsub.f32 %v65, %v1006
    %1008 = vmatpush1.msra.mxu0 %v1007
    %1009 = vmatprep.subr.mxu0 0.0
    %v1010 = vand.u32 %v64, 4294901760
    %v1011 = vsub.f32 %v64, %v1010
    %1012 = vmatpush1.msra.mxu0 %v1011
    %1013 = vmatprep.subr.mxu0 0.0
    %v1014 = vand.u32 %v63, 4294901760
    %v1015 = vsub.f32 %v63, %v1014
    %1016 = vmatpush1.msra.mxu0 %v1015
    %1017 = vmatprep.subr.mxu0 0.0
    %v1018 = vand.u32 %v62, 4294901760
    %v1019 = vsub.f32 %v62, %v1018
    %1020 = vmatpush1.msra.mxu0 %v1019
    %1021 = vmatprep.subr.mxu0 0.0
    %v1022 = vand.u32 %v61, 4294901760
    %v1023 = vsub.f32 %v61, %v1022
    %1024 = vmatpush1.msra.mxu0 %v1023
    %1025 = vmatprep.subr.mxu0 0.0
    %v1026 = vand.u32 %v60, 4294901760
    %v1027 = vsub.f32 %v60, %v1026
    %1028 = vmatpush1.msra.mxu0 %v1027
    %1029 = vmatprep.subr.mxu0 0.0
    %1030 = vmatpush2.msra.mxu0 0.0
    %1031 = vmatprep.subr.mxu0 0.0
    %1032 = vmatpush2.msra.mxu0 0.0
    %1033 = vmatprep.subr.mxu0 0.0
    %1034 = vmatpush2.msra.mxu0 0.0
    %1035 = vmatprep.subr.mxu0 0.0
    %1036 = vmatpush2.msra.mxu0 0.0
    %1037 = vmatprep.subr.mxu0 0.0
    %1038 = vmatpush2.msra.mxu0 0.0
    %1039 = vmatprep.subr.mxu0 0.0
    %1040 = vmatpush2.msra.mxu0 0.0
    %1041 = vmatprep.subr.mxu0 0.0
    %1042 = vmatpush2.msra.mxu0 0.0
    %1043 = vmatprep.subr.mxu0 0.0
    %1044 = vmatpush2.msra.mxu0 0.0
    %1045 = vmatprep.subr.mxu0 0.0
    %1046 = vmatpush2.msra.mxu0 0.0
    %1047 = vmatprep.subr.mxu0 0.0
    %1048 = vmatpush2.msra.mxu0 0.0
    %1049 = vmatprep.subr.mxu0 0.0
    %1050 = vmatpush2.msra.mxu0 0.0
    %1051 = vmatprep.subr.mxu0 0.0
    %1052 = vmatpush2.msra.mxu0 0.0
    %1053 = vmatprep.subr.mxu0 0.0
    %1054 = vmatpush2.msra.mxu0 0.0
    %1055 = vmatprep.subr.mxu0 0.0
    %1056 = vmatpush2.msra.mxu0 0.0
    %1057 = vmatprep.subr.mxu0 0.0
    %1058 = vmatpush2.msra.mxu0 0.0
    %1059 = vmatprep.subr.mxu0 0.0
    %1060 = vmatpush2.msra.mxu0 0.0
    %1061 = vmatprep.mubr.f32.mxu0 0.0
    %v1062 = vand.u32 %v719, 4294901760
    %v1063 = vsub.f32 %v719, %v1062
    %1064 = vmatmul.mubr.f32.gmra.mxu0 %v1063
    %v1065 = vpop.f32.mrf.mxu0
    %v1066 = vadd.f32 %v962, %v1065
    %v1067 = vpop.f32.mrf.mxu0
    %1068 = vdwg.mxu0
    %1069 = vmatprep.subr.mxu0 0.0
    %v1070 = vand.u32 %v75, 4294901760
    %1071 = vmatpush1.msra.mxu0 %v1070
    %1072 = vmatprep.subr.mxu0 0.0
    %v1073 = vand.u32 %v74, 4294901760
    %1074 = vmatpush1.msra.mxu0 %v1073
    %1075 = vmatprep.subr.mxu0 0.0
    %v1076 = vand.u32 %v73, 4294901760
    %1077 = vmatpush1.msra.mxu0 %v1076
    %1078 = vmatprep.subr.mxu0 0.0
    %v1079 = vand.u32 %v72, 4294901760
    %1080 = vmatpush1.msra.mxu0 %v1079
    %1081 = vmatprep.subr.mxu0 0.0
    %v1082 = vand.u32 %v71, 4294901760
    %1083 = vmatpush1.msra.mxu0 %v1082
    %1084 = vmatprep.subr.mxu0 0.0
    %v1085 = vand.u32 %v70, 4294901760
    %1086 = vmatpush1.msra.mxu0 %v1085
    %1087 = vmatprep.subr.mxu0 0.0
    %v1088 = vand.u32 %v69, 4294901760
    %1089 = vmatpush1.msra.mxu0 %v1088
    %1090 = vmatprep.subr.mxu0 0.0
    %v1091 = vand.u32 %v68, 4294901760
    %1092 = vmatpush1.msra.mxu0 %v1091
    %1093 = vmatprep.subr.mxu0 0.0
    %v1094 = vand.u32 %v67, 4294901760
    %1095 = vmatpush1.msra.mxu0 %v1094
    %1096 = vmatprep.subr.mxu0 0.0
    %v1097 = vand.u32 %v66, 4294901760
    %1098 = vmatpush1.msra.mxu0 %v1097
    %1099 = vmatprep.subr.mxu0 0.0
    %v1100 = vand.u32 %v65, 4294901760
    %1101 = vmatpush1.msra.mxu0 %v1100
    %1102 = vmatprep.subr.mxu0 0.0
    %v1103 = vand.u32 %v64, 4294901760
    %1104 = vmatpush1.msra.mxu0 %v1103
    %1105 = vmatprep.subr.mxu0 0.0
    %v1106 = vand.u32 %v63, 4294901760
    %1107 = vmatpush1.msra.mxu0 %v1106
    %1108 = vmatprep.subr.mxu0 0.0
    %v1109 = vand.u32 %v62, 4294901760
    %1110 = vmatpush1.msra.mxu0 %v1109
    %1111 = vmatprep.subr.mxu0 0.0
    %v1112 = vand.u32 %v61, 4294901760
    %1113 = vmatpush1.msra.mxu0 %v1112
    %1114 = vmatprep.subr.mxu0 0.0
    %v1115 = vand.u32 %v60, 4294901760
    %1116 = vmatpush1.msra.mxu0 %v1115
    %1117 = vmatprep.subr.mxu0 0.0
    %1118 = vmatpush2.msra.mxu0 0.0
    %1119 = vmatprep.subr.mxu0 0.0
    %1120 = vmatpush2.msra.mxu0 0.0
    %1121 = vmatprep.subr.mxu0 0.0
    %1122 = vmatpush2.msra.mxu0 0.0
    %1123 = vmatprep.subr.mxu0 0.0
    %1124 = vmatpush2.msra.mxu0 0.0
    %1125 = vmatprep.subr.mxu0 0.0
    %1126 = vmatpush2.msra.mxu0 0.0
    %1127 = vmatprep.subr.mxu0 0.0
    %1128 = vmatpush2.msra.mxu0 0.0
    %1129 = vmatprep.subr.mxu0 0.0
    %1130 = vmatpush2.msra.mxu0 0.0
    %1131 = vmatprep.subr.mxu0 0.0
    %1132 = vmatpush2.msra.mxu0 0.0
    %1133 = vmatprep.subr.mxu0 0.0
    %1134 = vmatpush2.msra.mxu0 0.0
    %1135 = vmatprep.subr.mxu0 0.0
    %1136 = vmatpush2.msra.mxu0 0.0
    %1137 = vmatprep.subr.mxu0 0.0
    %1138 = vmatpush2.msra.mxu0 0.0
    %1139 = vmatprep.subr.mxu0 0.0
    %1140 = vmatpush2.msra.mxu0 0.0
    %1141 = vmatprep.subr.mxu0 0.0
    %1142 = vmatpush2.msra.mxu0 0.0
    %1143 = vmatprep.subr.mxu0 0.0
    %1144 = vmatpush2.msra.mxu0 0.0
    %1145 = vmatprep.subr.mxu0 0.0
    %1146 = vmatpush2.msra.mxu0 0.0
    %1147 = vmatprep.subr.mxu0 0.0
    %1148 = vmatpush2.msra.mxu0 0.0
    %1149 = vmatprep.mubr.f32.mxu0 0.0
    %v1150 = vand.u32 %v719, 4294901760
    %v1151 = vsub.f32 %v719, %v1150
    %v1152 = vand.u32 %v1151, 4294901760
    %1153 = vmatmul.mubr.f32.gmra.mxu0 %v1152
    %v1154 = vpop.f32.mrf.mxu0
    %v1155 = vadd.f32 %v1066, %v1154
    %v1156 = vpop.f32.mrf.mxu0
    %1157 = vdwg.mxu0
    %1158 = vmatprep.subr.mxu0 0.0
    %v1159 = vand.u32 %v75, 4294901760
    %v1160 = vsub.f32 %v75, %v1159
    %v1161 = vand.u32 %v1160, 4294901760
    %1162 = vmatpush1.msra.mxu0 %v1161
    %1163 = vmatprep.subr.mxu0 0.0
    %v1164 = vand.u32 %v74, 4294901760
    %v1165 = vsub.f32 %v74, %v1164
    %v1166 = vand.u32 %v1165, 4294901760
    %1167 = vmatpush1.msra.mxu0 %v1166
    %1168 = vmatprep.subr.mxu0 0.0
    %v1169 = vand.u32 %v73, 4294901760
    %v1170 = vsub.f32 %v73, %v1169
    %v1171 = vand.u32 %v1170, 4294901760
    %1172 = vmatpush1.msra.mxu0 %v1171
    %1173 = vmatprep.subr.mxu0 0.0
    %v1174 = vand.u32 %v72, 4294901760
    %v1175 = vsub.f32 %v72, %v1174
    %v1176 = vand.u32 %v1175, 4294901760
    %1177 = vmatpush1.msra.mxu0 %v1176
    %1178 = vmatprep.subr.mxu0 0.0
    %v1179 = vand.u32 %v71, 4294901760
    %v1180 = vsub.f32 %v71, %v1179
    %v1181 = vand.u32 %v1180, 4294901760
    %1182 = vmatpush1.msra.mxu0 %v1181
    %1183 = vmatprep.subr.mxu0 0.0
    %v1184 = vand.u32 %v70, 4294901760
    %v1185 = vsub.f32 %v70, %v1184
    %v1186 = vand.u32 %v1185, 4294901760
    %1187 = vmatpush1.msra.mxu0 %v1186
    %1188 = vmatprep.subr.mxu0 0.0
    %v1189 = vand.u32 %v69, 4294901760
    %v1190 = vsub.f32 %v69, %v1189
    %v1191 = vand.u32 %v1190, 4294901760
    %1192 = vmatpush1.msra.mxu0 %v1191
    %1193 = vmatprep.subr.mxu0 0.0
    %v1194 = vand.u32 %v68, 4294901760
    %v1195 = vsub.f32 %v68, %v1194
    %v1196 = vand.u32 %v1195, 4294901760
    %1197 = vmatpush1.msra.mxu0 %v1196
    %1198 = vmatprep.subr.mxu0 0.0
    %v1199 = vand.u32 %v67, 4294901760
    %v1200 = vsub.f32 %v67, %v1199
    %v1201 = vand.u32 %v1200, 4294901760
    %1202 = vmatpush1.msra.mxu0 %v1201
    %1203 = vmatprep.subr.mxu0 0.0
    %v1204 = vand.u32 %v66, 4294901760
    %v1205 = vsub.f32 %v66, %v1204
    %v1206 = vand.u32 %v1205, 4294901760
    %1207 = vmatpush1.msra.mxu0 %v1206
    %1208 = vmatprep.subr.mxu0 0.0
    %v1209 = vand.u32 %v65, 4294901760
    %v1210 = vsub.f32 %v65, %v1209
    %v1211 = vand.u32 %v1210, 4294901760
    %1212 = vmatpush1.msra.mxu0 %v1211
    %1213 = vmatprep.subr.mxu0 0.0
    %v1214 = vand.u32 %v64, 4294901760
    %v1215 = vsub.f32 %v64, %v1214
    %v1216 = vand.u32 %v1215, 4294901760
    %1217 = vmatpush1.msra.mxu0 %v1216
    %1218 = vmatprep.subr.mxu0 0.0
    %v1219 = vand.u32 %v63, 4294901760
    %v1220 = vsub.f32 %v63, %v1219
    %v1221 = vand.u32 %v1220, 4294901760
    %1222 = vmatpush1.msra.mxu0 %v1221
    %1223 = vmatprep.subr.mxu0 0.0
    %v1224 = vand.u32 %v62, 4294901760
    %v1225 = vsub.f32 %v62, %v1224
    %v1226 = vand.u32 %v1225, 4294901760
    %1227 = vmatpush1.msra.mxu0 %v1226
    %1228 = vmatprep.subr.mxu0 0.0
    %v1229 = vand.u32 %v61, 4294901760
    %v1230 = vsub.f32 %v61, %v1229
    %v1231 = vand.u32 %v1230, 4294901760
    %1232 = vmatpush1.msra.mxu0 %v1231
    %1233 = vmatprep.subr.mxu0 0.0
    %v1234 = vand.u32 %v60, 4294901760
    %v1235 = vsub.f32 %v60, %v1234
    %v1236 = vand.u32 %v1235, 4294901760
    %1237 = vmatpush1.msra.mxu0 %v1236
    %1238 = vmatprep.subr.mxu0 0.0
    %1239 = vmatpush2.msra.mxu0 0.0
    %1240 = vmatprep.subr.mxu0 0.0
    %1241 = vmatpush2.msra.mxu0 0.0
    %1242 = vmatprep.subr.mxu0 0.0
    %1243 = vmatpush2.msra.mxu0 0.0
    %1244 = vmatprep.subr.mxu0 0.0
    %1245 = vmatpush2.msra.mxu0 0.0
    %1246 = vmatprep.subr.mxu0 0.0
    %1247 = vmatpush2.msra.mxu0 0.0
    %1248 = vmatprep.subr.mxu0 0.0
    %1249 = vmatpush2.msra.mxu0 0.0
    %1250 = vmatprep.subr.mxu0 0.0
    %1251 = vmatpush2.msra.mxu0 0.0
    %1252 = vmatprep.subr.mxu0 0.0
    %1253 = vmatpush2.msra.mxu0 0.0
    %1254 = vmatprep.subr.mxu0 0.0
    %1255 = vmatpush2.msra.mxu0 0.0
    %1256 = vmatprep.subr.mxu0 0.0
    %1257 = vmatpush2.msra.mxu0 0.0
    %1258 = vmatprep.subr.mxu0 0.0
    %1259 = vmatpush2.msra.mxu0 0.0
    %1260 = vmatprep.subr.mxu0 0.0
    %1261 = vmatpush2.msra.mxu0 0.0
    %1262 = vmatprep.subr.mxu0 0.0
    %1263 = vmatpush2.msra.mxu0 0.0
    %1264 = vmatprep.subr.mxu0 0.0
    %1265 = vmatpush2.msra.mxu0 0.0
    %1266 = vmatprep.subr.mxu0 0.0
    %1267 = vmatpush2.msra.mxu0 0.0
    %1268 = vmatprep.subr.mxu0 0.0
    %1269 = vmatpush2.msra.mxu0 0.0
    %1270 = vmatprep.mubr.f32.mxu0 0.0
    %v1271 = vand.u32 %v719, 4294901760
    %1272 = vmatmul.mubr.f32.gmra.mxu0 %v1271
    %v1273 = vpop.f32.mrf.mxu0
    %v1274 = vadd.f32 %v1155, %v1273
    %v1275 = vpop.f32.mrf.mxu0
    %1276 = vdwg.mxu0
    %1277 = vmatprep.subr.mxu0 0.0
    %v1278 = vand.u32 %v75, 4294901760
    %1279 = vmatpush1.msra.mxu0 %v1278
    %1280 = vmatprep.subr.mxu0 0.0
    %v1281 = vand.u32 %v74, 4294901760
    %1282 = vmatpush1.msra.mxu0 %v1281
    %1283 = vmatprep.subr.mxu0 0.0
    %v1284 = vand.u32 %v73, 4294901760
    %1285 = vmatpush1.msra.mxu0 %v1284
    %1286 = vmatprep.subr.mxu0 0.0
    %v1287 = vand.u32 %v72, 4294901760
    %1288 = vmatpush1.msra.mxu0 %v1287
    %1289 = vmatprep.subr.mxu0 0.0
    %v1290 = vand.u32 %v71, 4294901760
    %1291 = vmatpush1.msra.mxu0 %v1290
    %1292 = vmatprep.subr.mxu0 0.0
    %v1293 = vand.u32 %v70, 4294901760
    %1294 = vmatpush1.msra.mxu0 %v1293
    %1295 = vmatprep.subr.mxu0 0.0
    %v1296 = vand.u32 %v69, 4294901760
    %1297 = vmatpush1.msra.mxu0 %v1296
    %1298 = vmatprep.subr.mxu0 0.0
    %v1299 = vand.u32 %v68, 4294901760
    %1300 = vmatpush1.msra.mxu0 %v1299
    %1301 = vmatprep.subr.mxu0 0.0
    %v1302 = vand.u32 %v67, 4294901760
    %1303 = vmatpush1.msra.mxu0 %v1302
    %1304 = vmatprep.subr.mxu0 0.0
    %v1305 = vand.u32 %v66, 4294901760
    %1306 = vmatpush1.msra.mxu0 %v1305
    %1307 = vmatprep.subr.mxu0 0.0
    %v1308 = vand.u32 %v65, 4294901760
    %1309 = vmatpush1.msra.mxu0 %v1308
    %1310 = vmatprep.subr.mxu0 0.0
    %v1311 = vand.u32 %v64, 4294901760
    %1312 = vmatpush1.msra.mxu0 %v1311
    %1313 = vmatprep.subr.mxu0 0.0
    %v1314 = vand.u32 %v63, 4294901760
    %1315 = vmatpush1.msra.mxu0 %v1314
    %1316 = vmatprep.subr.mxu0 0.0
    %v1317 = vand.u32 %v62, 4294901760
    %1318 = vmatpush1.msra.mxu0 %v1317
    %1319 = vmatprep.subr.mxu0 0.0
    %v1320 = vand.u32 %v61, 4294901760
    %1321 = vmatpush1.msra.mxu0 %v1320
    %1322 = vmatprep.subr.mxu0 0.0
    %v1323 = vand.u32 %v60, 4294901760
    %1324 = vmatpush1.msra.mxu0 %v1323
    %1325 = vmatprep.subr.mxu0 0.0
    %1326 = vmatpush2.msra.mxu0 0.0
    %1327 = vmatprep.subr.mxu0 0.0
    %1328 = vmatpush2.msra.mxu0 0.0
    %1329 = vmatprep.subr.mxu0 0.0
    %1330 = vmatpush2.msra.mxu0 0.0
    %1331 = vmatprep.subr.mxu0 0.0
    %1332 = vmatpush2.msra.mxu0 0.0
    %1333 = vmatprep.subr.mxu0 0.0
    %1334 = vmatpush2.msra.mxu0 0.0
    %1335 = vmatprep.subr.mxu0 0.0
    %1336 = vmatpush2.msra.mxu0 0.0
    %1337 = vmatprep.subr.mxu0 0.0
    %1338 = vmatpush2.msra.mxu0 0.0
    %1339 = vmatprep.subr.mxu0 0.0
    %1340 = vmatpush2.msra.mxu0 0.0
    %1341 = vmatprep.subr.mxu0 0.0
    %1342 = vmatpush2.msra.mxu0 0.0
    %1343 = vmatprep.subr.mxu0 0.0
    %1344 = vmatpush2.msra.mxu0 0.0
    %1345 = vmatprep.subr.mxu0 0.0
    %1346 = vmatpush2.msra.mxu0 0.0
    %1347 = vmatprep.subr.mxu0 0.0
    %1348 = vmatpush2.msra.mxu0 0.0
    %1349 = vmatprep.subr.mxu0 0.0
    %1350 = vmatpush2.msra.mxu0 0.0
    %1351 = vmatprep.subr.mxu0 0.0
    %1352 = vmatpush2.msra.mxu0 0.0
    %1353 = vmatprep.subr.mxu0 0.0
    %1354 = vmatpush2.msra.mxu0 0.0
    %1355 = vmatprep.subr.mxu0 0.0
    %1356 = vmatpush2.msra.mxu0 0.0
    %1357 = vmatprep.mubr.f32.mxu0 0.0
    %v1358 = vand.u32 %v719, 4294901760
    %1359 = vmatmul.mubr.f32.gmra.mxu0 %v1358
    %v1360 = vpop.f32.mrf.mxu0
    %v1361 = vadd.f32 %v1274, %v1360
    %v1362 = vpop.f32.mrf.mxu0
    %1363 = vdwg.mxu0
    %v1364 = vadd.f32 %v722, %v1361
    %s1365 = scalar_lea.vmem [#allocation9], 8
    %1366 = vst [vmem:[%s1365] sm:$0xff] %v1364
    %s1367 = scalar_lea.vmem [#allocation3], 16
    %v1368 = vld [vmem:[%s1367] sm:$0xff]
    %1369 = vmatprep.subr.mxu0 0.0
    %v1370 = vand.u32 %v75, 4294901760
    %1371 = vmatpush1.msra.mxu0 %v1370
    %1372 = vmatprep.subr.mxu0 0.0
    %v1373 = vand.u32 %v74, 4294901760
    %1374 = vmatpush1.msra.mxu0 %v1373
    %1375 = vmatprep.subr.mxu0 0.0
    %v1376 = vand.u32 %v73, 4294901760
    %1377 = vmatpush1.msra.mxu0 %v1376
    %1378 = vmatprep.subr.mxu0 0.0
    %v1379 = vand.u32 %v72, 4294901760
    %1380 = vmatpush1.msra.mxu0 %v1379
    %1381 = vmatprep.subr.mxu0 0.0
    %v1382 = vand.u32 %v71, 4294901760
    %1383 = vmatpush1.msra.mxu0 %v1382
    %1384 = vmatprep.subr.mxu0 0.0
    %v1385 = vand.u32 %v70, 4294901760
    %1386 = vmatpush1.msra.mxu0 %v1385
    %1387 = vmatprep.subr.mxu0 0.0
    %v1388 = vand.u32 %v69, 4294901760
    %1389 = vmatpush1.msra.mxu0 %v1388
    %1390 = vmatprep.subr.mxu0 0.0
    %v1391 = vand.u32 %v68, 4294901760
    %1392 = vmatpush1.msra.mxu0 %v1391
    %1393 = vmatprep.subr.mxu0 0.0
    %v1394 = vand.u32 %v67, 4294901760
    %1395 = vmatpush1.msra.mxu0 %v1394
    %1396 = vmatprep.subr.mxu0 0.0
    %v1397 = vand.u32 %v66, 4294901760
    %1398 = vmatpush1.msra.mxu0 %v1397
    %1399 = vmatprep.subr.mxu0 0.0
    %v1400 = vand.u32 %v65, 4294901760
    %1401 = vmatpush1.msra.mxu0 %v1400
    %1402 = vmatprep.subr.mxu0 0.0
    %v1403 = vand.u32 %v64, 4294901760
    %1404 = vmatpush1.msra.mxu0 %v1403
    %1405 = vmatprep.subr.mxu0 0.0
    %v1406 = vand.u32 %v63, 4294901760
    %1407 = vmatpush1.msra.mxu0 %v1406
    %1408 = vmatprep.subr.mxu0 0.0
    %v1409 = vand.u32 %v62, 4294901760
    %1410 = vmatpush1.msra.mxu0 %v1409
    %1411 = vmatprep.subr.mxu0 0.0
    %v1412 = vand.u32 %v61, 4294901760
    %1413 = vmatpush1.msra.mxu0 %v1412
    %1414 = vmatprep.subr.mxu0 0.0
    %v1415 = vand.u32 %v60, 4294901760
    %1416 = vmatpush1.msra.mxu0 %v1415
    %1417 = vmatprep.subr.mxu0 0.0
    %1418 = vmatpush2.msra.mxu0 0.0
    %1419 = vmatprep.subr.mxu0 0.0
    %1420 = vmatpush2.msra.mxu0 0.0
    %1421 = vmatprep.subr.mxu0 0.0
    %1422 = vmatpush2.msra.mxu0 0.0
    %1423 = vmatprep.subr.mxu0 0.0
    %1424 = vmatpush2.msra.mxu0 0.0
    %1425 = vmatprep.subr.mxu0 0.0
    %1426 = vmatpush2.msra.mxu0 0.0
    %1427 = vmatprep.subr.mxu0 0.0
    %1428 = vmatpush2.msra.mxu0 0.0
    %1429 = vmatprep.subr.mxu0 0.0
    %1430 = vmatpush2.msra.mxu0 0.0
    %1431 = vmatprep.subr.mxu0 0.0
    %1432 = vmatpush2.msra.mxu0 0.0
    %1433 = vmatprep.subr.mxu0 0.0
    %1434 = vmatpush2.msra.mxu0 0.0
    %1435 = vmatprep.subr.mxu0 0.0
    %1436 = vmatpush2.msra.mxu0 0.0
    %1437 = vmatprep.subr.mxu0 0.0
    %1438 = vmatpush2.msra.mxu0 0.0
    %1439 = vmatprep.subr.mxu0 0.0
    %1440 = vmatpush2.msra.mxu0 0.0
    %1441 = vmatprep.subr.mxu0 0.0
    %1442 = vmatpush2.msra.mxu0 0.0
    %1443 = vmatprep.subr.mxu0 0.0
    %1444 = vmatpush2.msra.mxu0 0.0
    %1445 = vmatprep.subr.mxu0 0.0
    %1446 = vmatpush2.msra.mxu0 0.0
    %1447 = vmatprep.subr.mxu0 0.0
    %1448 = vmatpush2.msra.mxu0 0.0
    %1449 = vmatprep.mubr.f32.mxu0 0.0
    %v1450 = vand.u32 %v1364, 4294901760
    %v1451 = vsub.f32 %v1364, %v1450
    %v1452 = vand.u32 %v1451, 4294901760
    %v1453 = vsub.f32 %v1451, %v1452
    %v1454 = vand.u32 %v1453, 4294901760
    %1455 = vmatmul.mubr.f32.gmra.mxu0 %v1454
    %v1456 = vpop.f32.mrf.mxu0
    %v1457 = vadd.f32 0.0, %v1456
    %v1458 = vpop.f32.mrf.mxu0
    %1459 = vdwg.mxu0
    %1460 = vmatprep.subr.mxu0 0.0
    %v1461 = vand.u32 %v75, 4294901760
    %v1462 = vsub.f32 %v75, %v1461
    %v1463 = vand.u32 %v1462, 4294901760
    %v1464 = vsub.f32 %v1462, %v1463
    %v1465 = vand.u32 %v1464, 4294901760
    %1466 = vmatpush1.msra.mxu0 %v1465
    %1467 = vmatprep.subr.mxu0 0.0
    %v1468 = vand.u32 %v74, 4294901760
    %v1469 = vsub.f32 %v74, %v1468
    %v1470 = vand.u32 %v1469, 4294901760
    %v1471 = vsub.f32 %v1469, %v1470
    %v1472 = vand.u32 %v1471, 4294901760
    %1473 = vmatpush1.msra.mxu0 %v1472
    %1474 = vmatprep.subr.mxu0 0.0
    %v1475 = vand.u32 %v73, 4294901760
    %v1476 = vsub.f32 %v73, %v1475
    %v1477 = vand.u32 %v1476, 4294901760
    %v1478 = vsub.f32 %v1476, %v1477
    %v1479 = vand.u32 %v1478, 4294901760
    %1480 = vmatpush1.msra.mxu0 %v1479
    %1481 = vmatprep.subr.mxu0 0.0
    %v1482 = vand.u32 %v72, 4294901760
    %v1483 = vsub.f32 %v72, %v1482
    %v1484 = vand.u32 %v1483, 4294901760
    %v1485 = vsub.f32 %v1483, %v1484
    %v1486 = vand.u32 %v1485, 4294901760
    %1487 = vmatpush1.msra.mxu0 %v1486
    %1488 = vmatprep.subr.mxu0 0.0
    %v1489 = vand.u32 %v71, 4294901760
    %v1490 = vsub.f32 %v71, %v1489
    %v1491 = vand.u32 %v1490, 4294901760
    %v1492 = vsub.f32 %v1490, %v1491
    %v1493 = vand.u32 %v1492, 4294901760
    %1494 = vmatpush1.msra.mxu0 %v1493
    %1495 = vmatprep.subr.mxu0 0.0
    %v1496 = vand.u32 %v70, 4294901760
    %v1497 = vsub.f32 %v70, %v1496
    %v1498 = vand.u32 %v1497, 4294901760
    %v1499 = vsub.f32 %v1497, %v1498
    %v1500 = vand.u32 %v1499, 4294901760
    %1501 = vmatpush1.msra.mxu0 %v1500
    %1502 = vmatprep.subr.mxu0 0.0
    %v1503 = vand.u32 %v69, 4294901760
    %v1504 = vsub.f32 %v69, %v1503
    %v1505 = vand.u32 %v1504, 4294901760
    %v1506 = vsub.f32 %v1504, %v1505
    %v1507 = vand.u32 %v1506, 4294901760
    %1508 = vmatpush1.msra.mxu0 %v1507
    %1509 = vmatprep.subr.mxu0 0.0
    %v1510 = vand.u32 %v68, 4294901760
    %v1511 = vsub.f32 %v68, %v1510
    %v1512 = vand.u32 %v1511, 4294901760
    %v1513 = vsub.f32 %v1511, %v1512
    %v1514 = vand.u32 %v1513, 4294901760
    %1515 = vmatpush1.msra.mxu0 %v1514
    %1516 = vmatprep.subr.mxu0 0.0
    %v1517 = vand.u32 %v67, 4294901760
    %v1518 = vsub.f32 %v67, %v1517
    %v1519 = vand.u32 %v1518, 4294901760
    %v1520 = vsub.f32 %v1518, %v1519
    %v1521 = vand.u32 %v1520, 4294901760
    %1522 = vmatpush1.msra.mxu0 %v1521
    %1523 = vmatprep.subr.mxu0 0.0
    %v1524 = vand.u32 %v66, 4294901760
    %v1525 = vsub.f32 %v66, %v1524
    %v1526 = vand.u32 %v1525, 4294901760
    %v1527 = vsub.f32 %v1525, %v1526
    %v1528 = vand.u32 %v1527, 4294901760
    %1529 = vmatpush1.msra.mxu0 %v1528
    %1530 = vmatprep.subr.mxu0 0.0
    %v1531 = vand.u32 %v65, 4294901760
    %v1532 = vsub.f32 %v65, %v1531
    %v1533 = vand.u32 %v1532, 4294901760
    %v1534 = vsub.f32 %v1532, %v1533
    %v1535 = vand.u32 %v1534, 4294901760
    %1536 = vmatpush1.msra.mxu0 %v1535
    %1537 = vmatprep.subr.mxu0 0.0
    %v1538 = vand.u32 %v64, 4294901760
    %v1539 = vsub.f32 %v64, %v1538
    %v1540 = vand.u32 %v1539, 4294901760
    %v1541 = vsub.f32 %v1539, %v1540
    %v1542 = vand.u32 %v1541, 4294901760
    %1543 = vmatpush1.msra.mxu0 %v1542
    %1544 = vmatprep.subr.mxu0 0.0
    %v1545 = vand.u32 %v63, 4294901760
    %v1546 = vsub.f32 %v63, %v1545
    %v1547 = vand.u32 %v1546, 4294901760
    %v1548 = vsub.f32 %v1546, %v1547
    %v1549 = vand.u32 %v1548, 4294901760
    %1550 = vmatpush1.msra.mxu0 %v1549
    %1551 = vmatprep.subr.mxu0 0.0
    %v1552 = vand.u32 %v62, 4294901760
    %v1553 = vsub.f32 %v62, %v1552
    %v1554 = vand.u32 %v1553, 4294901760
    %v1555 = vsub.f32 %v1553, %v1554
    %v1556 = vand.u32 %v1555, 4294901760
    %1557 = vmatpush1.msra.mxu0 %v1556
    %1558 = vmatprep.subr.mxu0 0.0
    %v1559 = vand.u32 %v61, 4294901760
    %v1560 = vsub.f32 %v61, %v1559
    %v1561 = vand.u32 %v1560, 4294901760
    %v1562 = vsub.f32 %v1560, %v1561
    %v1563 = vand.u32 %v1562, 4294901760
    %1564 = vmatpush1.msra.mxu0 %v1563
    %1565 = vmatprep.subr.mxu0 0.0
    %v1566 = vand.u32 %v60, 4294901760
    %v1567 = vsub.f32 %v60, %v1566
    %v1568 = vand.u32 %v1567, 4294901760
    %v1569 = vsub.f32 %v1567, %v1568
    %v1570 = vand.u32 %v1569, 4294901760
    %1571 = vmatpush1.msra.mxu0 %v1570
    %1572 = vmatprep.subr.mxu0 0.0
    %1573 = vmatpush2.msra.mxu0 0.0
    %1574 = vmatprep.subr.mxu0 0.0
    %1575 = vmatpush2.msra.mxu0 0.0
    %1576 = vmatprep.subr.mxu0 0.0
    %1577 = vmatpush2.msra.mxu0 0.0
    %1578 = vmatprep.subr.mxu0 0.0
    %1579 = vmatpush2.msra.mxu0 0.0
    %1580 = vmatprep.subr.mxu0 0.0
    %1581 = vmatpush2.msra.mxu0 0.0
    %1582 = vmatprep.subr.mxu0 0.0
    %1583 = vmatpush2.msra.mxu0 0.0
    %1584 = vmatprep.subr.mxu0 0.0
    %1585 = vmatpush2.msra.mxu0 0.0
    %1586 = vmatprep.subr.mxu0 0.0
    %1587 = vmatpush2.msra.mxu0 0.0
    %1588 = vmatprep.subr.mxu0 0.0
    %1589 = vmatpush2.msra.mxu0 0.0
    %1590 = vmatprep.subr.mxu0 0.0
    %1591 = vmatpush2.msra.mxu0 0.0
    %1592 = vmatprep.subr.mxu0 0.0
    %1593 = vmatpush2.msra.mxu0 0.0
    %1594 = vmatprep.subr.mxu0 0.0
    %1595 = vmatpush2.msra.mxu0 0.0
    %1596 = vmatprep.subr.mxu0 0.0
    %1597 = vmatpush2.msra.mxu0 0.0
    %1598 = vmatprep.subr.mxu0 0.0
    %1599 = vmatpush2.msra.mxu0 0.0
    %1600 = vmatprep.subr.mxu0 0.0
    %1601 = vmatpush2.msra.mxu0 0.0
    %1602 = vmatprep.subr.mxu0 0.0
    %1603 = vmatpush2.msra.mxu0 0.0
    %1604 = vmatprep.mubr.f32.mxu0 0.0
    %v1605 = vand.u32 %v1364, 4294901760
    %1606 = vmatmul.mubr.f32.gmra.mxu0 %v1605
    %v1607 = vpop.f32.mrf.mxu0
    %v1608 = vadd.f32 %v1457, %v1607
    %v1609 = vpop.f32.mrf.mxu0
    %1610 = vdwg.mxu0
    %1611 = vmatprep.subr.mxu0 0.0
    %v1612 = vand.u32 %v75, 4294901760
    %v1613 = vsub.f32 %v75, %v1612
    %1614 = vmatpush1.msra.mxu0 %v1613
    %1615 = vmatprep.subr.mxu0 0.0
    %v1616 = vand.u32 %v74, 4294901760
    %v1617 = vsub.f32 %v74, %v1616
    %1618 = vmatpush1.msra.mxu0 %v1617
    %1619 = vmatprep.subr.mxu0 0.0
    %v1620 = vand.u32 %v73, 4294901760
    %v1621 = vsub.f32 %v73, %v1620
    %1622 = vmatpush1.msra.mxu0 %v1621
    %1623 = vmatprep.subr.mxu0 0.0
    %v1624 = vand.u32 %v72, 4294901760
    %v1625 = vsub.f32 %v72, %v1624
    %1626 = vmatpush1.msra.mxu0 %v1625
    %1627 = vmatprep.subr.mxu0 0.0
    %v1628 = vand.u32 %v71, 4294901760
    %v1629 = vsub.f32 %v71, %v1628
    %1630 = vmatpush1.msra.mxu0 %v1629
    %1631 = vmatprep.subr.mxu0 0.0
    %v1632 = vand.u32 %v70, 4294901760
    %v1633 = vsub.f32 %v70, %v1632
    %1634 = vmatpush1.msra.mxu0 %v1633
    %1635 = vmatprep.subr.mxu0 0.0
    %v1636 = vand.u32 %v69, 4294901760
    %v1637 = vsub.f32 %v69, %v1636
    %1638 = vmatpush1.msra.mxu0 %v1637
    %1639 = vmatprep.subr.mxu0 0.0
    %v1640 = vand.u32 %v68, 4294901760
    %v1641 = vsub.f32 %v68, %v1640
    %1642 = vmatpush1.msra.mxu0 %v1641
    %1643 = vmatprep.subr.mxu0 0.0
    %v1644 = vand.u32 %v67, 4294901760
    %v1645 = vsub.f32 %v67, %v1644
    %1646 = vmatpush1.msra.mxu0 %v1645
    %1647 = vmatprep.subr.mxu0 0.0
    %v1648 = vand.u32 %v66, 4294901760
    %v1649 = vsub.f32 %v66, %v1648
    %1650 = vmatpush1.msra.mxu0 %v1649
    %1651 = vmatprep.subr.mxu0 0.0
    %v1652 = vand.u32 %v65, 4294901760
    %v1653 = vsub.f32 %v65, %v1652
    %1654 = vmatpush1.msra.mxu0 %v1653
    %1655 = vmatprep.subr.mxu0 0.0
    %v1656 = vand.u32 %v64, 4294901760
    %v1657 = vsub.f32 %v64, %v1656
    %1658 = vmatpush1.msra.mxu0 %v1657
    %1659 = vmatprep.subr.mxu0 0.0
    %v1660 = vand.u32 %v63, 4294901760
    %v1661 = vsub.f32 %v63, %v1660
    %1662 = vmatpush1.msra.mxu0 %v1661
    %1663 = vmatprep.subr.mxu0 0.0
    %v1664 = vand.u32 %v62, 4294901760
    %v1665 = vsub.f32 %v62, %v1664
    %1666 = vmatpush1.msra.mxu0 %v1665
    %1667 = vmatprep.subr.mxu0 0.0
    %v1668 = vand.u32 %v61, 4294901760
    %v1669 = vsub.f32 %v61, %v1668
    %1670 = vmatpush1.msra.mxu0 %v1669
    %1671 = vmatprep.subr.mxu0 0.0
    %v1672 = vand.u32 %v60, 4294901760
    %v1673 = vsub.f32 %v60, %v1672
    %1674 = vmatpush1.msra.mxu0 %v1673
    %1675 = vmatprep.subr.mxu0 0.0
    %1676 = vmatpush2.msra.mxu0 0.0
    %1677 = vmatprep.subr.mxu0 0.0
    %1678 = vmatpush2.msra.mxu0 0.0
    %1679 = vmatprep.subr.mxu0 0.0
    %1680 = vmatpush2.msra.mxu0 0.0
    %1681 = vmatprep.subr.mxu0 0.0
    %1682 = vmatpush2.msra.mxu0 0.0
    %1683 = vmatprep.subr.mxu0 0.0
    %1684 = vmatpush2.msra.mxu0 0.0
    %1685 = vmatprep.subr.mxu0 0.0
    %1686 = vmatpush2.msra.mxu0 0.0
    %1687 = vmatprep.subr.mxu0 0.0
    %1688 = vmatpush2.msra.mxu0 0.0
    %1689 = vmatprep.subr.mxu0 0.0
    %1690 = vmatpush2.msra.mxu0 0.0
    %1691 = vmatprep.subr.mxu0 0.0
    %1692 = vmatpush2.msra.mxu0 0.0
    %1693 = vmatprep.subr.mxu0 0.0
    %1694 = vmatpush2.msra.mxu0 0.0
    %1695 = vmatprep.subr.mxu0 0.0
    %1696 = vmatpush2.msra.mxu0 0.0
    %1697 = vmatprep.subr.mxu0 0.0
    %1698 = vmatpush2.msra.mxu0 0.0
    %1699 = vmatprep.subr.mxu0 0.0
    %1700 = vmatpush2.msra.mxu0 0.0
    %1701 = vmatprep.subr.mxu0 0.0
    %1702 = vmatpush2.msra.mxu0 0.0
    %1703 = vmatprep.subr.mxu0 0.0
    %1704 = vmatpush2.msra.mxu0 0.0
    %1705 = vmatprep.subr.mxu0 0.0
    %1706 = vmatpush2.msra.mxu0 0.0
    %1707 = vmatprep.mubr.f32.mxu0 0.0
    %v1708 = vand.u32 %v1364, 4294901760
    %v1709 = vsub.f32 %v1364, %v1708
    %1710 = vmatmul.mubr.f32.gmra.mxu0 %v1709
    %v1711 = vpop.f32.mrf.mxu0
    %v1712 = vadd.f32 %v1608, %v1711
    %v1713 = vpop.f32.mrf.mxu0
    %1714 = vdwg.mxu0
    %1715 = vmatprep.subr.mxu0 0.0
    %v1716 = vand.u32 %v75, 4294901760
    %1717 = vmatpush1.msra.mxu0 %v1716
    %1718 = vmatprep.subr.mxu0 0.0
    %v1719 = vand.u32 %v74, 4294901760
    %1720 = vmatpush1.msra.mxu0 %v1719
    %1721 = vmatprep.subr.mxu0 0.0
    %v1722 = vand.u32 %v73, 4294901760
    %1723 = vmatpush1.msra.mxu0 %v1722
    %1724 = vmatprep.subr.mxu0 0.0
    %v1725 = vand.u32 %v72, 4294901760
    %1726 = vmatpush1.msra.mxu0 %v1725
    %1727 = vmatprep.subr.mxu0 0.0
    %v1728 = vand.u32 %v71, 4294901760
    %1729 = vmatpush1.msra.mxu0 %v1728
    %1730 = vmatprep.subr.mxu0 0.0
    %v1731 = vand.u32 %v70, 4294901760
    %1732 = vmatpush1.msra.mxu0 %v1731
    %1733 = vmatprep.subr.mxu0 0.0
    %v1734 = vand.u32 %v69, 4294901760
    %1735 = vmatpush1.msra.mxu0 %v1734
    %1736 = vmatprep.subr.mxu0 0.0
    %v1737 = vand.u32 %v68, 4294901760
    %1738 = vmatpush1.msra.mxu0 %v1737
    %1739 = vmatprep.subr.mxu0 0.0
    %v1740 = vand.u32 %v67, 4294901760
    %1741 = vmatpush1.msra.mxu0 %v1740
    %1742 = vmatprep.subr.mxu0 0.0
    %v1743 = vand.u32 %v66, 4294901760
    %1744 = vmatpush1.msra.mxu0 %v1743
    %1745 = vmatprep.subr.mxu0 0.0
    %v1746 = vand.u32 %v65, 4294901760
    %1747 = vmatpush1.msra.mxu0 %v1746
    %1748 = vmatprep.subr.mxu0 0.0
    %v1749 = vand.u32 %v64, 4294901760
    %1750 = vmatpush1.msra.mxu0 %v1749
    %1751 = vmatprep.subr.mxu0 0.0
    %v1752 = vand.u32 %v63, 4294901760
    %1753 = vmatpush1.msra.mxu0 %v1752
    %1754 = vmatprep.subr.mxu0 0.0
    %v1755 = vand.u32 %v62, 4294901760
    %1756 = vmatpush1.msra.mxu0 %v1755
    %1757 = vmatprep.subr.mxu0 0.0
    %v1758 = vand.u32 %v61, 4294901760
    %1759 = vmatpush1.msra.mxu0 %v1758
    %1760 = vmatprep.subr.mxu0 0.0
    %v1761 = vand.u32 %v60, 4294901760
    %1762 = vmatpush1.msra.mxu0 %v1761
    %1763 = vmatprep.subr.mxu0 0.0
    %1764 = vmatpush2.msra.mxu0 0.0
    %1765 = vmatprep.subr.mxu0 0.0
    %1766 = vmatpush2.msra.mxu0 0.0
    %1767 = vmatprep.subr.mxu0 0.0
    %1768 = vmatpush2.msra.mxu0 0.0
    %1769 = vmatprep.subr.mxu0 0.0
    %1770 = vmatpush2.msra.mxu0 0.0
    %1771 = vmatprep.subr.mxu0 0.0
    %1772 = vmatpush2.msra.mxu0 0.0
    %1773 = vmatprep.subr.mxu0 0.0
    %1774 = vmatpush2.msra.mxu0 0.0
    %1775 = vmatprep.subr.mxu0 0.0
    %1776 = vmatpush2.msra.mxu0 0.0
    %1777 = vmatprep.subr.mxu0 0.0
    %1778 = vmatpush2.msra.mxu0 0.0
    %1779 = vmatprep.subr.mxu0 0.0
    %1780 = vmatpush2.msra.mxu0 0.0
    %1781 = vmatprep.subr.mxu0 0.0
    %1782 = vmatpush2.msra.mxu0 0.0
    %1783 = vmatprep.subr.mxu0 0.0
    %1784 = vmatpush2.msra.mxu0 0.0
    %1785 = vmatprep.subr.mxu0 0.0
    %1786 = vmatpush2.msra.mxu0 0.0
    %1787 = vmatprep.subr.mxu0 0.0
    %1788 = vmatpush2.msra.mxu0 0.0
    %1789 = vmatprep.subr.mxu0 0.0
    %1790 = vmatpush2.msra.mxu0 0.0
    %1791 = vmatprep.subr.mxu0 0.0
    %1792 = vmatpush2.msra.mxu0 0.0
    %1793 = vmatprep.subr.mxu0 0.0
    %1794 = vmatpush2.msra.mxu0 0.0
    %1795 = vmatprep.mubr.f32.mxu0 0.0
    %v1796 = vand.u32 %v1364, 4294901760
    %v1797 = vsub.f32 %v1364, %v1796
    %v1798 = vand.u32 %v1797, 4294901760
    %1799 = vmatmul.mubr.f32.gmra.mxu0 %v1798
    %v1800 = vpop.f32.mrf.mxu0
    %v1801 = vadd.f32 %v1712, %v1800
    %v1802 = vpop.f32.mrf.mxu0
    %1803 = vdwg.mxu0
    %1804 = vmatprep.subr.mxu0 0.0
    %v1805 = vand.u32 %v75, 4294901760
    %v1806 = vsub.f32 %v75, %v1805
    %v1807 = vand.u32 %v1806, 4294901760
    %1808 = vmatpush1.msra.mxu0 %v1807
    %1809 = vmatprep.subr.mxu0 0.0
    %v1810 = vand.u32 %v74, 4294901760
    %v1811 = vsub.f32 %v74, %v1810
    %v1812 = vand.u32 %v1811, 4294901760
    %1813 = vmatpush1.msra.mxu0 %v1812
    %1814 = vmatprep.subr.mxu0 0.0
    %v1815 = vand.u32 %v73, 4294901760
    %v1816 = vsub.f32 %v73, %v1815
    %v1817 = vand.u32 %v1816, 4294901760
    %1818 = vmatpush1.msra.mxu0 %v1817
    %1819 = vmatprep.subr.mxu0 0.0
    %v1820 = vand.u32 %v72, 4294901760
    %v1821 = vsub.f32 %v72, %v1820
    %v1822 = vand.u32 %v1821, 4294901760
    %1823 = vmatpush1.msra.mxu0 %v1822
    %1824 = vmatprep.subr.mxu0 0.0
    %v1825 = vand.u32 %v71, 4294901760
    %v1826 = vsub.f32 %v71, %v1825
    %v1827 = vand.u32 %v1826, 4294901760
    %1828 = vmatpush1.msra.mxu0 %v1827
    %1829 = vmatprep.subr.mxu0 0.0
    %v1830 = vand.u32 %v70, 4294901760
    %v1831 = vsub.f32 %v70, %v1830
    %v1832 = vand.u32 %v1831, 4294901760
    %1833 = vmatpush1.msra.mxu0 %v1832
    %1834 = vmatprep.subr.mxu0 0.0
    %v1835 = vand.u32 %v69, 4294901760
    %v1836 = vsub.f32 %v69, %v1835
    %v1837 = vand.u32 %v1836, 4294901760
    %1838 = vmatpush1.msra.mxu0 %v1837
    %1839 = vmatprep.subr.mxu0 0.0
    %v1840 = vand.u32 %v68, 4294901760
    %v1841 = vsub.f32 %v68, %v1840
    %v1842 = vand.u32 %v1841, 4294901760
    %1843 = vmatpush1.msra.mxu0 %v1842
    %1844 = vmatprep.subr.mxu0 0.0
    %v1845 = vand.u32 %v67, 4294901760
    %v1846 = vsub.f32 %v67, %v1845
    %v1847 = vand.u32 %v1846, 4294901760
    %1848 = vmatpush1.msra.mxu0 %v1847
    %1849 = vmatprep.subr.mxu0 0.0
    %v1850 = vand.u32 %v66, 4294901760
    %v1851 = vsub.f32 %v66, %v1850
    %v1852 = vand.u32 %v1851, 4294901760
    %1853 = vmatpush1.msra.mxu0 %v1852
    %1854 = vmatprep.subr.mxu0 0.0
    %v1855 = vand.u32 %v65, 4294901760
    %v1856 = vsub.f32 %v65, %v1855
    %v1857 = vand.u32 %v1856, 4294901760
    %1858 = vmatpush1.msra.mxu0 %v1857
    %1859 = vmatprep.subr.mxu0 0.0
    %v1860 = vand.u32 %v64, 4294901760
    %v1861 = vsub.f32 %v64, %v1860
    %v1862 = vand.u32 %v1861, 4294901760
    %1863 = vmatpush1.msra.mxu0 %v1862
    %1864 = vmatprep.subr.mxu0 0.0
    %v1865 = vand.u32 %v63, 4294901760
    %v1866 = vsub.f32 %v63, %v1865
    %v1867 = vand.u32 %v1866, 4294901760
    %1868 = vmatpush1.msra.mxu0 %v1867
    %1869 = vmatprep.subr.mxu0 0.0
    %v1870 = vand.u32 %v62, 4294901760
    %v1871 = vsub.f32 %v62, %v1870
    %v1872 = vand.u32 %v1871, 4294901760
    %1873 = vmatpush1.msra.mxu0 %v1872
    %1874 = vmatprep.subr.mxu0 0.0
    %v1875 = vand.u32 %v61, 4294901760
    %v1876 = vsub.f32 %v61, %v1875
    %v1877 = vand.u32 %v1876, 4294901760
    %1878 = vmatpush1.msra.mxu0 %v1877
    %1879 = vmatprep.subr.mxu0 0.0
    %v1880 = vand.u32 %v60, 4294901760
    %v1881 = vsub.f32 %v60, %v1880
    %v1882 = vand.u32 %v1881, 4294901760
    %1883 = vmatpush1.msra.mxu0 %v1882
    %1884 = vmatprep.subr.mxu0 0.0
    %1885 = vmatpush2.msra.mxu0 0.0
    %1886 = vmatprep.subr.mxu0 0.0
    %1887 = vmatpush2.msra.mxu0 0.0
    %1888 = vmatprep.subr.mxu0 0.0
    %1889 = vmatpush2.msra.mxu0 0.0
    %1890 = vmatprep.subr.mxu0 0.0
    %1891 = vmatpush2.msra.mxu0 0.0
    %1892 = vmatprep.subr.mxu0 0.0
    %1893 = vmatpush2.msra.mxu0 0.0
    %1894 = vmatprep.subr.mxu0 0.0
    %1895 = vmatpush2.msra.mxu0 0.0
    %1896 = vmatprep.subr.mxu0 0.0
    %1897 = vmatpush2.msra.mxu0 0.0
    %1898 = vmatprep.subr.mxu0 0.0
    %1899 = vmatpush2.msra.mxu0 0.0
    %1900 = vmatprep.subr.mxu0 0.0
    %1901 = vmatpush2.msra.mxu0 0.0
    %1902 = vmatprep.subr.mxu0 0.0
    %1903 = vmatpush2.msra.mxu0 0.0
    %1904 = vmatprep.subr.mxu0 0.0
    %1905 = vmatpush2.msra.mxu0 0.0
    %1906 = vmatprep.subr.mxu0 0.0
    %1907 = vmatpush2.msra.mxu0 0.0
    %1908 = vmatprep.subr.mxu0 0.0
    %1909 = vmatpush2.msra.mxu0 0.0
    %1910 = vmatprep.subr.mxu0 0.0
    %1911 = vmatpush2.msra.mxu0 0.0
    %1912 = vmatprep.subr.mxu0 0.0
    %1913 = vmatpush2.msra.mxu0 0.0
    %1914 = vmatprep.subr.mxu0 0.0
    %1915 = vmatpush2.msra.mxu0 0.0
    %1916 = vmatprep.mubr.f32.mxu0 0.0
    %v1917 = vand.u32 %v1364, 4294901760
    %1918 = vmatmul.mubr.f32.gmra.mxu0 %v1917
    %v1919 = vpop.f32.mrf.mxu0
    %v1920 = vadd.f32 %v1801, %v1919
    %v1921 = vpop.f32.mrf.mxu0
    %1922 = vdwg.mxu0
    %1923 = vmatprep.subr.mxu0 0.0
    %v1924 = vand.u32 %v75, 4294901760
    %1925 = vmatpush1.msra.mxu0 %v1924
    %1926 = vmatprep.subr.mxu0 0.0
    %v1927 = vand.u32 %v74, 4294901760
    %1928 = vmatpush1.msra.mxu0 %v1927
    %1929 = vmatprep.subr.mxu0 0.0
    %v1930 = vand.u32 %v73, 4294901760
    %1931 = vmatpush1.msra.mxu0 %v1930
    %1932 = vmatprep.subr.mxu0 0.0
    %v1933 = vand.u32 %v72, 4294901760
    %1934 = vmatpush1.msra.mxu0 %v1933
    %1935 = vmatprep.subr.mxu0 0.0
    %v1936 = vand.u32 %v71, 4294901760
    %1937 = vmatpush1.msra.mxu0 %v1936
    %1938 = vmatprep.subr.mxu0 0.0
    %v1939 = vand.u32 %v70, 4294901760
    %1940 = vmatpush1.msra.mxu0 %v1939
    %1941 = vmatprep.subr.mxu0 0.0
    %v1942 = vand.u32 %v69, 4294901760
    %1943 = vmatpush1.msra.mxu0 %v1942
    %1944 = vmatprep.subr.mxu0 0.0
    %v1945 = vand.u32 %v68, 4294901760
    %1946 = vmatpush1.msra.mxu0 %v1945
    %1947 = vmatprep.subr.mxu0 0.0
    %v1948 = vand.u32 %v67, 4294901760
    %1949 = vmatpush1.msra.mxu0 %v1948
    %1950 = vmatprep.subr.mxu0 0.0
    %v1951 = vand.u32 %v66, 4294901760
    %1952 = vmatpush1.msra.mxu0 %v1951
    %1953 = vmatprep.subr.mxu0 0.0
    %v1954 = vand.u32 %v65, 4294901760
    %1955 = vmatpush1.msra.mxu0 %v1954
    %1956 = vmatprep.subr.mxu0 0.0
    %v1957 = vand.u32 %v64, 4294901760
    %1958 = vmatpush1.msra.mxu0 %v1957
    %1959 = vmatprep.subr.mxu0 0.0
    %v1960 = vand.u32 %v63, 4294901760
    %1961 = vmatpush1.msra.mxu0 %v1960
    %1962 = vmatprep.subr.mxu0 0.0
    %v1963 = vand.u32 %v62, 4294901760
    %1964 = vmatpush1.msra.mxu0 %v1963
    %1965 = vmatprep.subr.mxu0 0.0
    %v1966 = vand.u32 %v61, 4294901760
    %1967 = vmatpush1.msra.mxu0 %v1966
    %1968 = vmatprep.subr.mxu0 0.0
    %v1969 = vand.u32 %v60, 4294901760
    %1970 = vmatpush1.msra.mxu0 %v1969
    %1971 = vmatprep.subr.mxu0 0.0
    %1972 = vmatpush2.msra.mxu0 0.0
    %1973 = vmatprep.subr.mxu0 0.0
    %1974 = vmatpush2.msra.mxu0 0.0
    %1975 = vmatprep.subr.mxu0 0.0
    %1976 = vmatpush2.msra.mxu0 0.0
    %1977 = vmatprep.subr.mxu0 0.0
    %1978 = vmatpush2.msra.mxu0 0.0
    %1979 = vmatprep.subr.mxu0 0.0
    %1980 = vmatpush2.msra.mxu0 0.0
    %1981 = vmatprep.subr.mxu0 0.0
    %1982 = vmatpush2.msra.mxu0 0.0
    %1983 = vmatprep.subr.mxu0 0.0
    %1984 = vmatpush2.msra.mxu0 0.0
    %1985 = vmatprep.subr.mxu0 0.0
    %1986 = vmatpush2.msra.mxu0 0.0
    %1987 = vmatprep.subr.mxu0 0.0
    %1988 = vmatpush2.msra.mxu0 0.0
    %1989 = vmatprep.subr.mxu0 0.0
    %1990 = vmatpush2.msra.mxu0 0.0
    %1991 = vmatprep.subr.mxu0 0.0
    %1992 = vmatpush2.msra.mxu0 0.0
    %1993 = vmatprep.subr.mxu0 0.0
    %1994 = vmatpush2.msra.mxu0 0.0
    %1995 = vmatprep.subr.mxu0 0.0
    %1996 = vmatpush2.msra.mxu0 0.0
    %1997 = vmatprep.subr.mxu0 0.0
    %1998 = vmatpush2.msra.mxu0 0.0
    %1999 = vmatprep.subr.mxu0 0.0
    %2000 = vmatpush2.msra.mxu0 0.0
    %2001 = vmatprep.subr.mxu0 0.0
    %2002 = vmatpush2.msra.mxu0 0.0
    %2003 = vmatprep.mubr.f32.mxu0 0.0
    %v2004 = vand.u32 %v1364, 4294901760
    %2005 = vmatmul.mubr.f32.gmra.mxu0 %v2004
    %v2006 = vpop.f32.mrf.mxu0
    %v2007 = vadd.f32 %v1920, %v2006
    %v2008 = vpop.f32.mrf.mxu0
    %2009 = vdwg.mxu0
    %v2010 = vadd.f32 %v1368, %v2007
    %s2011 = scalar_lea.vmem [#allocation9], 16
    %2012 = vst [vmem:[%s2011] sm:$0xff] %v2010
    %s2013 = scalar_lea.vmem [#allocation3], 24
    %v2014 = vld [vmem:[%s2013] sm:$0xff]
    %2015 = vmatprep.subr.mxu0 0.0
    %v2016 = vand.u32 %v75, 4294901760
    %2017 = vmatpush1.msra.mxu0 %v2016
    %2018 = vmatprep.subr.mxu0 0.0
    %v2019 = vand.u32 %v74, 4294901760
    %2020 = vmatpush1.msra.mxu0 %v2019
    %2021 = vmatprep.subr.mxu0 0.0
    %v2022 = vand.u32 %v73, 4294901760
    %2023 = vmatpush1.msra.mxu0 %v2022
    %2024 = vmatprep.subr.mxu0 0.0
    %v2025 = vand.u32 %v72, 4294901760
    %2026 = vmatpush1.msra.mxu0 %v2025
    %2027 = vmatprep.subr.mxu0 0.0
    %v2028 = vand.u32 %v71, 4294901760
    %2029 = vmatpush1.msra.mxu0 %v2028
    %2030 = vmatprep.subr.mxu0 0.0
    %v2031 = vand.u32 %v70, 4294901760
    %2032 = vmatpush1.msra.mxu0 %v2031
    %2033 = vmatprep.subr.mxu0 0.0
    %v2034 = vand.u32 %v69, 4294901760
    %2035 = vmatpush1.msra.mxu0 %v2034
    %2036 = vmatprep.subr.mxu0 0.0
    %v2037 = vand.u32 %v68, 4294901760
    %2038 = vmatpush1.msra.mxu0 %v2037
    %2039 = vmatprep.subr.mxu0 0.0
    %v2040 = vand.u32 %v67, 4294901760
    %2041 = vmatpush1.msra.mxu0 %v2040
    %2042 = vmatprep.subr.mxu0 0.0
    %v2043 = vand.u32 %v66, 4294901760
    %2044 = vmatpush1.msra.mxu0 %v2043
    %2045 = vmatprep.subr.mxu0 0.0
    %v2046 = vand.u32 %v65, 4294901760
    %2047 = vmatpush1.msra.mxu0 %v2046
    %2048 = vmatprep.subr.mxu0 0.0
    %v2049 = vand.u32 %v64, 4294901760
    %2050 = vmatpush1.msra.mxu0 %v2049
    %2051 = vmatprep.subr.mxu0 0.0
    %v2052 = vand.u32 %v63, 4294901760
    %2053 = vmatpush1.msra.mxu0 %v2052
    %2054 = vmatprep.subr.mxu0 0.0
    %v2055 = vand.u32 %v62, 4294901760
    %2056 = vmatpush1.msra.mxu0 %v2055
    %2057 = vmatprep.subr.mxu0 0.0
    %v2058 = vand.u32 %v61, 4294901760
    %2059 = vmatpush1.msra.mxu0 %v2058
    %2060 = vmatprep.subr.mxu0 0.0
    %v2061 = vand.u32 %v60, 4294901760
    %2062 = vmatpush1.msra.mxu0 %v2061
    %2063 = vmatprep.subr.mxu0 0.0
    %2064 = vmatpush2.msra.mxu0 0.0
    %2065 = vmatprep.subr.mxu0 0.0
    %2066 = vmatpush2.msra.mxu0 0.0
    %2067 = vmatprep.subr.mxu0 0.0
    %2068 = vmatpush2.msra.mxu0 0.0
    %2069 = vmatprep.subr.mxu0 0.0
    %2070 = vmatpush2.msra.mxu0 0.0
    %2071 = vmatprep.subr.mxu0 0.0
    %2072 = vmatpush2.msra.mxu0 0.0
    %2073 = vmatprep.subr.mxu0 0.0
    %2074 = vmatpush2.msra.mxu0 0.0
    %2075 = vmatprep.subr.mxu0 0.0
    %2076 = vmatpush2.msra.mxu0 0.0
    %2077 = vmatprep.subr.mxu0 0.0
    %2078 = vmatpush2.msra.mxu0 0.0
    %2079 = vmatprep.subr.mxu0 0.0
    %2080 = vmatpush2.msra.mxu0 0.0
    %2081 = vmatprep.subr.mxu0 0.0
    %2082 = vmatpush2.msra.mxu0 0.0
    %2083 = vmatprep.subr.mxu0 0.0
    %2084 = vmatpush2.msra.mxu0 0.0
    %2085 = vmatprep.subr.mxu0 0.0
    %2086 = vmatpush2.msra.mxu0 0.0
    %2087 = vmatprep.subr.mxu0 0.0
    %2088 = vmatpush2.msra.mxu0 0.0
    %2089 = vmatprep.subr.mxu0 0.0
    %2090 = vmatpush2.msra.mxu0 0.0
    %2091 = vmatprep.subr.mxu0 0.0
    %2092 = vmatpush2.msra.mxu0 0.0
    %2093 = vmatprep.subr.mxu0 0.0
    %2094 = vmatpush2.msra.mxu0 0.0
    %2095 = vmatprep.mubr.f32.mxu0 0.0
    %v2096 = vand.u32 %v2010, 4294901760
    %v2097 = vsub.f32 %v2010, %v2096
    %v2098 = vand.u32 %v2097, 4294901760
    %v2099 = vsub.f32 %v2097, %v2098
    %v2100 = vand.u32 %v2099, 4294901760
    %2101 = vmatmul.mubr.f32.gmra.mxu0 %v2100
    %v2102 = vpop.f32.mrf.mxu0
    %v2103 = vadd.f32 0.0, %v2102
    %v2104 = vpop.f32.mrf.mxu0
    %2105 = vdwg.mxu0
    %2106 = vmatprep.subr.mxu0 0.0
    %v2107 = vand.u32 %v75, 4294901760
    %v2108 = vsub.f32 %v75, %v2107
    %v2109 = vand.u32 %v2108, 4294901760
    %v2110 = vsub.f32 %v2108, %v2109
    %v2111 = vand.u32 %v2110, 4294901760
    %2112 = vmatpush1.msra.mxu0 %v2111
    %2113 = vmatprep.subr.mxu0 0.0
    %v2114 = vand.u32 %v74, 4294901760
    %v2115 = vsub.f32 %v74, %v2114
    %v2116 = vand.u32 %v2115, 4294901760
    %v2117 = vsub.f32 %v2115, %v2116
    %v2118 = vand.u32 %v2117, 4294901760
    %2119 = vmatpush1.msra.mxu0 %v2118
    %2120 = vmatprep.subr.mxu0 0.0
    %v2121 = vand.u32 %v73, 4294901760
    %v2122 = vsub.f32 %v73, %v2121
    %v2123 = vand.u32 %v2122, 4294901760
    %v2124 = vsub.f32 %v2122, %v2123
    %v2125 = vand.u32 %v2124, 4294901760
    %2126 = vmatpush1.msra.mxu0 %v2125
    %2127 = vmatprep.subr.mxu0 0.0
    %v2128 = vand.u32 %v72, 4294901760
    %v2129 = vsub.f32 %v72, %v2128
    %v2130 = vand.u32 %v2129, 4294901760
    %v2131 = vsub.f32 %v2129, %v2130
    %v2132 = vand.u32 %v2131, 4294901760
    %2133 = vmatpush1.msra.mxu0 %v2132
    %2134 = vmatprep.subr.mxu0 0.0
    %v2135 = vand.u32 %v71, 4294901760
    %v2136 = vsub.f32 %v71, %v2135
    %v2137 = vand.u32 %v2136, 4294901760
    %v2138 = vsub.f32 %v2136, %v2137
    %v2139 = vand.u32 %v2138, 4294901760
    %2140 = vmatpush1.msra.mxu0 %v2139
    %2141 = vmatprep.subr.mxu0 0.0
    %v2142 = vand.u32 %v70, 4294901760
    %v2143 = vsub.f32 %v70, %v2142
    %v2144 = vand.u32 %v2143, 4294901760
    %v2145 = vsub.f32 %v2143, %v2144
    %v2146 = vand.u32 %v2145, 4294901760
    %2147 = vmatpush1.msra.mxu0 %v2146
    %2148 = vmatprep.subr.mxu0 0.0
    %v2149 = vand.u32 %v69, 4294901760
    %v2150 = vsub.f32 %v69, %v2149
    %v2151 = vand.u32 %v2150, 4294901760
    %v2152 = vsub.f32 %v2150, %v2151
    %v2153 = vand.u32 %v2152, 4294901760
    %2154 = vmatpush1.msra.mxu0 %v2153
    %2155 = vmatprep.subr.mxu0 0.0
    %v2156 = vand.u32 %v68, 4294901760
    %v2157 = vsub.f32 %v68, %v2156
    %v2158 = vand.u32 %v2157, 4294901760
    %v2159 = vsub.f32 %v2157, %v2158
    %v2160 = vand.u32 %v2159, 4294901760
    %2161 = vmatpush1.msra.mxu0 %v2160
    %2162 = vmatprep.subr.mxu0 0.0
    %v2163 = vand.u32 %v67, 4294901760
    %v2164 = vsub.f32 %v67, %v2163
    %v2165 = vand.u32 %v2164, 4294901760
    %v2166 = vsub.f32 %v2164, %v2165
    %v2167 = vand.u32 %v2166, 4294901760
    %2168 = vmatpush1.msra.mxu0 %v2167
    %2169 = vmatprep.subr.mxu0 0.0
    %v2170 = vand.u32 %v66, 4294901760
    %v2171 = vsub.f32 %v66, %v2170
    %v2172 = vand.u32 %v2171, 4294901760
    %v2173 = vsub.f32 %v2171, %v2172
    %v2174 = vand.u32 %v2173, 4294901760
    %2175 = vmatpush1.msra.mxu0 %v2174
    %2176 = vmatprep.subr.mxu0 0.0
    %v2177 = vand.u32 %v65, 4294901760
    %v2178 = vsub.f32 %v65, %v2177
    %v2179 = vand.u32 %v2178, 4294901760
    %v2180 = vsub.f32 %v2178, %v2179
    %v2181 = vand.u32 %v2180, 4294901760
    %2182 = vmatpush1.msra.mxu0 %v2181
    %2183 = vmatprep.subr.mxu0 0.0
    %v2184 = vand.u32 %v64, 4294901760
    %v2185 = vsub.f32 %v64, %v2184
    %v2186 = vand.u32 %v2185, 4294901760
    %v2187 = vsub.f32 %v2185, %v2186
    %v2188 = vand.u32 %v2187, 4294901760
    %2189 = vmatpush1.msra.mxu0 %v2188
    %2190 = vmatprep.subr.mxu0 0.0
    %v2191 = vand.u32 %v63, 4294901760
    %v2192 = vsub.f32 %v63, %v2191
    %v2193 = vand.u32 %v2192, 4294901760
    %v2194 = vsub.f32 %v2192, %v2193
    %v2195 = vand.u32 %v2194, 4294901760
    %2196 = vmatpush1.msra.mxu0 %v2195
    %2197 = vmatprep.subr.mxu0 0.0
    %v2198 = vand.u32 %v62, 4294901760
    %v2199 = vsub.f32 %v62, %v2198
    %v2200 = vand.u32 %v2199, 4294901760
    %v2201 = vsub.f32 %v2199, %v2200
    %v2202 = vand.u32 %v2201, 4294901760
    %2203 = vmatpush1.msra.mxu0 %v2202
    %2204 = vmatprep.subr.mxu0 0.0
    %v2205 = vand.u32 %v61, 4294901760
    %v2206 = vsub.f32 %v61, %v2205
    %v2207 = vand.u32 %v2206, 4294901760
    %v2208 = vsub.f32 %v2206, %v2207
    %v2209 = vand.u32 %v2208, 4294901760
    %2210 = vmatpush1.msra.mxu0 %v2209
    %2211 = vmatprep.subr.mxu0 0.0
    %v2212 = vand.u32 %v60, 4294901760
    %v2213 = vsub.f32 %v60, %v2212
    %v2214 = vand.u32 %v2213, 4294901760
    %v2215 = vsub.f32 %v2213, %v2214
    %v2216 = vand.u32 %v2215, 4294901760
    %2217 = vmatpush1.msra.mxu0 %v2216
    %2218 = vmatprep.subr.mxu0 0.0
    %2219 = vmatpush2.msra.mxu0 0.0
    %2220 = vmatprep.subr.mxu0 0.0
    %2221 = vmatpush2.msra.mxu0 0.0
    %2222 = vmatprep.subr.mxu0 0.0
    %2223 = vmatpush2.msra.mxu0 0.0
    %2224 = vmatprep.subr.mxu0 0.0
    %2225 = vmatpush2.msra.mxu0 0.0
    %2226 = vmatprep.subr.mxu0 0.0
    %2227 = vmatpush2.msra.mxu0 0.0
    %2228 = vmatprep.subr.mxu0 0.0
    %2229 = vmatpush2.msra.mxu0 0.0
    %2230 = vmatprep.subr.mxu0 0.0
    %2231 = vmatpush2.msra.mxu0 0.0
    %2232 = vmatprep.subr.mxu0 0.0
    %2233 = vmatpush2.msra.mxu0 0.0
    %2234 = vmatprep.subr.mxu0 0.0
    %2235 = vmatpush2.msra.mxu0 0.0
    %2236 = vmatprep.subr.mxu0 0.0
    %2237 = vmatpush2.msra.mxu0 0.0
    %2238 = vmatprep.subr.mxu0 0.0
    %2239 = vmatpush2.msra.mxu0 0.0
    %2240 = vmatprep.subr.mxu0 0.0
    %2241 = vmatpush2.msra.mxu0 0.0
    %2242 = vmatprep.subr.mxu0 0.0
    %2243 = vmatpush2.msra.mxu0 0.0
    %2244 = vmatprep.subr.mxu0 0.0
    %2245 = vmatpush2.msra.mxu0 0.0
    %2246 = vmatprep.subr.mxu0 0.0
    %2247 = vmatpush2.msra.mxu0 0.0
    %2248 = vmatprep.subr.mxu0 0.0
    %2249 = vmatpush2.msra.mxu0 0.0
    %2250 = vmatprep.mubr.f32.mxu0 0.0
    %v2251 = vand.u32 %v2010, 4294901760
    %2252 = vmatmul.mubr.f32.gmra.mxu0 %v2251
    %v2253 = vpop.f32.mrf.mxu0
    %v2254 = vadd.f32 %v2103, %v2253
    %v2255 = vpop.f32.mrf.mxu0
    %2256 = vdwg.mxu0
    %2257 = vmatprep.subr.mxu0 0.0
    %v2258 = vand.u32 %v75, 4294901760
    %v2259 = vsub.f32 %v75, %v2258
    %2260 = vmatpush1.msra.mxu0 %v2259
    %2261 = vmatprep.subr.mxu0 0.0
    %v2262 = vand.u32 %v74, 4294901760
    %v2263 = vsub.f32 %v74, %v2262
    %2264 = vmatpush1.msra.mxu0 %v2263
    %2265 = vmatprep.subr.mxu0 0.0
    %v2266 = vand.u32 %v73, 4294901760
    %v2267 = vsub.f32 %v73, %v2266
    %2268 = vmatpush1.msra.mxu0 %v2267
    %2269 = vmatprep.subr.mxu0 0.0
    %v2270 = vand.u32 %v72, 4294901760
    %v2271 = vsub.f32 %v72, %v2270
    %2272 = vmatpush1.msra.mxu0 %v2271
    %2273 = vmatprep.subr.mxu0 0.0
    %v2274 = vand.u32 %v71, 4294901760
    %v2275 = vsub.f32 %v71, %v2274
    %2276 = vmatpush1.msra.mxu0 %v2275
    %2277 = vmatprep.subr.mxu0 0.0
    %v2278 = vand.u32 %v70, 4294901760
    %v2279 = vsub.f32 %v70, %v2278
    %2280 = vmatpush1.msra.mxu0 %v2279
    %2281 = vmatprep.subr.mxu0 0.0
    %v2282 = vand.u32 %v69, 4294901760
    %v2283 = vsub.f32 %v69, %v2282
    %2284 = vmatpush1.msra.mxu0 %v2283
    %2285 = vmatprep.subr.mxu0 0.0
    %v2286 = vand.u32 %v68, 4294901760
    %v2287 = vsub.f32 %v68, %v2286
    %2288 = vmatpush1.msra.mxu0 %v2287
    %2289 = vmatprep.subr.mxu0 0.0
    %v2290 = vand.u32 %v67, 4294901760
    %v2291 = vsub.f32 %v67, %v2290
    %2292 = vmatpush1.msra.mxu0 %v2291
    %2293 = vmatprep.subr.mxu0 0.0
    %v2294 = vand.u32 %v66, 4294901760
    %v2295 = vsub.f32 %v66, %v2294
    %2296 = vmatpush1.msra.mxu0 %v2295
    %2297 = vmatprep.subr.mxu0 0.0
    %v2298 = vand.u32 %v65, 4294901760
    %v2299 = vsub.f32 %v65, %v2298
    %2300 = vmatpush1.msra.mxu0 %v2299
    %2301 = vmatprep.subr.mxu0 0.0
    %v2302 = vand.u32 %v64, 4294901760
    %v2303 = vsub.f32 %v64, %v2302
    %2304 = vmatpush1.msra.mxu0 %v2303
    %2305 = vmatprep.subr.mxu0 0.0
    %v2306 = vand.u32 %v63, 4294901760
    %v2307 = vsub.f32 %v63, %v2306
    %2308 = vmatpush1.msra.mxu0 %v2307
    %2309 = vmatprep.subr.mxu0 0.0
    %v2310 = vand.u32 %v62, 4294901760
    %v2311 = vsub.f32 %v62, %v2310
    %2312 = vmatpush1.msra.mxu0 %v2311
    %2313 = vmatprep.subr.mxu0 0.0
    %v2314 = vand.u32 %v61, 4294901760
    %v2315 = vsub.f32 %v61, %v2314
    %2316 = vmatpush1.msra.mxu0 %v2315
    %2317 = vmatprep.subr.mxu0 0.0
    %v2318 = vand.u32 %v60, 4294901760
    %v2319 = vsub.f32 %v60, %v2318
    %2320 = vmatpush1.msra.mxu0 %v2319
    %2321 = vmatprep.subr.mxu0 0.0
    %2322 = vmatpush2.msra.mxu0 0.0
    %2323 = vmatprep.subr.mxu0 0.0
    %2324 = vmatpush2.msra.mxu0 0.0
    %2325 = vmatprep.subr.mxu0 0.0
    %2326 = vmatpush2.msra.mxu0 0.0
    %2327 = vmatprep.subr.mxu0 0.0
    %2328 = vmatpush2.msra.mxu0 0.0
    %2329 = vmatprep.subr.mxu0 0.0
    %2330 = vmatpush2.msra.mxu0 0.0
    %2331 = vmatprep.subr.mxu0 0.0
    %2332 = vmatpush2.msra.mxu0 0.0
    %2333 = vmatprep.subr.mxu0 0.0
    %2334 = vmatpush2.msra.mxu0 0.0
    %2335 = vmatprep.subr.mxu0 0.0
    %2336 = vmatpush2.msra.mxu0 0.0
    %2337 = vmatprep.subr.mxu0 0.0
    %2338 = vmatpush2.msra.mxu0 0.0
    %2339 = vmatprep.subr.mxu0 0.0
    %2340 = vmatpush2.msra.mxu0 0.0
    %2341 = vmatprep.subr.mxu0 0.0
    %2342 = vmatpush2.msra.mxu0 0.0
    %2343 = vmatprep.subr.mxu0 0.0
    %2344 = vmatpush2.msra.mxu0 0.0
    %2345 = vmatprep.subr.mxu0 0.0
    %2346 = vmatpush2.msra.mxu0 0.0
    %2347 = vmatprep.subr.mxu0 0.0
    %2348 = vmatpush2.msra.mxu0 0.0
    %2349 = vmatprep.subr.mxu0 0.0
    %2350 = vmatpush2.msra.mxu0 0.0
    %2351 = vmatprep.subr.mxu0 0.0
    %2352 = vmatpush2.msra.mxu0 0.0
    %2353 = vmatprep.mubr.f32.mxu0 0.0
    %v2354 = vand.u32 %v2010, 4294901760
    %v2355 = vsub.f32 %v2010, %v2354
    %2356 = vmatmul.mubr.f32.gmra.mxu0 %v2355
    %v2357 = vpop.f32.mrf.mxu0
    %v2358 = vadd.f32 %v2254, %v2357
    %v2359 = vpop.f32.mrf.mxu0
    %2360 = vdwg.mxu0
    %2361 = vmatprep.subr.mxu0 0.0
    %v2362 = vand.u32 %v75, 4294901760
    %2363 = vmatpush1.msra.mxu0 %v2362
    %2364 = vmatprep.subr.mxu0 0.0
    %v2365 = vand.u32 %v74, 4294901760
    %2366 = vmatpush1.msra.mxu0 %v2365
    %2367 = vmatprep.subr.mxu0 0.0
    %v2368 = vand.u32 %v73, 4294901760
    %2369 = vmatpush1.msra.mxu0 %v2368
    %2370 = vmatprep.subr.mxu0 0.0
    %v2371 = vand.u32 %v72, 4294901760
    %2372 = vmatpush1.msra.mxu0 %v2371
    %2373 = vmatprep.subr.mxu0 0.0
    %v2374 = vand.u32 %v71, 4294901760
    %2375 = vmatpush1.msra.mxu0 %v2374
    %2376 = vmatprep.subr.mxu0 0.0
    %v2377 = vand.u32 %v70, 4294901760
    %2378 = vmatpush1.msra.mxu0 %v2377
    %2379 = vmatprep.subr.mxu0 0.0
    %v2380 = vand.u32 %v69, 4294901760
    %2381 = vmatpush1.msra.mxu0 %v2380
    %2382 = vmatprep.subr.mxu0 0.0
    %v2383 = vand.u32 %v68, 4294901760
    %2384 = vmatpush1.msra.mxu0 %v2383
    %2385 = vmatprep.subr.mxu0 0.0
    %v2386 = vand.u32 %v67, 4294901760
    %2387 = vmatpush1.msra.mxu0 %v2386
    %2388 = vmatprep.subr.mxu0 0.0
    %v2389 = vand.u32 %v66, 4294901760
    %2390 = vmatpush1.msra.mxu0 %v2389
    %2391 = vmatprep.subr.mxu0 0.0
    %v2392 = vand.u32 %v65, 4294901760
    %2393 = vmatpush1.msra.mxu0 %v2392
    %2394 = vmatprep.subr.mxu0 0.0
    %v2395 = vand.u32 %v64, 4294901760
    %2396 = vmatpush1.msra.mxu0 %v2395
    %2397 = vmatprep.subr.mxu0 0.0
    %v2398 = vand.u32 %v63, 4294901760
    %2399 = vmatpush1.msra.mxu0 %v2398
    %2400 = vmatprep.subr.mxu0 0.0
    %v2401 = vand.u32 %v62, 4294901760
    %2402 = vmatpush1.msra.mxu0 %v2401
    %2403 = vmatprep.subr.mxu0 0.0
    %v2404 = vand.u32 %v61, 4294901760
    %2405 = vmatpush1.msra.mxu0 %v2404
    %2406 = vmatprep.subr.mxu0 0.0
    %v2407 = vand.u32 %v60, 4294901760
    %2408 = vmatpush1.msra.mxu0 %v2407
    %2409 = vmatprep.subr.mxu0 0.0
    %2410 = vmatpush2.msra.mxu0 0.0
    %2411 = vmatprep.subr.mxu0 0.0
    %2412 = vmatpush2.msra.mxu0 0.0
    %2413 = vmatprep.subr.mxu0 0.0
    %2414 = vmatpush2.msra.mxu0 0.0
    %2415 = vmatprep.subr.mxu0 0.0
    %2416 = vmatpush2.msra.mxu0 0.0
    %2417 = vmatprep.subr.mxu0 0.0
    %2418 = vmatpush2.msra.mxu0 0.0
    %2419 = vmatprep.subr.mxu0 0.0
    %2420 = vmatpush2.msra.mxu0 0.0
    %2421 = vmatprep.subr.mxu0 0.0
    %2422 = vmatpush2.msra.mxu0 0.0
    %2423 = vmatprep.subr.mxu0 0.0
    %2424 = vmatpush2.msra.mxu0 0.0
    %2425 = vmatprep.subr.mxu0 0.0
    %2426 = vmatpush2.msra.mxu0 0.0
    %2427 = vmatprep.subr.mxu0 0.0
    %2428 = vmatpush2.msra.mxu0 0.0
    %2429 = vmatprep.subr.mxu0 0.0
    %2430 = vmatpush2.msra.mxu0 0.0
    %2431 = vmatprep.subr.mxu0 0.0
    %2432 = vmatpush2.msra.mxu0 0.0
    %2433 = vmatprep.subr.mxu0 0.0
    %2434 = vmatpush2.msra.mxu0 0.0
    %2435 = vmatprep.subr.mxu0 0.0
    %2436 = vmatpush2.msra.mxu0 0.0
    %2437 = vmatprep.subr.mxu0 0.0
    %2438 = vmatpush2.msra.mxu0 0.0
    %2439 = vmatprep.subr.mxu0 0.0
    %2440 = vmatpush2.msra.mxu0 0.0
    %2441 = vmatprep.mubr.f32.mxu0 0.0
    %v2442 = vand.u32 %v2010, 4294901760
    %v2443 = vsub.f32 %v2010, %v2442
    %v2444 = vand.u32 %v2443, 4294901760
    %2445 = vmatmul.mubr.f32.gmra.mxu0 %v2444
    %v2446 = vpop.f32.mrf.mxu0
    %v2447 = vadd.f32 %v2358, %v2446
    %v2448 = vpop.f32.mrf.mxu0
    %2449 = vdwg.mxu0
    %2450 = vmatprep.subr.mxu0 0.0
    %v2451 = vand.u32 %v75, 4294901760
    %v2452 = vsub.f32 %v75, %v2451
    %v2453 = vand.u32 %v2452, 4294901760
    %2454 = vmatpush1.msra.mxu0 %v2453
    %2455 = vmatprep.subr.mxu0 0.0
    %v2456 = vand.u32 %v74, 4294901760
    %v2457 = vsub.f32 %v74, %v2456
    %v2458 = vand.u32 %v2457, 4294901760
    %2459 = vmatpush1.msra.mxu0 %v2458
    %2460 = vmatprep.subr.mxu0 0.0
    %v2461 = vand.u32 %v73, 4294901760
    %v2462 = vsub.f32 %v73, %v2461
    %v2463 = vand.u32 %v2462, 4294901760
    %2464 = vmatpush1.msra.mxu0 %v2463
    %2465 = vmatprep.subr.mxu0 0.0
    %v2466 = vand.u32 %v72, 4294901760
    %v2467 = vsub.f32 %v72, %v2466
    %v2468 = vand.u32 %v2467, 4294901760
    %2469 = vmatpush1.msra.mxu0 %v2468
    %2470 = vmatprep.subr.mxu0 0.0
    %v2471 = vand.u32 %v71, 4294901760
    %v2472 = vsub.f32 %v71, %v2471
    %v2473 = vand.u32 %v2472, 4294901760
    %2474 = vmatpush1.msra.mxu0 %v2473
    %2475 = vmatprep.subr.mxu0 0.0
    %v2476 = vand.u32 %v70, 4294901760
    %v2477 = vsub.f32 %v70, %v2476
    %v2478 = vand.u32 %v2477, 4294901760
    %2479 = vmatpush1.msra.mxu0 %v2478
    %2480 = vmatprep.subr.mxu0 0.0
    %v2481 = vand.u32 %v69, 4294901760
    %v2482 = vsub.f32 %v69, %v2481
    %v2483 = vand.u32 %v2482, 4294901760
    %2484 = vmatpush1.msra.mxu0 %v2483
    %2485 = vmatprep.subr.mxu0 0.0
    %v2486 = vand.u32 %v68, 4294901760
    %v2487 = vsub.f32 %v68, %v2486
    %v2488 = vand.u32 %v2487, 4294901760
    %2489 = vmatpush1.msra.mxu0 %v2488
    %2490 = vmatprep.subr.mxu0 0.0
    %v2491 = vand.u32 %v67, 4294901760
    %v2492 = vsub.f32 %v67, %v2491
    %v2493 = vand.u32 %v2492, 4294901760
    %2494 = vmatpush1.msra.mxu0 %v2493
    %2495 = vmatprep.subr.mxu0 0.0
    %v2496 = vand.u32 %v66, 4294901760
    %v2497 = vsub.f32 %v66, %v2496
    %v2498 = vand.u32 %v2497, 4294901760
    %2499 = vmatpush1.msra.mxu0 %v2498
    %2500 = vmatprep.subr.mxu0 0.0
    %v2501 = vand.u32 %v65, 4294901760
    %v2502 = vsub.f32 %v65, %v2501
    %v2503 = vand.u32 %v2502, 4294901760
    %2504 = vmatpush1.msra.mxu0 %v2503
    %2505 = vmatprep.subr.mxu0 0.0
    %v2506 = vand.u32 %v64, 4294901760
    %v2507 = vsub.f32 %v64, %v2506
    %v2508 = vand.u32 %v2507, 4294901760
    %2509 = vmatpush1.msra.mxu0 %v2508
    %2510 = vmatprep.subr.mxu0 0.0
    %v2511 = vand.u32 %v63, 4294901760
    %v2512 = vsub.f32 %v63, %v2511
    %v2513 = vand.u32 %v2512, 4294901760
    %2514 = vmatpush1.msra.mxu0 %v2513
    %2515 = vmatprep.subr.mxu0 0.0
    %v2516 = vand.u32 %v62, 4294901760
    %v2517 = vsub.f32 %v62, %v2516
    %v2518 = vand.u32 %v2517, 4294901760
    %2519 = vmatpush1.msra.mxu0 %v2518
    %2520 = vmatprep.subr.mxu0 0.0
    %v2521 = vand.u32 %v61, 4294901760
    %v2522 = vsub.f32 %v61, %v2521
    %v2523 = vand.u32 %v2522, 4294901760
    %2524 = vmatpush1.msra.mxu0 %v2523
    %2525 = vmatprep.subr.mxu0 0.0
    %v2526 = vand.u32 %v60, 4294901760
    %v2527 = vsub.f32 %v60, %v2526
    %v2528 = vand.u32 %v2527, 4294901760
    %2529 = vmatpush1.msra.mxu0 %v2528
    %2530 = vmatprep.subr.mxu0 0.0
    %2531 = vmatpush2.msra.mxu0 0.0
    %2532 = vmatprep.subr.mxu0 0.0
    %2533 = vmatpush2.msra.mxu0 0.0
    %2534 = vmatprep.subr.mxu0 0.0
    %2535 = vmatpush2.msra.mxu0 0.0
    %2536 = vmatprep.subr.mxu0 0.0
    %2537 = vmatpush2.msra.mxu0 0.0
    %2538 = vmatprep.subr.mxu0 0.0
    %2539 = vmatpush2.msra.mxu0 0.0
    %2540 = vmatprep.subr.mxu0 0.0
    %2541 = vmatpush2.msra.mxu0 0.0
    %2542 = vmatprep.subr.mxu0 0.0
    %2543 = vmatpush2.msra.mxu0 0.0
    %2544 = vmatprep.subr.mxu0 0.0
    %2545 = vmatpush2.msra.mxu0 0.0
    %2546 = vmatprep.subr.mxu0 0.0
    %2547 = vmatpush2.msra.mxu0 0.0
    %2548 = vmatprep.subr.mxu0 0.0
    %2549 = vmatpush2.msra.mxu0 0.0
    %2550 = vmatprep.subr.mxu0 0.0
    %2551 = vmatpush2.msra.mxu0 0.0
    %2552 = vmatprep.subr.mxu0 0.0
    %2553 = vmatpush2.msra.mxu0 0.0
    %2554 = vmatprep.subr.mxu0 0.0
    %2555 = vmatpush2.msra.mxu0 0.0
    %2556 = vmatprep.subr.mxu0 0.0
    %2557 = vmatpush2.msra.mxu0 0.0
    %2558 = vmatprep.subr.mxu0 0.0
    %2559 = vmatpush2.msra.mxu0 0.0
    %2560 = vmatprep.subr.mxu0 0.0
    %2561 = vmatpush2.msra.mxu0 0.0
    %2562 = vmatprep.mubr.f32.mxu0 0.0
    %v2563 = vand.u32 %v2010, 4294901760
    %2564 = vmatmul.mubr.f32.gmra.mxu0 %v2563
    %v2565 = vpop.f32.mrf.mxu0
    %v2566 = vadd.f32 %v2447, %v2565
    %v2567 = vpop.f32.mrf.mxu0
    %2568 = vdwg.mxu0
    %2569 = vmatprep.subr.mxu0 0.0
    %v2570 = vand.u32 %v75, 4294901760
    %2571 = vmatpush1.msra.mxu0 %v2570
    %2572 = vmatprep.subr.mxu0 0.0
    %v2573 = vand.u32 %v74, 4294901760
    %2574 = vmatpush1.msra.mxu0 %v2573
    %2575 = vmatprep.subr.mxu0 0.0
    %v2576 = vand.u32 %v73, 4294901760
    %2577 = vmatpush1.msra.mxu0 %v2576
    %2578 = vmatprep.subr.mxu0 0.0
    %v2579 = vand.u32 %v72, 4294901760
    %2580 = vmatpush1.msra.mxu0 %v2579
    %2581 = vmatprep.subr.mxu0 0.0
    %v2582 = vand.u32 %v71, 4294901760
    %2583 = vmatpush1.msra.mxu0 %v2582
    %2584 = vmatprep.subr.mxu0 0.0
    %v2585 = vand.u32 %v70, 4294901760
    %2586 = vmatpush1.msra.mxu0 %v2585
    %2587 = vmatprep.subr.mxu0 0.0
    %v2588 = vand.u32 %v69, 4294901760
    %2589 = vmatpush1.msra.mxu0 %v2588
    %2590 = vmatprep.subr.mxu0 0.0
    %v2591 = vand.u32 %v68, 4294901760
    %2592 = vmatpush1.msra.mxu0 %v2591
    %2593 = vmatprep.subr.mxu0 0.0
    %v2594 = vand.u32 %v67, 4294901760
    %2595 = vmatpush1.msra.mxu0 %v2594
    %2596 = vmatprep.subr.mxu0 0.0
    %v2597 = vand.u32 %v66, 4294901760
    %2598 = vmatpush1.msra.mxu0 %v2597
    %2599 = vmatprep.subr.mxu0 0.0
    %v2600 = vand.u32 %v65, 4294901760
    %2601 = vmatpush1.msra.mxu0 %v2600
    %2602 = vmatprep.subr.mxu0 0.0
    %v2603 = vand.u32 %v64, 4294901760
    %2604 = vmatpush1.msra.mxu0 %v2603
    %2605 = vmatprep.subr.mxu0 0.0
    %v2606 = vand.u32 %v63, 4294901760
    %2607 = vmatpush1.msra.mxu0 %v2606
    %2608 = vmatprep.subr.mxu0 0.0
    %v2609 = vand.u32 %v62, 4294901760
    %2610 = vmatpush1.msra.mxu0 %v2609
    %2611 = vmatprep.subr.mxu0 0.0
    %v2612 = vand.u32 %v61, 4294901760
    %2613 = vmatpush1.msra.mxu0 %v2612
    %2614 = vmatprep.subr.mxu0 0.0
    %v2615 = vand.u32 %v60, 4294901760
    %2616 = vmatpush1.msra.mxu0 %v2615
    %2617 = vmatprep.subr.mxu0 0.0
    %2618 = vmatpush2.msra.mxu0 0.0
    %2619 = vmatprep.subr.mxu0 0.0
    %2620 = vmatpush2.msra.mxu0 0.0
    %2621 = vmatprep.subr.mxu0 0.0
    %2622 = vmatpush2.msra.mxu0 0.0
    %2623 = vmatprep.subr.mxu0 0.0
    %2624 = vmatpush2.msra.mxu0 0.0
    %2625 = vmatprep.subr.mxu0 0.0
    %2626 = vmatpush2.msra.mxu0 0.0
    %2627 = vmatprep.subr.mxu0 0.0
    %2628 = vmatpush2.msra.mxu0 0.0
    %2629 = vmatprep.subr.mxu0 0.0
    %2630 = vmatpush2.msra.mxu0 0.0
    %2631 = vmatprep.subr.mxu0 0.0
    %2632 = vmatpush2.msra.mxu0 0.0
    %2633 = vmatprep.subr.mxu0 0.0
    %2634 = vmatpush2.msra.mxu0 0.0
    %2635 = vmatprep.subr.mxu0 0.0
    %2636 = vmatpush2.msra.mxu0 0.0
    %2637 = vmatprep.subr.mxu0 0.0
    %2638 = vmatpush2.msra.mxu0 0.0
    %2639 = vmatprep.subr.mxu0 0.0
    %2640 = vmatpush2.msra.mxu0 0.0
    %2641 = vmatprep.subr.mxu0 0.0
    %2642 = vmatpush2.msra.mxu0 0.0
    %2643 = vmatprep.subr.mxu0 0.0
    %2644 = vmatpush2.msra.mxu0 0.0
    %2645 = vmatprep.subr.mxu0 0.0
    %2646 = vmatpush2.msra.mxu0 0.0
    %2647 = vmatprep.subr.mxu0 0.0
    %2648 = vmatpush2.msra.mxu0 0.0
    %2649 = vmatprep.mubr.f32.mxu0 0.0
    %v2650 = vand.u32 %v2010, 4294901760
    %2651 = vmatmul.mubr.f32.gmra.mxu0 %v2650
    %v2652 = vpop.f32.mrf.mxu0
    %v2653 = vadd.f32 %v2566, %v2652
    %v2654 = vpop.f32.mrf.mxu0
    %2655 = vdwg.mxu0
    %v2656 = vadd.f32 %v2014, %v2653
    %s2657 = scalar_lea.vmem [#allocation9], 24
    %2658 = vst [vmem:[%s2657] sm:$0xff] %v2656
    %s2659 = scalar_lea.vmem [#allocation3], 32
    %v2660 = vld [vmem:[%s2659] sm:$0xff]
    %2661 = vmatprep.subr.mxu0 0.0
    %v2662 = vand.u32 %v75, 4294901760
    %2663 = vmatpush1.msra.mxu0 %v2662
    %2664 = vmatprep.subr.mxu0 0.0
    %v2665 = vand.u32 %v74, 4294901760
    %2666 = vmatpush1.msra.mxu0 %v2665
    %2667 = vmatprep.subr.mxu0 0.0
    %v2668 = vand.u32 %v73, 4294901760
    %2669 = vmatpush1.msra.mxu0 %v2668
    %2670 = vmatprep.subr.mxu0 0.0
    %v2671 = vand.u32 %v72, 4294901760
    %2672 = vmatpush1.msra.mxu0 %v2671
    %2673 = vmatprep.subr.mxu0 0.0
    %v2674 = vand.u32 %v71, 4294901760
    %2675 = vmatpush1.msra.mxu0 %v2674
    %2676 = vmatprep.subr.mxu0 0.0
    %v2677 = vand.u32 %v70, 4294901760
    %2678 = vmatpush1.msra.mxu0 %v2677
    %2679 = vmatprep.subr.mxu0 0.0
    %v2680 = vand.u32 %v69, 4294901760
    %2681 = vmatpush1.msra.mxu0 %v2680
    %2682 = vmatprep.subr.mxu0 0.0
    %v2683 = vand.u32 %v68, 4294901760
    %2684 = vmatpush1.msra.mxu0 %v2683
    %2685 = vmatprep.subr.mxu0 0.0
    %v2686 = vand.u32 %v67, 4294901760
    %2687 = vmatpush1.msra.mxu0 %v2686
    %2688 = vmatprep.subr.mxu0 0.0
    %v2689 = vand.u32 %v66, 4294901760
    %2690 = vmatpush1.msra.mxu0 %v2689
    %2691 = vmatprep.subr.mxu0 0.0
    %v2692 = vand.u32 %v65, 4294901760
    %2693 = vmatpush1.msra.mxu0 %v2692
    %2694 = vmatprep.subr.mxu0 0.0
    %v2695 = vand.u32 %v64, 4294901760
    %2696 = vmatpush1.msra.mxu0 %v2695
    %2697 = vmatprep.subr.mxu0 0.0
    %v2698 = vand.u32 %v63, 4294901760
    %2699 = vmatpush1.msra.mxu0 %v2698
    %2700 = vmatprep.subr.mxu0 0.0
    %v2701 = vand.u32 %v62, 4294901760
    %2702 = vmatpush1.msra.mxu0 %v2701
    %2703 = vmatprep.subr.mxu0 0.0
    %v2704 = vand.u32 %v61, 4294901760
    %2705 = vmatpush1.msra.mxu0 %v2704
    %2706 = vmatprep.subr.mxu0 0.0
    %v2707 = vand.u32 %v60, 4294901760
    %2708 = vmatpush1.msra.mxu0 %v2707
    %2709 = vmatprep.subr.mxu0 0.0
    %2710 = vmatpush2.msra.mxu0 0.0
    %2711 = vmatprep.subr.mxu0 0.0
    %2712 = vmatpush2.msra.mxu0 0.0
    %2713 = vmatprep.subr.mxu0 0.0
    %2714 = vmatpush2.msra.mxu0 0.0
    %2715 = vmatprep.subr.mxu0 0.0
    %2716 = vmatpush2.msra.mxu0 0.0
    %2717 = vmatprep.subr.mxu0 0.0
    %2718 = vmatpush2.msra.mxu0 0.0
    %2719 = vmatprep.subr.mxu0 0.0
    %2720 = vmatpush2.msra.mxu0 0.0
    %2721 = vmatprep.subr.mxu0 0.0
    %2722 = vmatpush2.msra.mxu0 0.0
    %2723 = vmatprep.subr.mxu0 0.0
    %2724 = vmatpush2.msra.mxu0 0.0
    %2725 = vmatprep.subr.mxu0 0.0
    %2726 = vmatpush2.msra.mxu0 0.0
    %2727 = vmatprep.subr.mxu0 0.0
    %2728 = vmatpush2.msra.mxu0 0.0
    %2729 = vmatprep.subr.mxu0 0.0
    %2730 = vmatpush2.msra.mxu0 0.0
    %2731 = vmatprep.subr.mxu0 0.0
    %2732 = vmatpush2.msra.mxu0 0.0
    %2733 = vmatprep.subr.mxu0 0.0
    %2734 = vmatpush2.msra.mxu0 0.0
    %2735 = vmatprep.subr.mxu0 0.0
    %2736 = vmatpush2.msra.mxu0 0.0
    %2737 = vmatprep.subr.mxu0 0.0
    %2738 = vmatpush2.msra.mxu0 0.0
    %2739 = vmatprep.subr.mxu0 0.0
    %2740 = vmatpush2.msra.mxu0 0.0
    %2741 = vmatprep.mubr.f32.mxu0 0.0
    %v2742 = vand.u32 %v2656, 4294901760
    %v2743 = vsub.f32 %v2656, %v2742
    %v2744 = vand.u32 %v2743, 4294901760
    %v2745 = vsub.f32 %v2743, %v2744
    %v2746 = vand.u32 %v2745, 4294901760
    %2747 = vmatmul.mubr.f32.gmra.mxu0 %v2746
    %v2748 = vpop.f32.mrf.mxu0
    %v2749 = vadd.f32 0.0, %v2748
    %v2750 = vpop.f32.mrf.mxu0
    %2751 = vdwg.mxu0
    %2752 = vmatprep.subr.mxu0 0.0
    %v2753 = vand.u32 %v75, 4294901760
    %v2754 = vsub.f32 %v75, %v2753
    %v2755 = vand.u32 %v2754, 4294901760
    %v2756 = vsub.f32 %v2754, %v2755
    %v2757 = vand.u32 %v2756, 4294901760
    %2758 = vmatpush1.msra.mxu0 %v2757
    %2759 = vmatprep.subr.mxu0 0.0
    %v2760 = vand.u32 %v74, 4294901760
    %v2761 = vsub.f32 %v74, %v2760
    %v2762 = vand.u32 %v2761, 4294901760
    %v2763 = vsub.f32 %v2761, %v2762
    %v2764 = vand.u32 %v2763, 4294901760
    %2765 = vmatpush1.msra.mxu0 %v2764
    %2766 = vmatprep.subr.mxu0 0.0
    %v2767 = vand.u32 %v73, 4294901760
    %v2768 = vsub.f32 %v73, %v2767
    %v2769 = vand.u32 %v2768, 4294901760
    %v2770 = vsub.f32 %v2768, %v2769
    %v2771 = vand.u32 %v2770, 4294901760
    %2772 = vmatpush1.msra.mxu0 %v2771
    %2773 = vmatprep.subr.mxu0 0.0
    %v2774 = vand.u32 %v72, 4294901760
    %v2775 = vsub.f32 %v72, %v2774
    %v2776 = vand.u32 %v2775, 4294901760
    %v2777 = vsub.f32 %v2775, %v2776
    %v2778 = vand.u32 %v2777, 4294901760
    %2779 = vmatpush1.msra.mxu0 %v2778
    %2780 = vmatprep.subr.mxu0 0.0
    %v2781 = vand.u32 %v71, 4294901760
    %v2782 = vsub.f32 %v71, %v2781
    %v2783 = vand.u32 %v2782, 4294901760
    %v2784 = vsub.f32 %v2782, %v2783
    %v2785 = vand.u32 %v2784, 4294901760
    %2786 = vmatpush1.msra.mxu0 %v2785
    %2787 = vmatprep.subr.mxu0 0.0
    %v2788 = vand.u32 %v70, 4294901760
    %v2789 = vsub.f32 %v70, %v2788
    %v2790 = vand.u32 %v2789, 4294901760
    %v2791 = vsub.f32 %v2789, %v2790
    %v2792 = vand.u32 %v2791, 4294901760
    %2793 = vmatpush1.msra.mxu0 %v2792
    %2794 = vmatprep.subr.mxu0 0.0
    %v2795 = vand.u32 %v69, 4294901760
    %v2796 = vsub.f32 %v69, %v2795
    %v2797 = vand.u32 %v2796, 4294901760
    %v2798 = vsub.f32 %v2796, %v2797
    %v2799 = vand.u32 %v2798, 4294901760
    %2800 = vmatpush1.msra.mxu0 %v2799
    %2801 = vmatprep.subr.mxu0 0.0
    %v2802 = vand.u32 %v68, 4294901760
    %v2803 = vsub.f32 %v68, %v2802
    %v2804 = vand.u32 %v2803, 4294901760
    %v2805 = vsub.f32 %v2803, %v2804
    %v2806 = vand.u32 %v2805, 4294901760
    %2807 = vmatpush1.msra.mxu0 %v2806
    %2808 = vmatprep.subr.mxu0 0.0
    %v2809 = vand.u32 %v67, 4294901760
    %v2810 = vsub.f32 %v67, %v2809
    %v2811 = vand.u32 %v2810, 4294901760
    %v2812 = vsub.f32 %v2810, %v2811
    %v2813 = vand.u32 %v2812, 4294901760
    %2814 = vmatpush1.msra.mxu0 %v2813
    %2815 = vmatprep.subr.mxu0 0.0
    %v2816 = vand.u32 %v66, 4294901760
    %v2817 = vsub.f32 %v66, %v2816
    %v2818 = vand.u32 %v2817, 4294901760
    %v2819 = vsub.f32 %v2817, %v2818
    %v2820 = vand.u32 %v2819, 4294901760
    %2821 = vmatpush1.msra.mxu0 %v2820
    %2822 = vmatprep.subr.mxu0 0.0
    %v2823 = vand.u32 %v65, 4294901760
    %v2824 = vsub.f32 %v65, %v2823
    %v2825 = vand.u32 %v2824, 4294901760
    %v2826 = vsub.f32 %v2824, %v2825
    %v2827 = vand.u32 %v2826, 4294901760
    %2828 = vmatpush1.msra.mxu0 %v2827
    %2829 = vmatprep.subr.mxu0 0.0
    %v2830 = vand.u32 %v64, 4294901760
    %v2831 = vsub.f32 %v64, %v2830
    %v2832 = vand.u32 %v2831, 4294901760
    %v2833 = vsub.f32 %v2831, %v2832
    %v2834 = vand.u32 %v2833, 4294901760
    %2835 = vmatpush1.msra.mxu0 %v2834
    %2836 = vmatprep.subr.mxu0 0.0
    %v2837 = vand.u32 %v63, 4294901760
    %v2838 = vsub.f32 %v63, %v2837
    %v2839 = vand.u32 %v2838, 4294901760
    %v2840 = vsub.f32 %v2838, %v2839
    %v2841 = vand.u32 %v2840, 4294901760
    %2842 = vmatpush1.msra.mxu0 %v2841
    %2843 = vmatprep.subr.mxu0 0.0
    %v2844 = vand.u32 %v62, 4294901760
    %v2845 = vsub.f32 %v62, %v2844
    %v2846 = vand.u32 %v2845, 4294901760
    %v2847 = vsub.f32 %v2845, %v2846
    %v2848 = vand.u32 %v2847, 4294901760
    %2849 = vmatpush1.msra.mxu0 %v2848
    %2850 = vmatprep.subr.mxu0 0.0
    %v2851 = vand.u32 %v61, 4294901760
    %v2852 = vsub.f32 %v61, %v2851
    %v2853 = vand.u32 %v2852, 4294901760
    %v2854 = vsub.f32 %v2852, %v2853
    %v2855 = vand.u32 %v2854, 4294901760
    %2856 = vmatpush1.msra.mxu0 %v2855
    %2857 = vmatprep.subr.mxu0 0.0
    %v2858 = vand.u32 %v60, 4294901760
    %v2859 = vsub.f32 %v60, %v2858
    %v2860 = vand.u32 %v2859, 4294901760
    %v2861 = vsub.f32 %v2859, %v2860
    %v2862 = vand.u32 %v2861, 4294901760
    %2863 = vmatpush1.msra.mxu0 %v2862
    %2864 = vmatprep.subr.mxu0 0.0
    %2865 = vmatpush2.msra.mxu0 0.0
    %2866 = vmatprep.subr.mxu0 0.0
    %2867 = vmatpush2.msra.mxu0 0.0
    %2868 = vmatprep.subr.mxu0 0.0
    %2869 = vmatpush2.msra.mxu0 0.0
    %2870 = vmatprep.subr.mxu0 0.0
    %2871 = vmatpush2.msra.mxu0 0.0
    %2872 = vmatprep.subr.mxu0 0.0
    %2873 = vmatpush2.msra.mxu0 0.0
    %2874 = vmatprep.subr.mxu0 0.0
    %2875 = vmatpush2.msra.mxu0 0.0
    %2876 = vmatprep.subr.mxu0 0.0
    %2877 = vmatpush2.msra.mxu0 0.0
    %2878 = vmatprep.subr.mxu0 0.0
    %2879 = vmatpush2.msra.mxu0 0.0
    %2880 = vmatprep.subr.mxu0 0.0
    %2881 = vmatpush2.msra.mxu0 0.0
    %2882 = vmatprep.subr.mxu0 0.0
    %2883 = vmatpush2.msra.mxu0 0.0
    %2884 = vmatprep.subr.mxu0 0.0
    %2885 = vmatpush2.msra.mxu0 0.0
    %2886 = vmatprep.subr.mxu0 0.0
    %2887 = vmatpush2.msra.mxu0 0.0
    %2888 = vmatprep.subr.mxu0 0.0
    %2889 = vmatpush2.msra.mxu0 0.0
    %2890 = vmatprep.subr.mxu0 0.0
    %2891 = vmatpush2.msra.mxu0 0.0
    %2892 = vmatprep.subr.mxu0 0.0
    %2893 = vmatpush2.msra.mxu0 0.0
    %2894 = vmatprep.subr.mxu0 0.0
    %2895 = vmatpush2.msra.mxu0 0.0
    %2896 = vmatprep.mubr.f32.mxu0 0.0
    %v2897 = vand.u32 %v2656, 4294901760
    %2898 = vmatmul.mubr.f32.gmra.mxu0 %v2897
    %v2899 = vpop.f32.mrf.mxu0
    %v2900 = vadd.f32 %v2749, %v2899
    %v2901 = vpop.f32.mrf.mxu0
    %2902 = vdwg.mxu0
    %2903 = vmatprep.subr.mxu0 0.0
    %v2904 = vand.u32 %v75, 4294901760
    %v2905 = vsub.f32 %v75, %v2904
    %2906 = vmatpush1.msra.mxu0 %v2905
    %2907 = vmatprep.subr.mxu0 0.0
    %v2908 = vand.u32 %v74, 4294901760
    %v2909 = vsub.f32 %v74, %v2908
    %2910 = vmatpush1.msra.mxu0 %v2909
    %2911 = vmatprep.subr.mxu0 0.0
    %v2912 = vand.u32 %v73, 4294901760
    %v2913 = vsub.f32 %v73, %v2912
    %2914 = vmatpush1.msra.mxu0 %v2913
    %2915 = vmatprep.subr.mxu0 0.0
    %v2916 = vand.u32 %v72, 4294901760
    %v2917 = vsub.f32 %v72, %v2916
    %2918 = vmatpush1.msra.mxu0 %v2917
    %2919 = vmatprep.subr.mxu0 0.0
    %v2920 = vand.u32 %v71, 4294901760
    %v2921 = vsub.f32 %v71, %v2920
    %2922 = vmatpush1.msra.mxu0 %v2921
    %2923 = vmatprep.subr.mxu0 0.0
    %v2924 = vand.u32 %v70, 4294901760
    %v2925 = vsub.f32 %v70, %v2924
    %2926 = vmatpush1.msra.mxu0 %v2925
    %2927 = vmatprep.subr.mxu0 0.0
    %v2928 = vand.u32 %v69, 4294901760
    %v2929 = vsub.f32 %v69, %v2928
    %2930 = vmatpush1.msra.mxu0 %v2929
    %2931 = vmatprep.subr.mxu0 0.0
    %v2932 = vand.u32 %v68, 4294901760
    %v2933 = vsub.f32 %v68, %v2932
    %2934 = vmatpush1.msra.mxu0 %v2933
    %2935 = vmatprep.subr.mxu0 0.0
    %v2936 = vand.u32 %v67, 4294901760
    %v2937 = vsub.f32 %v67, %v2936
    %2938 = vmatpush1.msra.mxu0 %v2937
    %2939 = vmatprep.subr.mxu0 0.0
    %v2940 = vand.u32 %v66, 4294901760
    %v2941 = vsub.f32 %v66, %v2940
    %2942 = vmatpush1.msra.mxu0 %v2941
    %2943 = vmatprep.subr.mxu0 0.0
    %v2944 = vand.u32 %v65, 4294901760
    %v2945 = vsub.f32 %v65, %v2944
    %2946 = vmatpush1.msra.mxu0 %v2945
    %2947 = vmatprep.subr.mxu0 0.0
    %v2948 = vand.u32 %v64, 4294901760
    %v2949 = vsub.f32 %v64, %v2948
    %2950 = vmatpush1.msra.mxu0 %v2949
    %2951 = vmatprep.subr.mxu0 0.0
    %v2952 = vand.u32 %v63, 4294901760
    %v2953 = vsub.f32 %v63, %v2952
    %2954 = vmatpush1.msra.mxu0 %v2953
    %2955 = vmatprep.subr.mxu0 0.0
    %v2956 = vand.u32 %v62, 4294901760
    %v2957 = vsub.f32 %v62, %v2956
    %2958 = vmatpush1.msra.mxu0 %v2957
    %2959 = vmatprep.subr.mxu0 0.0
    %v2960 = vand.u32 %v61, 4294901760
    %v2961 = vsub.f32 %v61, %v2960
    %2962 = vmatpush1.msra.mxu0 %v2961
    %2963 = vmatprep.subr.mxu0 0.0
    %v2964 = vand.u32 %v60, 4294901760
    %v2965 = vsub.f32 %v60, %v2964
    %2966 = vmatpush1.msra.mxu0 %v2965
    %2967 = vmatprep.subr.mxu0 0.0
    %2968 = vmatpush2.msra.mxu0 0.0
    %2969 = vmatprep.subr.mxu0 0.0
    %2970 = vmatpush2.msra.mxu0 0.0
    %2971 = vmatprep.subr.mxu0 0.0
    %2972 = vmatpush2.msra.mxu0 0.0
    %2973 = vmatprep.subr.mxu0 0.0
    %2974 = vmatpush2.msra.mxu0 0.0
    %2975 = vmatprep.subr.mxu0 0.0
    %2976 = vmatpush2.msra.mxu0 0.0
    %2977 = vmatprep.subr.mxu0 0.0
    %2978 = vmatpush2.msra.mxu0 0.0
    %2979 = vmatprep.subr.mxu0 0.0
    %2980 = vmatpush2.msra.mxu0 0.0
    %2981 = vmatprep.subr.mxu0 0.0
    %2982 = vmatpush2.msra.mxu0 0.0
    %2983 = vmatprep.subr.mxu0 0.0
    %2984 = vmatpush2.msra.mxu0 0.0
    %2985 = vmatprep.subr.mxu0 0.0
    %2986 = vmatpush2.msra.mxu0 0.0
    %2987 = vmatprep.subr.mxu0 0.0
    %2988 = vmatpush2.msra.mxu0 0.0
    %2989 = vmatprep.subr.mxu0 0.0
    %2990 = vmatpush2.msra.mxu0 0.0
    %2991 = vmatprep.subr.mxu0 0.0
    %2992 = vmatpush2.msra.mxu0 0.0
    %2993 = vmatprep.subr.mxu0 0.0
    %2994 = vmatpush2.msra.mxu0 0.0
    %2995 = vmatprep.subr.mxu0 0.0
    %2996 = vmatpush2.msra.mxu0 0.0
    %2997 = vmatprep.subr.mxu0 0.0
    %2998 = vmatpush2.msra.mxu0 0.0
    %2999 = vmatprep.mubr.f32.mxu0 0.0
    %v3000 = vand.u32 %v2656, 4294901760
    %v3001 = vsub.f32 %v2656, %v3000
    %3002 = vmatmul.mubr.f32.gmra.mxu0 %v3001
    %v3003 = vpop.f32.mrf.mxu0
    %v3004 = vadd.f32 %v2900, %v3003
    %v3005 = vpop.f32.mrf.mxu0
    %3006 = vdwg.mxu0
    %3007 = vmatprep.subr.mxu0 0.0
    %v3008 = vand.u32 %v75, 4294901760
    %3009 = vmatpush1.msra.mxu0 %v3008
    %3010 = vmatprep.subr.mxu0 0.0
    %v3011 = vand.u32 %v74, 4294901760
    %3012 = vmatpush1.msra.mxu0 %v3011
    %3013 = vmatprep.subr.mxu0 0.0
    %v3014 = vand.u32 %v73, 4294901760
    %3015 = vmatpush1.msra.mxu0 %v3014
    %3016 = vmatprep.subr.mxu0 0.0
    %v3017 = vand.u32 %v72, 4294901760
    %3018 = vmatpush1.msra.mxu0 %v3017
    %3019 = vmatprep.subr.mxu0 0.0
    %v3020 = vand.u32 %v71, 4294901760
    %3021 = vmatpush1.msra.mxu0 %v3020
    %3022 = vmatprep.subr.mxu0 0.0
    %v3023 = vand.u32 %v70, 4294901760
    %3024 = vmatpush1.msra.mxu0 %v3023
    %3025 = vmatprep.subr.mxu0 0.0
    %v3026 = vand.u32 %v69, 4294901760
    %3027 = vmatpush1.msra.mxu0 %v3026
    %3028 = vmatprep.subr.mxu0 0.0
    %v3029 = vand.u32 %v68, 4294901760
    %3030 = vmatpush1.msra.mxu0 %v3029
    %3031 = vmatprep.subr.mxu0 0.0
    %v3032 = vand.u32 %v67, 4294901760
    %3033 = vmatpush1.msra.mxu0 %v3032
    %3034 = vmatprep.subr.mxu0 0.0
    %v3035 = vand.u32 %v66, 4294901760
    %3036 = vmatpush1.msra.mxu0 %v3035
    %3037 = vmatprep.subr.mxu0 0.0
    %v3038 = vand.u32 %v65, 4294901760
    %3039 = vmatpush1.msra.mxu0 %v3038
    %3040 = vmatprep.subr.mxu0 0.0
    %v3041 = vand.u32 %v64, 4294901760
    %3042 = vmatpush1.msra.mxu0 %v3041
    %3043 = vmatprep.subr.mxu0 0.0
    %v3044 = vand.u32 %v63, 4294901760
    %3045 = vmatpush1.msra.mxu0 %v3044
    %3046 = vmatprep.subr.mxu0 0.0
    %v3047 = vand.u32 %v62, 4294901760
    %3048 = vmatpush1.msra.mxu0 %v3047
    %3049 = vmatprep.subr.mxu0 0.0
    %v3050 = vand.u32 %v61, 4294901760
    %3051 = vmatpush1.msra.mxu0 %v3050
    %3052 = vmatprep.subr.mxu0 0.0
    %v3053 = vand.u32 %v60, 4294901760
    %3054 = vmatpush1.msra.mxu0 %v3053
    %3055 = vmatprep.subr.mxu0 0.0
    %3056 = vmatpush2.msra.mxu0 0.0
    %3057 = vmatprep.subr.mxu0 0.0
    %3058 = vmatpush2.msra.mxu0 0.0
    %3059 = vmatprep.subr.mxu0 0.0
    %3060 = vmatpush2.msra.mxu0 0.0
    %3061 = vmatprep.subr.mxu0 0.0
    %3062 = vmatpush2.msra.mxu0 0.0
    %3063 = vmatprep.subr.mxu0 0.0
    %3064 = vmatpush2.msra.mxu0 0.0
    %3065 = vmatprep.subr.mxu0 0.0
    %3066 = vmatpush2.msra.mxu0 0.0
    %3067 = vmatprep.subr.mxu0 0.0
    %3068 = vmatpush2.msra.mxu0 0.0
    %3069 = vmatprep.subr.mxu0 0.0
    %3070 = vmatpush2.msra.mxu0 0.0
    %3071 = vmatprep.subr.mxu0 0.0
    %3072 = vmatpush2.msra.mxu0 0.0
    %3073 = vmatprep.subr.mxu0 0.0
    %3074 = vmatpush2.msra.mxu0 0.0
    %3075 = vmatprep.subr.mxu0 0.0
    %3076 = vmatpush2.msra.mxu0 0.0
    %3077 = vmatprep.subr.mxu0 0.0
    %3078 = vmatpush2.msra.mxu0 0.0
    %3079 = vmatprep.subr.mxu0 0.0
    %3080 = vmatpush2.msra.mxu0 0.0
    %3081 = vmatprep.subr.mxu0 0.0
    %3082 = vmatpush2.msra.mxu0 0.0
    %3083 = vmatprep.subr.mxu0 0.0
    %3084 = vmatpush2.msra.mxu0 0.0
    %3085 = vmatprep.subr.mxu0 0.0
    %3086 = vmatpush2.msra.mxu0 0.0
    %3087 = vmatprep.mubr.f32.mxu0 0.0
    %v3088 = vand.u32 %v2656, 4294901760
    %v3089 = vsub.f32 %v2656, %v3088
    %v3090 = vand.u32 %v3089, 4294901760
    %3091 = vmatmul.mubr.f32.gmra.mxu0 %v3090
    %v3092 = vpop.f32.mrf.mxu0
    %v3093 = vadd.f32 %v3004, %v3092
    %v3094 = vpop.f32.mrf.mxu0
    %3095 = vdwg.mxu0
    %3096 = vmatprep.subr.mxu0 0.0
    %v3097 = vand.u32 %v75, 4294901760
    %v3098 = vsub.f32 %v75, %v3097
    %v3099 = vand.u32 %v3098, 4294901760
    %3100 = vmatpush1.msra.mxu0 %v3099
    %3101 = vmatprep.subr.mxu0 0.0
    %v3102 = vand.u32 %v74, 4294901760
    %v3103 = vsub.f32 %v74, %v3102
    %v3104 = vand.u32 %v3103, 4294901760
    %3105 = vmatpush1.msra.mxu0 %v3104
    %3106 = vmatprep.subr.mxu0 0.0
    %v3107 = vand.u32 %v73, 4294901760
    %v3108 = vsub.f32 %v73, %v3107
    %v3109 = vand.u32 %v3108, 4294901760
    %3110 = vmatpush1.msra.mxu0 %v3109
    %3111 = vmatprep.subr.mxu0 0.0
    %v3112 = vand.u32 %v72, 4294901760
    %v3113 = vsub.f32 %v72, %v3112
    %v3114 = vand.u32 %v3113, 4294901760
    %3115 = vmatpush1.msra.mxu0 %v3114
    %3116 = vmatprep.subr.mxu0 0.0
    %v3117 = vand.u32 %v71, 4294901760
    %v3118 = vsub.f32 %v71, %v3117
    %v3119 = vand.u32 %v3118, 4294901760
    %3120 = vmatpush1.msra.mxu0 %v3119
    %3121 = vmatprep.subr.mxu0 0.0
    %v3122 = vand.u32 %v70, 4294901760
    %v3123 = vsub.f32 %v70, %v3122
    %v3124 = vand.u32 %v3123, 4294901760
    %3125 = vmatpush1.msra.mxu0 %v3124
    %3126 = vmatprep.subr.mxu0 0.0
    %v3127 = vand.u32 %v69, 4294901760
    %v3128 = vsub.f32 %v69, %v3127
    %v3129 = vand.u32 %v3128, 4294901760
    %3130 = vmatpush1.msra.mxu0 %v3129
    %3131 = vmatprep.subr.mxu0 0.0
    %v3132 = vand.u32 %v68, 4294901760
    %v3133 = vsub.f32 %v68, %v3132
    %v3134 = vand.u32 %v3133, 4294901760
    %3135 = vmatpush1.msra.mxu0 %v3134
    %3136 = vmatprep.subr.mxu0 0.0
    %v3137 = vand.u32 %v67, 4294901760
    %v3138 = vsub.f32 %v67, %v3137
    %v3139 = vand.u32 %v3138, 4294901760
    %3140 = vmatpush1.msra.mxu0 %v3139
    %3141 = vmatprep.subr.mxu0 0.0
    %v3142 = vand.u32 %v66, 4294901760
    %v3143 = vsub.f32 %v66, %v3142
    %v3144 = vand.u32 %v3143, 4294901760
    %3145 = vmatpush1.msra.mxu0 %v3144
    %3146 = vmatprep.subr.mxu0 0.0
    %v3147 = vand.u32 %v65, 4294901760
    %v3148 = vsub.f32 %v65, %v3147
    %v3149 = vand.u32 %v3148, 4294901760
    %3150 = vmatpush1.msra.mxu0 %v3149
    %3151 = vmatprep.subr.mxu0 0.0
    %v3152 = vand.u32 %v64, 4294901760
    %v3153 = vsub.f32 %v64, %v3152
    %v3154 = vand.u32 %v3153, 4294901760
    %3155 = vmatpush1.msra.mxu0 %v3154
    %3156 = vmatprep.subr.mxu0 0.0
    %v3157 = vand.u32 %v63, 4294901760
    %v3158 = vsub.f32 %v63, %v3157
    %v3159 = vand.u32 %v3158, 4294901760
    %3160 = vmatpush1.msra.mxu0 %v3159
    %3161 = vmatprep.subr.mxu0 0.0
    %v3162 = vand.u32 %v62, 4294901760
    %v3163 = vsub.f32 %v62, %v3162
    %v3164 = vand.u32 %v3163, 4294901760
    %3165 = vmatpush1.msra.mxu0 %v3164
    %3166 = vmatprep.subr.mxu0 0.0
    %v3167 = vand.u32 %v61, 4294901760
    %v3168 = vsub.f32 %v61, %v3167
    %v3169 = vand.u32 %v3168, 4294901760
    %3170 = vmatpush1.msra.mxu0 %v3169
    %3171 = vmatprep.subr.mxu0 0.0
    %v3172 = vand.u32 %v60, 4294901760
    %v3173 = vsub.f32 %v60, %v3172
    %v3174 = vand.u32 %v3173, 4294901760
    %3175 = vmatpush1.msra.mxu0 %v3174
    %3176 = vmatprep.subr.mxu0 0.0
    %3177 = vmatpush2.msra.mxu0 0.0
    %3178 = vmatprep.subr.mxu0 0.0
    %3179 = vmatpush2.msra.mxu0 0.0
    %3180 = vmatprep.subr.mxu0 0.0
    %3181 = vmatpush2.msra.mxu0 0.0
    %3182 = vmatprep.subr.mxu0 0.0
    %3183 = vmatpush2.msra.mxu0 0.0
    %3184 = vmatprep.subr.mxu0 0.0
    %3185 = vmatpush2.msra.mxu0 0.0
    %3186 = vmatprep.subr.mxu0 0.0
    %3187 = vmatpush2.msra.mxu0 0.0
    %3188 = vmatprep.subr.mxu0 0.0
    %3189 = vmatpush2.msra.mxu0 0.0
    %3190 = vmatprep.subr.mxu0 0.0
    %3191 = vmatpush2.msra.mxu0 0.0
    %3192 = vmatprep.subr.mxu0 0.0
    %3193 = vmatpush2.msra.mxu0 0.0
    %3194 = vmatprep.subr.mxu0 0.0
    %3195 = vmatpush2.msra.mxu0 0.0
    %3196 = vmatprep.subr.mxu0 0.0
    %3197 = vmatpush2.msra.mxu0 0.0
    %3198 = vmatprep.subr.mxu0 0.0
    %3199 = vmatpush2.msra.mxu0 0.0
    %3200 = vmatprep.subr.mxu0 0.0
    %3201 = vmatpush2.msra.mxu0 0.0
    %3202 = vmatprep.subr.mxu0 0.0
    %3203 = vmatpush2.msra.mxu0 0.0
    %3204 = vmatprep.subr.mxu0 0.0
    %3205 = vmatpush2.msra.mxu0 0.0
    %3206 = vmatprep.subr.mxu0 0.0
    %3207 = vmatpush2.msra.mxu0 0.0
    %3208 = vmatprep.mubr.f32.mxu0 0.0
    %v3209 = vand.u32 %v2656, 4294901760
    %3210 = vmatmul.mubr.f32.gmra.mxu0 %v3209
    %v3211 = vpop.f32.mrf.mxu0
    %v3212 = vadd.f32 %v3093, %v3211
    %v3213 = vpop.f32.mrf.mxu0
    %3214 = vdwg.mxu0
    %3215 = vmatprep.subr.mxu0 0.0
    %v3216 = vand.u32 %v75, 4294901760
    %3217 = vmatpush1.msra.mxu0 %v3216
    %3218 = vmatprep.subr.mxu0 0.0
    %v3219 = vand.u32 %v74, 4294901760
    %3220 = vmatpush1.msra.mxu0 %v3219
    %3221 = vmatprep.subr.mxu0 0.0
    %v3222 = vand.u32 %v73, 4294901760
    %3223 = vmatpush1.msra.mxu0 %v3222
    %3224 = vmatprep.subr.mxu0 0.0
    %v3225 = vand.u32 %v72, 4294901760
    %3226 = vmatpush1.msra.mxu0 %v3225
    %3227 = vmatprep.subr.mxu0 0.0
    %v3228 = vand.u32 %v71, 4294901760
    %3229 = vmatpush1.msra.mxu0 %v3228
    %3230 = vmatprep.subr.mxu0 0.0
    %v3231 = vand.u32 %v70, 4294901760
    %3232 = vmatpush1.msra.mxu0 %v3231
    %3233 = vmatprep.subr.mxu0 0.0
    %v3234 = vand.u32 %v69, 4294901760
    %3235 = vmatpush1.msra.mxu0 %v3234
    %3236 = vmatprep.subr.mxu0 0.0
    %v3237 = vand.u32 %v68, 4294901760
    %3238 = vmatpush1.msra.mxu0 %v3237
    %3239 = vmatprep.subr.mxu0 0.0
    %v3240 = vand.u32 %v67, 4294901760
    %3241 = vmatpush1.msra.mxu0 %v3240
    %3242 = vmatprep.subr.mxu0 0.0
    %v3243 = vand.u32 %v66, 4294901760
    %3244 = vmatpush1.msra.mxu0 %v3243
    %3245 = vmatprep.subr.mxu0 0.0
    %v3246 = vand.u32 %v65, 4294901760
    %3247 = vmatpush1.msra.mxu0 %v3246
    %3248 = vmatprep.subr.mxu0 0.0
    %v3249 = vand.u32 %v64, 4294901760
    %3250 = vmatpush1.msra.mxu0 %v3249
    %3251 = vmatprep.subr.mxu0 0.0
    %v3252 = vand.u32 %v63, 4294901760
    %3253 = vmatpush1.msra.mxu0 %v3252
    %3254 = vmatprep.subr.mxu0 0.0
    %v3255 = vand.u32 %v62, 4294901760
    %3256 = vmatpush1.msra.mxu0 %v3255
    %3257 = vmatprep.subr.mxu0 0.0
    %v3258 = vand.u32 %v61, 4294901760
    %3259 = vmatpush1.msra.mxu0 %v3258
    %3260 = vmatprep.subr.mxu0 0.0
    %v3261 = vand.u32 %v60, 4294901760
    %3262 = vmatpush1.msra.mxu0 %v3261
    %3263 = vmatprep.subr.mxu0 0.0
    %3264 = vmatpush2.msra.mxu0 0.0
    %3265 = vmatprep.subr.mxu0 0.0
    %3266 = vmatpush2.msra.mxu0 0.0
    %3267 = vmatprep.subr.mxu0 0.0
    %3268 = vmatpush2.msra.mxu0 0.0
    %3269 = vmatprep.subr.mxu0 0.0
    %3270 = vmatpush2.msra.mxu0 0.0
    %3271 = vmatprep.subr.mxu0 0.0
    %3272 = vmatpush2.msra.mxu0 0.0
    %3273 = vmatprep.subr.mxu0 0.0
    %3274 = vmatpush2.msra.mxu0 0.0
    %3275 = vmatprep.subr.mxu0 0.0
    %3276 = vmatpush2.msra.mxu0 0.0
    %3277 = vmatprep.subr.mxu0 0.0
    %3278 = vmatpush2.msra.mxu0 0.0
    %3279 = vmatprep.subr.mxu0 0.0
    %3280 = vmatpush2.msra.mxu0 0.0
    %3281 = vmatprep.subr.mxu0 0.0
    %3282 = vmatpush2.msra.mxu0 0.0
    %3283 = vmatprep.subr.mxu0 0.0
    %3284 = vmatpush2.msra.mxu0 0.0
    %3285 = vmatprep.subr.mxu0 0.0
    %3286 = vmatpush2.msra.mxu0 0.0
    %3287 = vmatprep.subr.mxu0 0.0
    %3288 = vmatpush2.msra.mxu0 0.0
    %3289 = vmatprep.subr.mxu0 0.0
    %3290 = vmatpush2.msra.mxu0 0.0
    %3291 = vmatprep.subr.mxu0 0.0
    %3292 = vmatpush2.msra.mxu0 0.0
    %3293 = vmatprep.subr.mxu0 0.0
    %3294 = vmatpush2.msra.mxu0 0.0
    %3295 = vmatprep.mubr.f32.mxu0 0.0
    %v3296 = vand.u32 %v2656, 4294901760
    %3297 = vmatmul.mubr.f32.gmra.mxu0 %v3296
    %v3298 = vpop.f32.mrf.mxu0
    %v3299 = vadd.f32 %v3212, %v3298
    %v3300 = vpop.f32.mrf.mxu0
    %3301 = vdwg.mxu0
    %v3302 = vadd.f32 %v2660, %v3299
    %s3303 = scalar_lea.vmem [#allocation9], 32
    %3304 = vst [vmem:[%s3303] sm:$0xff] %v3302
    %s3305 = scalar_lea.vmem [#allocation3], 40
    %v3306 = vld [vmem:[%s3305] sm:$0xff]
    %3307 = vmatprep.subr.mxu0 0.0
    %v3308 = vand.u32 %v75, 4294901760
    %3309 = vmatpush1.msra.mxu0 %v3308
    %3310 = vmatprep.subr.mxu0 0.0
    %v3311 = vand.u32 %v74, 4294901760
    %3312 = vmatpush1.msra.mxu0 %v3311
    %3313 = vmatprep.subr.mxu0 0.0
    %v3314 = vand.u32 %v73, 4294901760
    %3315 = vmatpush1.msra.mxu0 %v3314
    %3316 = vmatprep.subr.mxu0 0.0
    %v3317 = vand.u32 %v72, 4294901760
    %3318 = vmatpush1.msra.mxu0 %v3317
    %3319 = vmatprep.subr.mxu0 0.0
    %v3320 = vand.u32 %v71, 4294901760
    %3321 = vmatpush1.msra.mxu0 %v3320
    %3322 = vmatprep.subr.mxu0 0.0
    %v3323 = vand.u32 %v70, 4294901760
    %3324 = vmatpush1.msra.mxu0 %v3323
    %3325 = vmatprep.subr.mxu0 0.0
    %v3326 = vand.u32 %v69, 4294901760
    %3327 = vmatpush1.msra.mxu0 %v3326
    %3328 = vmatprep.subr.mxu0 0.0
    %v3329 = vand.u32 %v68, 4294901760
    %3330 = vmatpush1.msra.mxu0 %v3329
    %3331 = vmatprep.subr.mxu0 0.0
    %v3332 = vand.u32 %v67, 4294901760
    %3333 = vmatpush1.msra.mxu0 %v3332
    %3334 = vmatprep.subr.mxu0 0.0
    %v3335 = vand.u32 %v66, 4294901760
    %3336 = vmatpush1.msra.mxu0 %v3335
    %3337 = vmatprep.subr.mxu0 0.0
    %v3338 = vand.u32 %v65, 4294901760
    %3339 = vmatpush1.msra.mxu0 %v3338
    %3340 = vmatprep.subr.mxu0 0.0
    %v3341 = vand.u32 %v64, 4294901760
    %3342 = vmatpush1.msra.mxu0 %v3341
    %3343 = vmatprep.subr.mxu0 0.0
    %v3344 = vand.u32 %v63, 4294901760
    %3345 = vmatpush1.msra.mxu0 %v3344
    %3346 = vmatprep.subr.mxu0 0.0
    %v3347 = vand.u32 %v62, 4294901760
    %3348 = vmatpush1.msra.mxu0 %v3347
    %3349 = vmatprep.subr.mxu0 0.0
    %v3350 = vand.u32 %v61, 4294901760
    %3351 = vmatpush1.msra.mxu0 %v3350
    %3352 = vmatprep.subr.mxu0 0.0
    %v3353 = vand.u32 %v60, 4294901760
    %3354 = vmatpush1.msra.mxu0 %v3353
    %3355 = vmatprep.subr.mxu0 0.0
    %3356 = vmatpush2.msra.mxu0 0.0
    %3357 = vmatprep.subr.mxu0 0.0
    %3358 = vmatpush2.msra.mxu0 0.0
    %3359 = vmatprep.subr.mxu0 0.0
    %3360 = vmatpush2.msra.mxu0 0.0
    %3361 = vmatprep.subr.mxu0 0.0
    %3362 = vmatpush2.msra.mxu0 0.0
    %3363 = vmatprep.subr.mxu0 0.0
    %3364 = vmatpush2.msra.mxu0 0.0
    %3365 = vmatprep.subr.mxu0 0.0
    %3366 = vmatpush2.msra.mxu0 0.0
    %3367 = vmatprep.subr.mxu0 0.0
    %3368 = vmatpush2.msra.mxu0 0.0
    %3369 = vmatprep.subr.mxu0 0.0
    %3370 = vmatpush2.msra.mxu0 0.0
    %3371 = vmatprep.subr.mxu0 0.0
    %3372 = vmatpush2.msra.mxu0 0.0
    %3373 = vmatprep.subr.mxu0 0.0
    %3374 = vmatpush2.msra.mxu0 0.0
    %3375 = vmatprep.subr.mxu0 0.0
    %3376 = vmatpush2.msra.mxu0 0.0
    %3377 = vmatprep.subr.mxu0 0.0
    %3378 = vmatpush2.msra.mxu0 0.0
    %3379 = vmatprep.subr.mxu0 0.0
    %3380 = vmatpush2.msra.mxu0 0.0
    %3381 = vmatprep.subr.mxu0 0.0
    %3382 = vmatpush2.msra.mxu0 0.0
    %3383 = vmatprep.subr.mxu0 0.0
    %3384 = vmatpush2.msra.mxu0 0.0
    %3385 = vmatprep.subr.mxu0 0.0
    %3386 = vmatpush2.msra.mxu0 0.0
    %3387 = vmatprep.mubr.f32.mxu0 0.0
    %v3388 = vand.u32 %v3302, 4294901760
    %v3389 = vsub.f32 %v3302, %v3388
    %v3390 = vand.u32 %v3389, 4294901760
    %v3391 = vsub.f32 %v3389, %v3390
    %v3392 = vand.u32 %v3391, 4294901760
    %3393 = vmatmul.mubr.f32.gmra.mxu0 %v3392
    %v3394 = vpop.f32.mrf.mxu0
    %v3395 = vadd.f32 0.0, %v3394
    %v3396 = vpop.f32.mrf.mxu0
    %3397 = vdwg.mxu0
    %3398 = vmatprep.subr.mxu0 0.0
    %v3399 = vand.u32 %v75, 4294901760
    %v3400 = vsub.f32 %v75, %v3399
    %v3401 = vand.u32 %v3400, 4294901760
    %v3402 = vsub.f32 %v3400, %v3401
    %v3403 = vand.u32 %v3402, 4294901760
    %3404 = vmatpush1.msra.mxu0 %v3403
    %3405 = vmatprep.subr.mxu0 0.0
    %v3406 = vand.u32 %v74, 4294901760
    %v3407 = vsub.f32 %v74, %v3406
    %v3408 = vand.u32 %v3407, 4294901760
    %v3409 = vsub.f32 %v3407, %v3408
    %v3410 = vand.u32 %v3409, 4294901760
    %3411 = vmatpush1.msra.mxu0 %v3410
    %3412 = vmatprep.subr.mxu0 0.0
    %v3413 = vand.u32 %v73, 4294901760
    %v3414 = vsub.f32 %v73, %v3413
    %v3415 = vand.u32 %v3414, 4294901760
    %v3416 = vsub.f32 %v3414, %v3415
    %v3417 = vand.u32 %v3416, 4294901760
    %3418 = vmatpush1.msra.mxu0 %v3417
    %3419 = vmatprep.subr.mxu0 0.0
    %v3420 = vand.u32 %v72, 4294901760
    %v3421 = vsub.f32 %v72, %v3420
    %v3422 = vand.u32 %v3421, 4294901760
    %v3423 = vsub.f32 %v3421, %v3422
    %v3424 = vand.u32 %v3423, 4294901760
    %3425 = vmatpush1.msra.mxu0 %v3424
    %3426 = vmatprep.subr.mxu0 0.0
    %v3427 = vand.u32 %v71, 4294901760
    %v3428 = vsub.f32 %v71, %v3427
    %v3429 = vand.u32 %v3428, 4294901760
    %v3430 = vsub.f32 %v3428, %v3429
    %v3431 = vand.u32 %v3430, 4294901760
    %3432 = vmatpush1.msra.mxu0 %v3431
    %3433 = vmatprep.subr.mxu0 0.0
    %v3434 = vand.u32 %v70, 4294901760
    %v3435 = vsub.f32 %v70, %v3434
    %v3436 = vand.u32 %v3435, 4294901760
    %v3437 = vsub.f32 %v3435, %v3436
    %v3438 = vand.u32 %v3437, 4294901760
    %3439 = vmatpush1.msra.mxu0 %v3438
    %3440 = vmatprep.subr.mxu0 0.0
    %v3441 = vand.u32 %v69, 4294901760
    %v3442 = vsub.f32 %v69, %v3441
    %v3443 = vand.u32 %v3442, 4294901760
    %v3444 = vsub.f32 %v3442, %v3443
    %v3445 = vand.u32 %v3444, 4294901760
    %3446 = vmatpush1.msra.mxu0 %v3445
    %3447 = vmatprep.subr.mxu0 0.0
    %v3448 = vand.u32 %v68, 4294901760
    %v3449 = vsub.f32 %v68, %v3448
    %v3450 = vand.u32 %v3449, 4294901760
    %v3451 = vsub.f32 %v3449, %v3450
    %v3452 = vand.u32 %v3451, 4294901760
    %3453 = vmatpush1.msra.mxu0 %v3452
    %3454 = vmatprep.subr.mxu0 0.0
    %v3455 = vand.u32 %v67, 4294901760
    %v3456 = vsub.f32 %v67, %v3455
    %v3457 = vand.u32 %v3456, 4294901760
    %v3458 = vsub.f32 %v3456, %v3457
    %v3459 = vand.u32 %v3458, 4294901760
    %3460 = vmatpush1.msra.mxu0 %v3459
    %3461 = vmatprep.subr.mxu0 0.0
    %v3462 = vand.u32 %v66, 4294901760
    %v3463 = vsub.f32 %v66, %v3462
    %v3464 = vand.u32 %v3463, 4294901760
    %v3465 = vsub.f32 %v3463, %v3464
    %v3466 = vand.u32 %v3465, 4294901760
    %3467 = vmatpush1.msra.mxu0 %v3466
    %3468 = vmatprep.subr.mxu0 0.0
    %v3469 = vand.u32 %v65, 4294901760
    %v3470 = vsub.f32 %v65, %v3469
    %v3471 = vand.u32 %v3470, 4294901760
    %v3472 = vsub.f32 %v3470, %v3471
    %v3473 = vand.u32 %v3472, 4294901760
    %3474 = vmatpush1.msra.mxu0 %v3473
    %3475 = vmatprep.subr.mxu0 0.0
    %v3476 = vand.u32 %v64, 4294901760
    %v3477 = vsub.f32 %v64, %v3476
    %v3478 = vand.u32 %v3477, 4294901760
    %v3479 = vsub.f32 %v3477, %v3478
    %v3480 = vand.u32 %v3479, 4294901760
    %3481 = vmatpush1.msra.mxu0 %v3480
    %3482 = vmatprep.subr.mxu0 0.0
    %v3483 = vand.u32 %v63, 4294901760
    %v3484 = vsub.f32 %v63, %v3483
    %v3485 = vand.u32 %v3484, 4294901760
    %v3486 = vsub.f32 %v3484, %v3485
    %v3487 = vand.u32 %v3486, 4294901760
    %3488 = vmatpush1.msra.mxu0 %v3487
    %3489 = vmatprep.subr.mxu0 0.0
    %v3490 = vand.u32 %v62, 4294901760
    %v3491 = vsub.f32 %v62, %v3490
    %v3492 = vand.u32 %v3491, 4294901760
    %v3493 = vsub.f32 %v3491, %v3492
    %v3494 = vand.u32 %v3493, 4294901760
    %3495 = vmatpush1.msra.mxu0 %v3494
    %3496 = vmatprep.subr.mxu0 0.0
    %v3497 = vand.u32 %v61, 4294901760
    %v3498 = vsub.f32 %v61, %v3497
    %v3499 = vand.u32 %v3498, 4294901760
    %v3500 = vsub.f32 %v3498, %v3499
    %v3501 = vand.u32 %v3500, 4294901760
    %3502 = vmatpush1.msra.mxu0 %v3501
    %3503 = vmatprep.subr.mxu0 0.0
    %v3504 = vand.u32 %v60, 4294901760
    %v3505 = vsub.f32 %v60, %v3504
    %v3506 = vand.u32 %v3505, 4294901760
    %v3507 = vsub.f32 %v3505, %v3506
    %v3508 = vand.u32 %v3507, 4294901760
    %3509 = vmatpush1.msra.mxu0 %v3508
    %3510 = vmatprep.subr.mxu0 0.0
    %3511 = vmatpush2.msra.mxu0 0.0
    %3512 = vmatprep.subr.mxu0 0.0
    %3513 = vmatpush2.msra.mxu0 0.0
    %3514 = vmatprep.subr.mxu0 0.0
    %3515 = vmatpush2.msra.mxu0 0.0
    %3516 = vmatprep.subr.mxu0 0.0
    %3517 = vmatpush2.msra.mxu0 0.0
    %3518 = vmatprep.subr.mxu0 0.0
    %3519 = vmatpush2.msra.mxu0 0.0
    %3520 = vmatprep.subr.mxu0 0.0
    %3521 = vmatpush2.msra.mxu0 0.0
    %3522 = vmatprep.subr.mxu0 0.0
    %3523 = vmatpush2.msra.mxu0 0.0
    %3524 = vmatprep.subr.mxu0 0.0
    %3525 = vmatpush2.msra.mxu0 0.0
    %3526 = vmatprep.subr.mxu0 0.0
    %3527 = vmatpush2.msra.mxu0 0.0
    %3528 = vmatprep.subr.mxu0 0.0
    %3529 = vmatpush2.msra.mxu0 0.0
    %3530 = vmatprep.subr.mxu0 0.0
    %3531 = vmatpush2.msra.mxu0 0.0
    %3532 = vmatprep.subr.mxu0 0.0
    %3533 = vmatpush2.msra.mxu0 0.0
    %3534 = vmatprep.subr.mxu0 0.0
    %3535 = vmatpush2.msra.mxu0 0.0
    %3536 = vmatprep.subr.mxu0 0.0
    %3537 = vmatpush2.msra.mxu0 0.0
    %3538 = vmatprep.subr.mxu0 0.0
    %3539 = vmatpush2.msra.mxu0 0.0
    %3540 = vmatprep.subr.mxu0 0.0
    %3541 = vmatpush2.msra.mxu0 0.0
    %3542 = vmatprep.mubr.f32.mxu0 0.0
    %v3543 = vand.u32 %v3302, 4294901760
    %3544 = vmatmul.mubr.f32.gmra.mxu0 %v3543
    %v3545 = vpop.f32.mrf.mxu0
    %v3546 = vadd.f32 %v3395, %v3545
    %v3547 = vpop.f32.mrf.mxu0
    %3548 = vdwg.mxu0
    %3549 = vmatprep.subr.mxu0 0.0
    %v3550 = vand.u32 %v75, 4294901760
    %v3551 = vsub.f32 %v75, %v3550
    %3552 = vmatpush1.msra.mxu0 %v3551
    %3553 = vmatprep.subr.mxu0 0.0
    %v3554 = vand.u32 %v74, 4294901760
    %v3555 = vsub.f32 %v74, %v3554
    %3556 = vmatpush1.msra.mxu0 %v3555
    %3557 = vmatprep.subr.mxu0 0.0
    %v3558 = vand.u32 %v73, 4294901760
    %v3559 = vsub.f32 %v73, %v3558
    %3560 = vmatpush1.msra.mxu0 %v3559
    %3561 = vmatprep.subr.mxu0 0.0
    %v3562 = vand.u32 %v72, 4294901760
    %v3563 = vsub.f32 %v72, %v3562
    %3564 = vmatpush1.msra.mxu0 %v3563
    %3565 = vmatprep.subr.mxu0 0.0
    %v3566 = vand.u32 %v71, 4294901760
    %v3567 = vsub.f32 %v71, %v3566
    %3568 = vmatpush1.msra.mxu0 %v3567
    %3569 = vmatprep.subr.mxu0 0.0
    %v3570 = vand.u32 %v70, 4294901760
    %v3571 = vsub.f32 %v70, %v3570
    %3572 = vmatpush1.msra.mxu0 %v3571
    %3573 = vmatprep.subr.mxu0 0.0
    %v3574 = vand.u32 %v69, 4294901760
    %v3575 = vsub.f32 %v69, %v3574
    %3576 = vmatpush1.msra.mxu0 %v3575
    %3577 = vmatprep.subr.mxu0 0.0
    %v3578 = vand.u32 %v68, 4294901760
    %v3579 = vsub.f32 %v68, %v3578
    %3580 = vmatpush1.msra.mxu0 %v3579
    %3581 = vmatprep.subr.mxu0 0.0
    %v3582 = vand.u32 %v67, 4294901760
    %v3583 = vsub.f32 %v67, %v3582
    %3584 = vmatpush1.msra.mxu0 %v3583
    %3585 = vmatprep.subr.mxu0 0.0
    %v3586 = vand.u32 %v66, 4294901760
    %v3587 = vsub.f32 %v66, %v3586
    %3588 = vmatpush1.msra.mxu0 %v3587
    %3589 = vmatprep.subr.mxu0 0.0
    %v3590 = vand.u32 %v65, 4294901760
    %v3591 = vsub.f32 %v65, %v3590
    %3592 = vmatpush1.msra.mxu0 %v3591
    %3593 = vmatprep.subr.mxu0 0.0
    %v3594 = vand.u32 %v64, 4294901760
    %v3595 = vsub.f32 %v64, %v3594
    %3596 = vmatpush1.msra.mxu0 %v3595
    %3597 = vmatprep.subr.mxu0 0.0
    %v3598 = vand.u32 %v63, 4294901760
    %v3599 = vsub.f32 %v63, %v3598
    %3600 = vmatpush1.msra.mxu0 %v3599
    %3601 = vmatprep.subr.mxu0 0.0
    %v3602 = vand.u32 %v62, 4294901760
    %v3603 = vsub.f32 %v62, %v3602
    %3604 = vmatpush1.msra.mxu0 %v3603
    %3605 = vmatprep.subr.mxu0 0.0
    %v3606 = vand.u32 %v61, 4294901760
    %v3607 = vsub.f32 %v61, %v3606
    %3608 = vmatpush1.msra.mxu0 %v3607
    %3609 = vmatprep.subr.mxu0 0.0
    %v3610 = vand.u32 %v60, 4294901760
    %v3611 = vsub.f32 %v60, %v3610
    %3612 = vmatpush1.msra.mxu0 %v3611
    %3613 = vmatprep.subr.mxu0 0.0
    %3614 = vmatpush2.msra.mxu0 0.0
    %3615 = vmatprep.subr.mxu0 0.0
    %3616 = vmatpush2.msra.mxu0 0.0
    %3617 = vmatprep.subr.mxu0 0.0
    %3618 = vmatpush2.msra.mxu0 0.0
    %3619 = vmatprep.subr.mxu0 0.0
    %3620 = vmatpush2.msra.mxu0 0.0
    %3621 = vmatprep.subr.mxu0 0.0
    %3622 = vmatpush2.msra.mxu0 0.0
    %3623 = vmatprep.subr.mxu0 0.0
    %3624 = vmatpush2.msra.mxu0 0.0
    %3625 = vmatprep.subr.mxu0 0.0
    %3626 = vmatpush2.msra.mxu0 0.0
    %3627 = vmatprep.subr.mxu0 0.0
    %3628 = vmatpush2.msra.mxu0 0.0
    %3629 = vmatprep.subr.mxu0 0.0
    %3630 = vmatpush2.msra.mxu0 0.0
    %3631 = vmatprep.subr.mxu0 0.0
    %3632 = vmatpush2.msra.mxu0 0.0
    %3633 = vmatprep.subr.mxu0 0.0
    %3634 = vmatpush2.msra.mxu0 0.0
    %3635 = vmatprep.subr.mxu0 0.0
    %3636 = vmatpush2.msra.mxu0 0.0
    %3637 = vmatprep.subr.mxu0 0.0
    %3638 = vmatpush2.msra.mxu0 0.0
    %3639 = vmatprep.subr.mxu0 0.0
    %3640 = vmatpush2.msra.mxu0 0.0
    %3641 = vmatprep.subr.mxu0 0.0
    %3642 = vmatpush2.msra.mxu0 0.0
    %3643 = vmatprep.subr.mxu0 0.0
    %3644 = vmatpush2.msra.mxu0 0.0
    %3645 = vmatprep.mubr.f32.mxu0 0.0
    %v3646 = vand.u32 %v3302, 4294901760
    %v3647 = vsub.f32 %v3302, %v3646
    %3648 = vmatmul.mubr.f32.gmra.mxu0 %v3647
    %v3649 = vpop.f32.mrf.mxu0
    %v3650 = vadd.f32 %v3546, %v3649
    %v3651 = vpop.f32.mrf.mxu0
    %3652 = vdwg.mxu0
    %3653 = vmatprep.subr.mxu0 0.0
    %v3654 = vand.u32 %v75, 4294901760
    %3655 = vmatpush1.msra.mxu0 %v3654
    %3656 = vmatprep.subr.mxu0 0.0
    %v3657 = vand.u32 %v74, 4294901760
    %3658 = vmatpush1.msra.mxu0 %v3657
    %3659 = vmatprep.subr.mxu0 0.0
    %v3660 = vand.u32 %v73, 4294901760
    %3661 = vmatpush1.msra.mxu0 %v3660
    %3662 = vmatprep.subr.mxu0 0.0
    %v3663 = vand.u32 %v72, 4294901760
    %3664 = vmatpush1.msra.mxu0 %v3663
    %3665 = vmatprep.subr.mxu0 0.0
    %v3666 = vand.u32 %v71, 4294901760
    %3667 = vmatpush1.msra.mxu0 %v3666
    %3668 = vmatprep.subr.mxu0 0.0
    %v3669 = vand.u32 %v70, 4294901760
    %3670 = vmatpush1.msra.mxu0 %v3669
    %3671 = vmatprep.subr.mxu0 0.0
    %v3672 = vand.u32 %v69, 4294901760
    %3673 = vmatpush1.msra.mxu0 %v3672
    %3674 = vmatprep.subr.mxu0 0.0
    %v3675 = vand.u32 %v68, 4294901760
    %3676 = vmatpush1.msra.mxu0 %v3675
    %3677 = vmatprep.subr.mxu0 0.0
    %v3678 = vand.u32 %v67, 4294901760
    %3679 = vmatpush1.msra.mxu0 %v3678
    %3680 = vmatprep.subr.mxu0 0.0
    %v3681 = vand.u32 %v66, 4294901760
    %3682 = vmatpush1.msra.mxu0 %v3681
    %3683 = vmatprep.subr.mxu0 0.0
    %v3684 = vand.u32 %v65, 4294901760
    %3685 = vmatpush1.msra.mxu0 %v3684
    %3686 = vmatprep.subr.mxu0 0.0
    %v3687 = vand.u32 %v64, 4294901760
    %3688 = vmatpush1.msra.mxu0 %v3687
    %3689 = vmatprep.subr.mxu0 0.0
    %v3690 = vand.u32 %v63, 4294901760
    %3691 = vmatpush1.msra.mxu0 %v3690
    %3692 = vmatprep.subr.mxu0 0.0
    %v3693 = vand.u32 %v62, 4294901760
    %3694 = vmatpush1.msra.mxu0 %v3693
    %3695 = vmatprep.subr.mxu0 0.0
    %v3696 = vand.u32 %v61, 4294901760
    %3697 = vmatpush1.msra.mxu0 %v3696
    %3698 = vmatprep.subr.mxu0 0.0
    %v3699 = vand.u32 %v60, 4294901760
    %3700 = vmatpush1.msra.mxu0 %v3699
    %3701 = vmatprep.subr.mxu0 0.0
    %3702 = vmatpush2.msra.mxu0 0.0
    %3703 = vmatprep.subr.mxu0 0.0
    %3704 = vmatpush2.msra.mxu0 0.0
    %3705 = vmatprep.subr.mxu0 0.0
    %3706 = vmatpush2.msra.mxu0 0.0
    %3707 = vmatprep.subr.mxu0 0.0
    %3708 = vmatpush2.msra.mxu0 0.0
    %3709 = vmatprep.subr.mxu0 0.0
    %3710 = vmatpush2.msra.mxu0 0.0
    %3711 = vmatprep.subr.mxu0 0.0
    %3712 = vmatpush2.msra.mxu0 0.0
    %3713 = vmatprep.subr.mxu0 0.0
    %3714 = vmatpush2.msra.mxu0 0.0
    %3715 = vmatprep.subr.mxu0 0.0
    %3716 = vmatpush2.msra.mxu0 0.0
    %3717 = vmatprep.subr.mxu0 0.0
    %3718 = vmatpush2.msra.mxu0 0.0
    %3719 = vmatprep.subr.mxu0 0.0
    %3720 = vmatpush2.msra.mxu0 0.0
    %3721 = vmatprep.subr.mxu0 0.0
    %3722 = vmatpush2.msra.mxu0 0.0
    %3723 = vmatprep.subr.mxu0 0.0
    %3724 = vmatpush2.msra.mxu0 0.0
    %3725 = vmatprep.subr.mxu0 0.0
    %3726 = vmatpush2.msra.mxu0 0.0
    %3727 = vmatprep.subr.mxu0 0.0
    %3728 = vmatpush2.msra.mxu0 0.0
    %3729 = vmatprep.subr.mxu0 0.0
    %3730 = vmatpush2.msra.mxu0 0.0
    %3731 = vmatprep.subr.mxu0 0.0
    %3732 = vmatpush2.msra.mxu0 0.0
    %3733 = vmatprep.mubr.f32.mxu0 0.0
    %v3734 = vand.u32 %v3302, 4294901760
    %v3735 = vsub.f32 %v3302, %v3734
    %v3736 = vand.u32 %v3735, 4294901760
    %3737 = vmatmul.mubr.f32.gmra.mxu0 %v3736
    %v3738 = vpop.f32.mrf.mxu0
    %v3739 = vadd.f32 %v3650, %v3738
    %v3740 = vpop.f32.mrf.mxu0
    %3741 = vdwg.mxu0
    %3742 = vmatprep.subr.mxu0 0.0
    %v3743 = vand.u32 %v75, 4294901760
    %v3744 = vsub.f32 %v75, %v3743
    %v3745 = vand.u32 %v3744, 4294901760
    %3746 = vmatpush1.msra.mxu0 %v3745
    %3747 = vmatprep.subr.mxu0 0.0
    %v3748 = vand.u32 %v74, 4294901760
    %v3749 = vsub.f32 %v74, %v3748
    %v3750 = vand.u32 %v3749, 4294901760
    %3751 = vmatpush1.msra.mxu0 %v3750
    %3752 = vmatprep.subr.mxu0 0.0
    %v3753 = vand.u32 %v73, 4294901760
    %v3754 = vsub.f32 %v73, %v3753
    %v3755 = vand.u32 %v3754, 4294901760
    %3756 = vmatpush1.msra.mxu0 %v3755
    %3757 = vmatprep.subr.mxu0 0.0
    %v3758 = vand.u32 %v72, 4294901760
    %v3759 = vsub.f32 %v72, %v3758
    %v3760 = vand.u32 %v3759, 4294901760
    %3761 = vmatpush1.msra.mxu0 %v3760
    %3762 = vmatprep.subr.mxu0 0.0
    %v3763 = vand.u32 %v71, 4294901760
    %v3764 = vsub.f32 %v71, %v3763
    %v3765 = vand.u32 %v3764, 4294901760
    %3766 = vmatpush1.msra.mxu0 %v3765
    %3767 = vmatprep.subr.mxu0 0.0
    %v3768 = vand.u32 %v70, 4294901760
    %v3769 = vsub.f32 %v70, %v3768
    %v3770 = vand.u32 %v3769, 4294901760
    %3771 = vmatpush1.msra.mxu0 %v3770
    %3772 = vmatprep.subr.mxu0 0.0
    %v3773 = vand.u32 %v69, 4294901760
    %v3774 = vsub.f32 %v69, %v3773
    %v3775 = vand.u32 %v3774, 4294901760
    %3776 = vmatpush1.msra.mxu0 %v3775
    %3777 = vmatprep.subr.mxu0 0.0
    %v3778 = vand.u32 %v68, 4294901760
    %v3779 = vsub.f32 %v68, %v3778
    %v3780 = vand.u32 %v3779, 4294901760
    %3781 = vmatpush1.msra.mxu0 %v3780
    %3782 = vmatprep.subr.mxu0 0.0
    %v3783 = vand.u32 %v67, 4294901760
    %v3784 = vsub.f32 %v67, %v3783
    %v3785 = vand.u32 %v3784, 4294901760
    %3786 = vmatpush1.msra.mxu0 %v3785
    %3787 = vmatprep.subr.mxu0 0.0
    %v3788 = vand.u32 %v66, 4294901760
    %v3789 = vsub.f32 %v66, %v3788
    %v3790 = vand.u32 %v3789, 4294901760
    %3791 = vmatpush1.msra.mxu0 %v3790
    %3792 = vmatprep.subr.mxu0 0.0
    %v3793 = vand.u32 %v65, 4294901760
    %v3794 = vsub.f32 %v65, %v3793
    %v3795 = vand.u32 %v3794, 4294901760
    %3796 = vmatpush1.msra.mxu0 %v3795
    %3797 = vmatprep.subr.mxu0 0.0
    %v3798 = vand.u32 %v64, 4294901760
    %v3799 = vsub.f32 %v64, %v3798
    %v3800 = vand.u32 %v3799, 4294901760
    %3801 = vmatpush1.msra.mxu0 %v3800
    %3802 = vmatprep.subr.mxu0 0.0
    %v3803 = vand.u32 %v63, 4294901760
    %v3804 = vsub.f32 %v63, %v3803
    %v3805 = vand.u32 %v3804, 4294901760
    %3806 = vmatpush1.msra.mxu0 %v3805
    %3807 = vmatprep.subr.mxu0 0.0
    %v3808 = vand.u32 %v62, 4294901760
    %v3809 = vsub.f32 %v62, %v3808
    %v3810 = vand.u32 %v3809, 4294901760
    %3811 = vmatpush1.msra.mxu0 %v3810
    %3812 = vmatprep.subr.mxu0 0.0
    %v3813 = vand.u32 %v61, 4294901760
    %v3814 = vsub.f32 %v61, %v3813
    %v3815 = vand.u32 %v3814, 4294901760
    %3816 = vmatpush1.msra.mxu0 %v3815
    %3817 = vmatprep.subr.mxu0 0.0
    %v3818 = vand.u32 %v60, 4294901760
    %v3819 = vsub.f32 %v60, %v3818
    %v3820 = vand.u32 %v3819, 4294901760
    %3821 = vmatpush1.msra.mxu0 %v3820
    %3822 = vmatprep.subr.mxu0 0.0
    %3823 = vmatpush2.msra.mxu0 0.0
    %3824 = vmatprep.subr.mxu0 0.0
    %3825 = vmatpush2.msra.mxu0 0.0
    %3826 = vmatprep.subr.mxu0 0.0
    %3827 = vmatpush2.msra.mxu0 0.0
    %3828 = vmatprep.subr.mxu0 0.0
    %3829 = vmatpush2.msra.mxu0 0.0
    %3830 = vmatprep.subr.mxu0 0.0
    %3831 = vmatpush2.msra.mxu0 0.0
    %3832 = vmatprep.subr.mxu0 0.0
    %3833 = vmatpush2.msra.mxu0 0.0
    %3834 = vmatprep.subr.mxu0 0.0
    %3835 = vmatpush2.msra.mxu0 0.0
    %3836 = vmatprep.subr.mxu0 0.0
    %3837 = vmatpush2.msra.mxu0 0.0
    %3838 = vmatprep.subr.mxu0 0.0
    %3839 = vmatpush2.msra.mxu0 0.0
    %3840 = vmatprep.subr.mxu0 0.0
    %3841 = vmatpush2.msra.mxu0 0.0
    %3842 = vmatprep.subr.mxu0 0.0
    %3843 = vmatpush2.msra.mxu0 0.0
    %3844 = vmatprep.subr.mxu0 0.0
    %3845 = vmatpush2.msra.mxu0 0.0
    %3846 = vmatprep.subr.mxu0 0.0
    %3847 = vmatpush2.msra.mxu0 0.0
    %3848 = vmatprep.subr.mxu0 0.0
    %3849 = vmatpush2.msra.mxu0 0.0
    %3850 = vmatprep.subr.mxu0 0.0
    %3851 = vmatpush2.msra.mxu0 0.0
    %3852 = vmatprep.subr.mxu0 0.0
    %3853 = vmatpush2.msra.mxu0 0.0
    %3854 = vmatprep.mubr.f32.mxu0 0.0
    %v3855 = vand.u32 %v3302, 4294901760
    %3856 = vmatmul.mubr.f32.gmra.mxu0 %v3855
    %v3857 = vpop.f32.mrf.mxu0
    %v3858 = vadd.f32 %v3739, %v3857
    %v3859 = vpop.f32.mrf.mxu0
    %3860 = vdwg.mxu0
    %3861 = vmatprep.subr.mxu0 0.0
    %v3862 = vand.u32 %v75, 4294901760
    %3863 = vmatpush1.msra.mxu0 %v3862
    %3864 = vmatprep.subr.mxu0 0.0
    %v3865 = vand.u32 %v74, 4294901760
    %3866 = vmatpush1.msra.mxu0 %v3865
    %3867 = vmatprep.subr.mxu0 0.0
    %v3868 = vand.u32 %v73, 4294901760
    %3869 = vmatpush1.msra.mxu0 %v3868
    %3870 = vmatprep.subr.mxu0 0.0
    %v3871 = vand.u32 %v72, 4294901760
    %3872 = vmatpush1.msra.mxu0 %v3871
    %3873 = vmatprep.subr.mxu0 0.0
    %v3874 = vand.u32 %v71, 4294901760
    %3875 = vmatpush1.msra.mxu0 %v3874
    %3876 = vmatprep.subr.mxu0 0.0
    %v3877 = vand.u32 %v70, 4294901760
    %3878 = vmatpush1.msra.mxu0 %v3877
    %3879 = vmatprep.subr.mxu0 0.0
    %v3880 = vand.u32 %v69, 4294901760
    %3881 = vmatpush1.msra.mxu0 %v3880
    %3882 = vmatprep.subr.mxu0 0.0
    %v3883 = vand.u32 %v68, 4294901760
    %3884 = vmatpush1.msra.mxu0 %v3883
    %3885 = vmatprep.subr.mxu0 0.0
    %v3886 = vand.u32 %v67, 4294901760
    %3887 = vmatpush1.msra.mxu0 %v3886
    %3888 = vmatprep.subr.mxu0 0.0
    %v3889 = vand.u32 %v66, 4294901760
    %3890 = vmatpush1.msra.mxu0 %v3889
    %3891 = vmatprep.subr.mxu0 0.0
    %v3892 = vand.u32 %v65, 4294901760
    %3893 = vmatpush1.msra.mxu0 %v3892
    %3894 = vmatprep.subr.mxu0 0.0
    %v3895 = vand.u32 %v64, 4294901760
    %3896 = vmatpush1.msra.mxu0 %v3895
    %3897 = vmatprep.subr.mxu0 0.0
    %v3898 = vand.u32 %v63, 4294901760
    %3899 = vmatpush1.msra.mxu0 %v3898
    %3900 = vmatprep.subr.mxu0 0.0
    %v3901 = vand.u32 %v62, 4294901760
    %3902 = vmatpush1.msra.mxu0 %v3901
    %3903 = vmatprep.subr.mxu0 0.0
    %v3904 = vand.u32 %v61, 4294901760
    %3905 = vmatpush1.msra.mxu0 %v3904
    %3906 = vmatprep.subr.mxu0 0.0
    %v3907 = vand.u32 %v60, 4294901760
    %3908 = vmatpush1.msra.mxu0 %v3907
    %3909 = vmatprep.subr.mxu0 0.0
    %3910 = vmatpush2.msra.mxu0 0.0
    %3911 = vmatprep.subr.mxu0 0.0
    %3912 = vmatpush2.msra.mxu0 0.0
    %3913 = vmatprep.subr.mxu0 0.0
    %3914 = vmatpush2.msra.mxu0 0.0
    %3915 = vmatprep.subr.mxu0 0.0
    %3916 = vmatpush2.msra.mxu0 0.0
    %3917 = vmatprep.subr.mxu0 0.0
    %3918 = vmatpush2.msra.mxu0 0.0
    %3919 = vmatprep.subr.mxu0 0.0
    %3920 = vmatpush2.msra.mxu0 0.0
    %3921 = vmatprep.subr.mxu0 0.0
    %3922 = vmatpush2.msra.mxu0 0.0
    %3923 = vmatprep.subr.mxu0 0.0
    %3924 = vmatpush2.msra.mxu0 0.0
    %3925 = vmatprep.subr.mxu0 0.0
    %3926 = vmatpush2.msra.mxu0 0.0
    %3927 = vmatprep.subr.mxu0 0.0
    %3928 = vmatpush2.msra.mxu0 0.0
    %3929 = vmatprep.subr.mxu0 0.0
    %3930 = vmatpush2.msra.mxu0 0.0
    %3931 = vmatprep.subr.mxu0 0.0
    %3932 = vmatpush2.msra.mxu0 0.0
    %3933 = vmatprep.subr.mxu0 0.0
    %3934 = vmatpush2.msra.mxu0 0.0
    %3935 = vmatprep.subr.mxu0 0.0
    %3936 = vmatpush2.msra.mxu0 0.0
    %3937 = vmatprep.subr.mxu0 0.0
    %3938 = vmatpush2.msra.mxu0 0.0
    %3939 = vmatprep.subr.mxu0 0.0
    %3940 = vmatpush2.msra.mxu0 0.0
    %3941 = vmatprep.mubr.f32.mxu0 0.0
    %v3942 = vand.u32 %v3302, 4294901760
    %3943 = vmatmul.mubr.f32.gmra.mxu0 %v3942
    %v3944 = vpop.f32.mrf.mxu0
    %v3945 = vadd.f32 %v3858, %v3944
    %v3946 = vpop.f32.mrf.mxu0
    %3947 = vdwg.mxu0
    %v3948 = vadd.f32 %v3306, %v3945
    %s3949 = scalar_lea.vmem [#allocation9], 40
    %3950 = vst [vmem:[%s3949] sm:$0xff] %v3948
    %s3951 = scalar_lea.vmem [#allocation3], 48
    %v3952 = vld [vmem:[%s3951] sm:$0xff]
    %3953 = vmatprep.subr.mxu0 0.0
    %v3954 = vand.u32 %v75, 4294901760
    %3955 = vmatpush1.msra.mxu0 %v3954
    %3956 = vmatprep.subr.mxu0 0.0
    %v3957 = vand.u32 %v74, 4294901760
    %3958 = vmatpush1.msra.mxu0 %v3957
    %3959 = vmatprep.subr.mxu0 0.0
    %v3960 = vand.u32 %v73, 4294901760
    %3961 = vmatpush1.msra.mxu0 %v3960
    %3962 = vmatprep.subr.mxu0 0.0
    %v3963 = vand.u32 %v72, 4294901760
    %3964 = vmatpush1.msra.mxu0 %v3963
    %3965 = vmatprep.subr.mxu0 0.0
    %v3966 = vand.u32 %v71, 4294901760
    %3967 = vmatpush1.msra.mxu0 %v3966
    %3968 = vmatprep.subr.mxu0 0.0
    %v3969 = vand.u32 %v70, 4294901760
    %3970 = vmatpush1.msra.mxu0 %v3969
    %3971 = vmatprep.subr.mxu0 0.0
    %v3972 = vand.u32 %v69, 4294901760
    %3973 = vmatpush1.msra.mxu0 %v3972
    %3974 = vmatprep.subr.mxu0 0.0
    %v3975 = vand.u32 %v68, 4294901760
    %3976 = vmatpush1.msra.mxu0 %v3975
    %3977 = vmatprep.subr.mxu0 0.0
    %v3978 = vand.u32 %v67, 4294901760
    %3979 = vmatpush1.msra.mxu0 %v3978
    %3980 = vmatprep.subr.mxu0 0.0
    %v3981 = vand.u32 %v66, 4294901760
    %3982 = vmatpush1.msra.mxu0 %v3981
    %3983 = vmatprep.subr.mxu0 0.0
    %v3984 = vand.u32 %v65, 4294901760
    %3985 = vmatpush1.msra.mxu0 %v3984
    %3986 = vmatprep.subr.mxu0 0.0
    %v3987 = vand.u32 %v64, 4294901760
    %3988 = vmatpush1.msra.mxu0 %v3987
    %3989 = vmatprep.subr.mxu0 0.0
    %v3990 = vand.u32 %v63, 4294901760
    %3991 = vmatpush1.msra.mxu0 %v3990
    %3992 = vmatprep.subr.mxu0 0.0
    %v3993 = vand.u32 %v62, 4294901760
    %3994 = vmatpush1.msra.mxu0 %v3993
    %3995 = vmatprep.subr.mxu0 0.0
    %v3996 = vand.u32 %v61, 4294901760
    %3997 = vmatpush1.msra.mxu0 %v3996
    %3998 = vmatprep.subr.mxu0 0.0
    %v3999 = vand.u32 %v60, 4294901760
    %4000 = vmatpush1.msra.mxu0 %v3999
    %4001 = vmatprep.subr.mxu0 0.0
    %4002 = vmatpush2.msra.mxu0 0.0
    %4003 = vmatprep.subr.mxu0 0.0
    %4004 = vmatpush2.msra.mxu0 0.0
    %4005 = vmatprep.subr.mxu0 0.0
    %4006 = vmatpush2.msra.mxu0 0.0
    %4007 = vmatprep.subr.mxu0 0.0
    %4008 = vmatpush2.msra.mxu0 0.0
    %4009 = vmatprep.subr.mxu0 0.0
    %4010 = vmatpush2.msra.mxu0 0.0
    %4011 = vmatprep.subr.mxu0 0.0
    %4012 = vmatpush2.msra.mxu0 0.0
    %4013 = vmatprep.subr.mxu0 0.0
    %4014 = vmatpush2.msra.mxu0 0.0
    %4015 = vmatprep.subr.mxu0 0.0
    %4016 = vmatpush2.msra.mxu0 0.0
    %4017 = vmatprep.subr.mxu0 0.0
    %4018 = vmatpush2.msra.mxu0 0.0
    %4019 = vmatprep.subr.mxu0 0.0
    %4020 = vmatpush2.msra.mxu0 0.0
    %4021 = vmatprep.subr.mxu0 0.0
    %4022 = vmatpush2.msra.mxu0 0.0
    %4023 = vmatprep.subr.mxu0 0.0
    %4024 = vmatpush2.msra.mxu0 0.0
    %4025 = vmatprep.subr.mxu0 0.0
    %4026 = vmatpush2.msra.mxu0 0.0
    %4027 = vmatprep.subr.mxu0 0.0
    %4028 = vmatpush2.msra.mxu0 0.0
    %4029 = vmatprep.subr.mxu0 0.0
    %4030 = vmatpush2.msra.mxu0 0.0
    %4031 = vmatprep.subr.mxu0 0.0
    %4032 = vmatpush2.msra.mxu0 0.0
    %4033 = vmatprep.mubr.f32.mxu0 0.0
    %v4034 = vand.u32 %v3948, 4294901760
    %v4035 = vsub.f32 %v3948, %v4034
    %v4036 = vand.u32 %v4035, 4294901760
    %v4037 = vsub.f32 %v4035, %v4036
    %v4038 = vand.u32 %v4037, 4294901760
    %4039 = vmatmul.mubr.f32.gmra.mxu0 %v4038
    %v4040 = vpop.f32.mrf.mxu0
    %v4041 = vadd.f32 0.0, %v4040
    %v4042 = vpop.f32.mrf.mxu0
    %4043 = vdwg.mxu0
    %4044 = vmatprep.subr.mxu0 0.0
    %v4045 = vand.u32 %v75, 4294901760
    %v4046 = vsub.f32 %v75, %v4045
    %v4047 = vand.u32 %v4046, 4294901760
    %v4048 = vsub.f32 %v4046, %v4047
    %v4049 = vand.u32 %v4048, 4294901760
    %4050 = vmatpush1.msra.mxu0 %v4049
    %4051 = vmatprep.subr.mxu0 0.0
    %v4052 = vand.u32 %v74, 4294901760
    %v4053 = vsub.f32 %v74, %v4052
    %v4054 = vand.u32 %v4053, 4294901760
    %v4055 = vsub.f32 %v4053, %v4054
    %v4056 = vand.u32 %v4055, 4294901760
    %4057 = vmatpush1.msra.mxu0 %v4056
    %4058 = vmatprep.subr.mxu0 0.0
    %v4059 = vand.u32 %v73, 4294901760
    %v4060 = vsub.f32 %v73, %v4059
    %v4061 = vand.u32 %v4060, 4294901760
    %v4062 = vsub.f32 %v4060, %v4061
    %v4063 = vand.u32 %v4062, 4294901760
    %4064 = vmatpush1.msra.mxu0 %v4063
    %4065 = vmatprep.subr.mxu0 0.0
    %v4066 = vand.u32 %v72, 4294901760
    %v4067 = vsub.f32 %v72, %v4066
    %v4068 = vand.u32 %v4067, 4294901760
    %v4069 = vsub.f32 %v4067, %v4068
    %v4070 = vand.u32 %v4069, 4294901760
    %4071 = vmatpush1.msra.mxu0 %v4070
    %4072 = vmatprep.subr.mxu0 0.0
    %v4073 = vand.u32 %v71, 4294901760
    %v4074 = vsub.f32 %v71, %v4073
    %v4075 = vand.u32 %v4074, 4294901760
    %v4076 = vsub.f32 %v4074, %v4075
    %v4077 = vand.u32 %v4076, 4294901760
    %4078 = vmatpush1.msra.mxu0 %v4077
    %4079 = vmatprep.subr.mxu0 0.0
    %v4080 = vand.u32 %v70, 4294901760
    %v4081 = vsub.f32 %v70, %v4080
    %v4082 = vand.u32 %v4081, 4294901760
    %v4083 = vsub.f32 %v4081, %v4082
    %v4084 = vand.u32 %v4083, 4294901760
    %4085 = vmatpush1.msra.mxu0 %v4084
    %4086 = vmatprep.subr.mxu0 0.0
    %v4087 = vand.u32 %v69, 4294901760
    %v4088 = vsub.f32 %v69, %v4087
    %v4089 = vand.u32 %v4088, 4294901760
    %v4090 = vsub.f32 %v4088, %v4089
    %v4091 = vand.u32 %v4090, 4294901760
    %4092 = vmatpush1.msra.mxu0 %v4091
    %4093 = vmatprep.subr.mxu0 0.0
    %v4094 = vand.u32 %v68, 4294901760
    %v4095 = vsub.f32 %v68, %v4094
    %v4096 = vand.u32 %v4095, 4294901760
    %v4097 = vsub.f32 %v4095, %v4096
    %v4098 = vand.u32 %v4097, 4294901760
    %4099 = vmatpush1.msra.mxu0 %v4098
    %4100 = vmatprep.subr.mxu0 0.0
    %v4101 = vand.u32 %v67, 4294901760
    %v4102 = vsub.f32 %v67, %v4101
    %v4103 = vand.u32 %v4102, 4294901760
    %v4104 = vsub.f32 %v4102, %v4103
    %v4105 = vand.u32 %v4104, 4294901760
    %4106 = vmatpush1.msra.mxu0 %v4105
    %4107 = vmatprep.subr.mxu0 0.0
    %v4108 = vand.u32 %v66, 4294901760
    %v4109 = vsub.f32 %v66, %v4108
    %v4110 = vand.u32 %v4109, 4294901760
    %v4111 = vsub.f32 %v4109, %v4110
    %v4112 = vand.u32 %v4111, 4294901760
    %4113 = vmatpush1.msra.mxu0 %v4112
    %4114 = vmatprep.subr.mxu0 0.0
    %v4115 = vand.u32 %v65, 4294901760
    %v4116 = vsub.f32 %v65, %v4115
    %v4117 = vand.u32 %v4116, 4294901760
    %v4118 = vsub.f32 %v4116, %v4117
    %v4119 = vand.u32 %v4118, 4294901760
    %4120 = vmatpush1.msra.mxu0 %v4119
    %4121 = vmatprep.subr.mxu0 0.0
    %v4122 = vand.u32 %v64, 4294901760
    %v4123 = vsub.f32 %v64, %v4122
    %v4124 = vand.u32 %v4123, 4294901760
    %v4125 = vsub.f32 %v4123, %v4124
    %v4126 = vand.u32 %v4125, 4294901760
    %4127 = vmatpush1.msra.mxu0 %v4126
    %4128 = vmatprep.subr.mxu0 0.0
    %v4129 = vand.u32 %v63, 4294901760
    %v4130 = vsub.f32 %v63, %v4129
    %v4131 = vand.u32 %v4130, 4294901760
    %v4132 = vsub.f32 %v4130, %v4131
    %v4133 = vand.u32 %v4132, 4294901760
    %4134 = vmatpush1.msra.mxu0 %v4133
    %4135 = vmatprep.subr.mxu0 0.0
    %v4136 = vand.u32 %v62, 4294901760
    %v4137 = vsub.f32 %v62, %v4136
    %v4138 = vand.u32 %v4137, 4294901760
    %v4139 = vsub.f32 %v4137, %v4138
    %v4140 = vand.u32 %v4139, 4294901760
    %4141 = vmatpush1.msra.mxu0 %v4140
    %4142 = vmatprep.subr.mxu0 0.0
    %v4143 = vand.u32 %v61, 4294901760
    %v4144 = vsub.f32 %v61, %v4143
    %v4145 = vand.u32 %v4144, 4294901760
    %v4146 = vsub.f32 %v4144, %v4145
    %v4147 = vand.u32 %v4146, 4294901760
    %4148 = vmatpush1.msra.mxu0 %v4147
    %4149 = vmatprep.subr.mxu0 0.0
    %v4150 = vand.u32 %v60, 4294901760
    %v4151 = vsub.f32 %v60, %v4150
    %v4152 = vand.u32 %v4151, 4294901760
    %v4153 = vsub.f32 %v4151, %v4152
    %v4154 = vand.u32 %v4153, 4294901760
    %4155 = vmatpush1.msra.mxu0 %v4154
    %4156 = vmatprep.subr.mxu0 0.0
    %4157 = vmatpush2.msra.mxu0 0.0
    %4158 = vmatprep.subr.mxu0 0.0
    %4159 = vmatpush2.msra.mxu0 0.0
    %4160 = vmatprep.subr.mxu0 0.0
    %4161 = vmatpush2.msra.mxu0 0.0
    %4162 = vmatprep.subr.mxu0 0.0
    %4163 = vmatpush2.msra.mxu0 0.0
    %4164 = vmatprep.subr.mxu0 0.0
    %4165 = vmatpush2.msra.mxu0 0.0
    %4166 = vmatprep.subr.mxu0 0.0
    %4167 = vmatpush2.msra.mxu0 0.0
    %4168 = vmatprep.subr.mxu0 0.0
    %4169 = vmatpush2.msra.mxu0 0.0
    %4170 = vmatprep.subr.mxu0 0.0
    %4171 = vmatpush2.msra.mxu0 0.0
    %4172 = vmatprep.subr.mxu0 0.0
    %4173 = vmatpush2.msra.mxu0 0.0
    %4174 = vmatprep.subr.mxu0 0.0
    %4175 = vmatpush2.msra.mxu0 0.0
    %4176 = vmatprep.subr.mxu0 0.0
    %4177 = vmatpush2.msra.mxu0 0.0
    %4178 = vmatprep.subr.mxu0 0.0
    %4179 = vmatpush2.msra.mxu0 0.0
    %4180 = vmatprep.subr.mxu0 0.0
    %4181 = vmatpush2.msra.mxu0 0.0
    %4182 = vmatprep.subr.mxu0 0.0
    %4183 = vmatpush2.msra.mxu0 0.0
    %4184 = vmatprep.subr.mxu0 0.0
    %4185 = vmatpush2.msra.mxu0 0.0
    %4186 = vmatprep.subr.mxu0 0.0
    %4187 = vmatpush2.msra.mxu0 0.0
    %4188 = vmatprep.mubr.f32.mxu0 0.0
    %v4189 = vand.u32 %v3948, 4294901760
    %4190 = vmatmul.mubr.f32.gmra.mxu0 %v4189
    %v4191 = vpop.f32.mrf.mxu0
    %v4192 = vadd.f32 %v4041, %v4191
    %v4193 = vpop.f32.mrf.mxu0
    %4194 = vdwg.mxu0
    %4195 = vmatprep.subr.mxu0 0.0
    %v4196 = vand.u32 %v75, 4294901760
    %v4197 = vsub.f32 %v75, %v4196
    %4198 = vmatpush1.msra.mxu0 %v4197
    %4199 = vmatprep.subr.mxu0 0.0
    %v4200 = vand.u32 %v74, 4294901760
    %v4201 = vsub.f32 %v74, %v4200
    %4202 = vmatpush1.msra.mxu0 %v4201
    %4203 = vmatprep.subr.mxu0 0.0
    %v4204 = vand.u32 %v73, 4294901760
    %v4205 = vsub.f32 %v73, %v4204
    %4206 = vmatpush1.msra.mxu0 %v4205
    %4207 = vmatprep.subr.mxu0 0.0
    %v4208 = vand.u32 %v72, 4294901760
    %v4209 = vsub.f32 %v72, %v4208
    %4210 = vmatpush1.msra.mxu0 %v4209
    %4211 = vmatprep.subr.mxu0 0.0
    %v4212 = vand.u32 %v71, 4294901760
    %v4213 = vsub.f32 %v71, %v4212
    %4214 = vmatpush1.msra.mxu0 %v4213
    %4215 = vmatprep.subr.mxu0 0.0
    %v4216 = vand.u32 %v70, 4294901760
    %v4217 = vsub.f32 %v70, %v4216
    %4218 = vmatpush1.msra.mxu0 %v4217
    %4219 = vmatprep.subr.mxu0 0.0
    %v4220 = vand.u32 %v69, 4294901760
    %v4221 = vsub.f32 %v69, %v4220
    %4222 = vmatpush1.msra.mxu0 %v4221
    %4223 = vmatprep.subr.mxu0 0.0
    %v4224 = vand.u32 %v68, 4294901760
    %v4225 = vsub.f32 %v68, %v4224
    %4226 = vmatpush1.msra.mxu0 %v4225
    %4227 = vmatprep.subr.mxu0 0.0
    %v4228 = vand.u32 %v67, 4294901760
    %v4229 = vsub.f32 %v67, %v4228
    %4230 = vmatpush1.msra.mxu0 %v4229
    %4231 = vmatprep.subr.mxu0 0.0
    %v4232 = vand.u32 %v66, 4294901760
    %v4233 = vsub.f32 %v66, %v4232
    %4234 = vmatpush1.msra.mxu0 %v4233
    %4235 = vmatprep.subr.mxu0 0.0
    %v4236 = vand.u32 %v65, 4294901760
    %v4237 = vsub.f32 %v65, %v4236
    %4238 = vmatpush1.msra.mxu0 %v4237
    %4239 = vmatprep.subr.mxu0 0.0
    %v4240 = vand.u32 %v64, 4294901760
    %v4241 = vsub.f32 %v64, %v4240
    %4242 = vmatpush1.msra.mxu0 %v4241
    %4243 = vmatprep.subr.mxu0 0.0
    %v4244 = vand.u32 %v63, 4294901760
    %v4245 = vsub.f32 %v63, %v4244
    %4246 = vmatpush1.msra.mxu0 %v4245
    %4247 = vmatprep.subr.mxu0 0.0
    %v4248 = vand.u32 %v62, 4294901760
    %v4249 = vsub.f32 %v62, %v4248
    %4250 = vmatpush1.msra.mxu0 %v4249
    %4251 = vmatprep.subr.mxu0 0.0
    %v4252 = vand.u32 %v61, 4294901760
    %v4253 = vsub.f32 %v61, %v4252
    %4254 = vmatpush1.msra.mxu0 %v4253
    %4255 = vmatprep.subr.mxu0 0.0
    %v4256 = vand.u32 %v60, 4294901760
    %v4257 = vsub.f32 %v60, %v4256
    %4258 = vmatpush1.msra.mxu0 %v4257
    %4259 = vmatprep.subr.mxu0 0.0
    %4260 = vmatpush2.msra.mxu0 0.0
    %4261 = vmatprep.subr.mxu0 0.0
    %4262 = vmatpush2.msra.mxu0 0.0
    %4263 = vmatprep.subr.mxu0 0.0
    %4264 = vmatpush2.msra.mxu0 0.0
    %4265 = vmatprep.subr.mxu0 0.0
    %4266 = vmatpush2.msra.mxu0 0.0
    %4267 = vmatprep.subr.mxu0 0.0
    %4268 = vmatpush2.msra.mxu0 0.0
    %4269 = vmatprep.subr.mxu0 0.0
    %4270 = vmatpush2.msra.mxu0 0.0
    %4271 = vmatprep.subr.mxu0 0.0
    %4272 = vmatpush2.msra.mxu0 0.0
    %4273 = vmatprep.subr.mxu0 0.0
    %4274 = vmatpush2.msra.mxu0 0.0
    %4275 = vmatprep.subr.mxu0 0.0
    %4276 = vmatpush2.msra.mxu0 0.0
    %4277 = vmatprep.subr.mxu0 0.0
    %4278 = vmatpush2.msra.mxu0 0.0
    %4279 = vmatprep.subr.mxu0 0.0
    %4280 = vmatpush2.msra.mxu0 0.0
    %4281 = vmatprep.subr.mxu0 0.0
    %4282 = vmatpush2.msra.mxu0 0.0
    %4283 = vmatprep.subr.mxu0 0.0
    %4284 = vmatpush2.msra.mxu0 0.0
    %4285 = vmatprep.subr.mxu0 0.0
    %4286 = vmatpush2.msra.mxu0 0.0
    %4287 = vmatprep.subr.mxu0 0.0
    %4288 = vmatpush2.msra.mxu0 0.0
    %4289 = vmatprep.subr.mxu0 0.0
    %4290 = vmatpush2.msra.mxu0 0.0
    %4291 = vmatprep.mubr.f32.mxu0 0.0
    %v4292 = vand.u32 %v3948, 4294901760
    %v4293 = vsub.f32 %v3948, %v4292
    %4294 = vmatmul.mubr.f32.gmra.mxu0 %v4293
    %v4295 = vpop.f32.mrf.mxu0
    %v4296 = vadd.f32 %v4192, %v4295
    %v4297 = vpop.f32.mrf.mxu0
    %4298 = vdwg.mxu0
    %4299 = vmatprep.subr.mxu0 0.0
    %v4300 = vand.u32 %v75, 4294901760
    %4301 = vmatpush1.msra.mxu0 %v4300
    %4302 = vmatprep.subr.mxu0 0.0
    %v4303 = vand.u32 %v74, 4294901760
    %4304 = vmatpush1.msra.mxu0 %v4303
    %4305 = vmatprep.subr.mxu0 0.0
    %v4306 = vand.u32 %v73, 4294901760
    %4307 = vmatpush1.msra.mxu0 %v4306
    %4308 = vmatprep.subr.mxu0 0.0
    %v4309 = vand.u32 %v72, 4294901760
    %4310 = vmatpush1.msra.mxu0 %v4309
    %4311 = vmatprep.subr.mxu0 0.0
    %v4312 = vand.u32 %v71, 4294901760
    %4313 = vmatpush1.msra.mxu0 %v4312
    %4314 = vmatprep.subr.mxu0 0.0
    %v4315 = vand.u32 %v70, 4294901760
    %4316 = vmatpush1.msra.mxu0 %v4315
    %4317 = vmatprep.subr.mxu0 0.0
    %v4318 = vand.u32 %v69, 4294901760
    %4319 = vmatpush1.msra.mxu0 %v4318
    %4320 = vmatprep.subr.mxu0 0.0
    %v4321 = vand.u32 %v68, 4294901760
    %4322 = vmatpush1.msra.mxu0 %v4321
    %4323 = vmatprep.subr.mxu0 0.0
    %v4324 = vand.u32 %v67, 4294901760
    %4325 = vmatpush1.msra.mxu0 %v4324
    %4326 = vmatprep.subr.mxu0 0.0
    %v4327 = vand.u32 %v66, 4294901760
    %4328 = vmatpush1.msra.mxu0 %v4327
    %4329 = vmatprep.subr.mxu0 0.0
    %v4330 = vand.u32 %v65, 4294901760
    %4331 = vmatpush1.msra.mxu0 %v4330
    %4332 = vmatprep.subr.mxu0 0.0
    %v4333 = vand.u32 %v64, 4294901760
    %4334 = vmatpush1.msra.mxu0 %v4333
    %4335 = vmatprep.subr.mxu0 0.0
    %v4336 = vand.u32 %v63, 4294901760
    %4337 = vmatpush1.msra.mxu0 %v4336
    %4338 = vmatprep.subr.mxu0 0.0
    %v4339 = vand.u32 %v62, 4294901760
    %4340 = vmatpush1.msra.mxu0 %v4339
    %4341 = vmatprep.subr.mxu0 0.0
    %v4342 = vand.u32 %v61, 4294901760
    %4343 = vmatpush1.msra.mxu0 %v4342
    %4344 = vmatprep.subr.mxu0 0.0
    %v4345 = vand.u32 %v60, 4294901760
    %4346 = vmatpush1.msra.mxu0 %v4345
    %4347 = vmatprep.subr.mxu0 0.0
    %4348 = vmatpush2.msra.mxu0 0.0
    %4349 = vmatprep.subr.mxu0 0.0
    %4350 = vmatpush2.msra.mxu0 0.0
    %4351 = vmatprep.subr.mxu0 0.0
    %4352 = vmatpush2.msra.mxu0 0.0
    %4353 = vmatprep.subr.mxu0 0.0
    %4354 = vmatpush2.msra.mxu0 0.0
    %4355 = vmatprep.subr.mxu0 0.0
    %4356 = vmatpush2.msra.mxu0 0.0
    %4357 = vmatprep.subr.mxu0 0.0
    %4358 = vmatpush2.msra.mxu0 0.0
    %4359 = vmatprep.subr.mxu0 0.0
    %4360 = vmatpush2.msra.mxu0 0.0
    %4361 = vmatprep.subr.mxu0 0.0
    %4362 = vmatpush2.msra.mxu0 0.0
    %4363 = vmatprep.subr.mxu0 0.0
    %4364 = vmatpush2.msra.mxu0 0.0
    %4365 = vmatprep.subr.mxu0 0.0
    %4366 = vmatpush2.msra.mxu0 0.0
    %4367 = vmatprep.subr.mxu0 0.0
    %4368 = vmatpush2.msra.mxu0 0.0
    %4369 = vmatprep.subr.mxu0 0.0
    %4370 = vmatpush2.msra.mxu0 0.0
    %4371 = vmatprep.subr.mxu0 0.0
    %4372 = vmatpush2.msra.mxu0 0.0
    %4373 = vmatprep.subr.mxu0 0.0
    %4374 = vmatpush2.msra.mxu0 0.0
    %4375 = vmatprep.subr.mxu0 0.0
    %4376 = vmatpush2.msra.mxu0 0.0
    %4377 = vmatprep.subr.mxu0 0.0
    %4378 = vmatpush2.msra.mxu0 0.0
    %4379 = vmatprep.mubr.f32.mxu0 0.0
    %v4380 = vand.u32 %v3948, 4294901760
    %v4381 = vsub.f32 %v3948, %v4380
    %v4382 = vand.u32 %v4381, 4294901760
    %4383 = vmatmul.mubr.f32.gmra.mxu0 %v4382
    %v4384 = vpop.f32.mrf.mxu0
    %v4385 = vadd.f32 %v4296, %v4384
    %v4386 = vpop.f32.mrf.mxu0
    %4387 = vdwg.mxu0
    %4388 = vmatprep.subr.mxu0 0.0
    %v4389 = vand.u32 %v75, 4294901760
    %v4390 = vsub.f32 %v75, %v4389
    %v4391 = vand.u32 %v4390, 4294901760
    %4392 = vmatpush1.msra.mxu0 %v4391
    %4393 = vmatprep.subr.mxu0 0.0
    %v4394 = vand.u32 %v74, 4294901760
    %v4395 = vsub.f32 %v74, %v4394
    %v4396 = vand.u32 %v4395, 4294901760
    %4397 = vmatpush1.msra.mxu0 %v4396
    %4398 = vmatprep.subr.mxu0 0.0
    %v4399 = vand.u32 %v73, 4294901760
    %v4400 = vsub.f32 %v73, %v4399
    %v4401 = vand.u32 %v4400, 4294901760
    %4402 = vmatpush1.msra.mxu0 %v4401
    %4403 = vmatprep.subr.mxu0 0.0
    %v4404 = vand.u32 %v72, 4294901760
    %v4405 = vsub.f32 %v72, %v4404
    %v4406 = vand.u32 %v4405, 4294901760
    %4407 = vmatpush1.msra.mxu0 %v4406
    %4408 = vmatprep.subr.mxu0 0.0
    %v4409 = vand.u32 %v71, 4294901760
    %v4410 = vsub.f32 %v71, %v4409
    %v4411 = vand.u32 %v4410, 4294901760
    %4412 = vmatpush1.msra.mxu0 %v4411
    %4413 = vmatprep.subr.mxu0 0.0
    %v4414 = vand.u32 %v70, 4294901760
    %v4415 = vsub.f32 %v70, %v4414
    %v4416 = vand.u32 %v4415, 4294901760
    %4417 = vmatpush1.msra.mxu0 %v4416
    %4418 = vmatprep.subr.mxu0 0.0
    %v4419 = vand.u32 %v69, 4294901760
    %v4420 = vsub.f32 %v69, %v4419
    %v4421 = vand.u32 %v4420, 4294901760
    %4422 = vmatpush1.msra.mxu0 %v4421
    %4423 = vmatprep.subr.mxu0 0.0
    %v4424 = vand.u32 %v68, 4294901760
    %v4425 = vsub.f32 %v68, %v4424
    %v4426 = vand.u32 %v4425, 4294901760
    %4427 = vmatpush1.msra.mxu0 %v4426
    %4428 = vmatprep.subr.mxu0 0.0
    %v4429 = vand.u32 %v67, 4294901760
    %v4430 = vsub.f32 %v67, %v4429
    %v4431 = vand.u32 %v4430, 4294901760
    %4432 = vmatpush1.msra.mxu0 %v4431
    %4433 = vmatprep.subr.mxu0 0.0
    %v4434 = vand.u32 %v66, 4294901760
    %v4435 = vsub.f32 %v66, %v4434
    %v4436 = vand.u32 %v4435, 4294901760
    %4437 = vmatpush1.msra.mxu0 %v4436
    %4438 = vmatprep.subr.mxu0 0.0
    %v4439 = vand.u32 %v65, 4294901760
    %v4440 = vsub.f32 %v65, %v4439
    %v4441 = vand.u32 %v4440, 4294901760
    %4442 = vmatpush1.msra.mxu0 %v4441
    %4443 = vmatprep.subr.mxu0 0.0
    %v4444 = vand.u32 %v64, 4294901760
    %v4445 = vsub.f32 %v64, %v4444
    %v4446 = vand.u32 %v4445, 4294901760
    %4447 = vmatpush1.msra.mxu0 %v4446
    %4448 = vmatprep.subr.mxu0 0.0
    %v4449 = vand.u32 %v63, 4294901760
    %v4450 = vsub.f32 %v63, %v4449
    %v4451 = vand.u32 %v4450, 4294901760
    %4452 = vmatpush1.msra.mxu0 %v4451
    %4453 = vmatprep.subr.mxu0 0.0
    %v4454 = vand.u32 %v62, 4294901760
    %v4455 = vsub.f32 %v62, %v4454
    %v4456 = vand.u32 %v4455, 4294901760
    %4457 = vmatpush1.msra.mxu0 %v4456
    %4458 = vmatprep.subr.mxu0 0.0
    %v4459 = vand.u32 %v61, 4294901760
    %v4460 = vsub.f32 %v61, %v4459
    %v4461 = vand.u32 %v4460, 4294901760
    %4462 = vmatpush1.msra.mxu0 %v4461
    %4463 = vmatprep.subr.mxu0 0.0
    %v4464 = vand.u32 %v60, 4294901760
    %v4465 = vsub.f32 %v60, %v4464
    %v4466 = vand.u32 %v4465, 4294901760
    %4467 = vmatpush1.msra.mxu0 %v4466
    %4468 = vmatprep.subr.mxu0 0.0
    %4469 = vmatpush2.msra.mxu0 0.0
    %4470 = vmatprep.subr.mxu0 0.0
    %4471 = vmatpush2.msra.mxu0 0.0
    %4472 = vmatprep.subr.mxu0 0.0
    %4473 = vmatpush2.msra.mxu0 0.0
    %4474 = vmatprep.subr.mxu0 0.0
    %4475 = vmatpush2.msra.mxu0 0.0
    %4476 = vmatprep.subr.mxu0 0.0
    %4477 = vmatpush2.msra.mxu0 0.0
    %4478 = vmatprep.subr.mxu0 0.0
    %4479 = vmatpush2.msra.mxu0 0.0
    %4480 = vmatprep.subr.mxu0 0.0
    %4481 = vmatpush2.msra.mxu0 0.0
    %4482 = vmatprep.subr.mxu0 0.0
    %4483 = vmatpush2.msra.mxu0 0.0
    %4484 = vmatprep.subr.mxu0 0.0
    %4485 = vmatpush2.msra.mxu0 0.0
    %4486 = vmatprep.subr.mxu0 0.0
    %4487 = vmatpush2.msra.mxu0 0.0
    %4488 = vmatprep.subr.mxu0 0.0
    %4489 = vmatpush2.msra.mxu0 0.0
    %4490 = vmatprep.subr.mxu0 0.0
    %4491 = vmatpush2.msra.mxu0 0.0
    %4492 = vmatprep.subr.mxu0 0.0
    %4493 = vmatpush2.msra.mxu0 0.0
    %4494 = vmatprep.subr.mxu0 0.0
    %4495 = vmatpush2.msra.mxu0 0.0
    %4496 = vmatprep.subr.mxu0 0.0
    %4497 = vmatpush2.msra.mxu0 0.0
    %4498 = vmatprep.subr.mxu0 0.0
    %4499 = vmatpush2.msra.mxu0 0.0
    %4500 = vmatprep.mubr.f32.mxu0 0.0
    %v4501 = vand.u32 %v3948, 4294901760
    %4502 = vmatmul.mubr.f32.gmra.mxu0 %v4501
    %v4503 = vpop.f32.mrf.mxu0
    %v4504 = vadd.f32 %v4385, %v4503
    %v4505 = vpop.f32.mrf.mxu0
    %4506 = vdwg.mxu0
    %4507 = vmatprep.subr.mxu0 0.0
    %v4508 = vand.u32 %v75, 4294901760
    %4509 = vmatpush1.msra.mxu0 %v4508
    %4510 = vmatprep.subr.mxu0 0.0
    %v4511 = vand.u32 %v74, 4294901760
    %4512 = vmatpush1.msra.mxu0 %v4511
    %4513 = vmatprep.subr.mxu0 0.0
    %v4514 = vand.u32 %v73, 4294901760
    %4515 = vmatpush1.msra.mxu0 %v4514
    %4516 = vmatprep.subr.mxu0 0.0
    %v4517 = vand.u32 %v72, 4294901760
    %4518 = vmatpush1.msra.mxu0 %v4517
    %4519 = vmatprep.subr.mxu0 0.0
    %v4520 = vand.u32 %v71, 4294901760
    %4521 = vmatpush1.msra.mxu0 %v4520
    %4522 = vmatprep.subr.mxu0 0.0
    %v4523 = vand.u32 %v70, 4294901760
    %4524 = vmatpush1.msra.mxu0 %v4523
    %4525 = vmatprep.subr.mxu0 0.0
    %v4526 = vand.u32 %v69, 4294901760
    %4527 = vmatpush1.msra.mxu0 %v4526
    %4528 = vmatprep.subr.mxu0 0.0
    %v4529 = vand.u32 %v68, 4294901760
    %4530 = vmatpush1.msra.mxu0 %v4529
    %4531 = vmatprep.subr.mxu0 0.0
    %v4532 = vand.u32 %v67, 4294901760
    %4533 = vmatpush1.msra.mxu0 %v4532
    %4534 = vmatprep.subr.mxu0 0.0
    %v4535 = vand.u32 %v66, 4294901760
    %4536 = vmatpush1.msra.mxu0 %v4535
    %4537 = vmatprep.subr.mxu0 0.0
    %v4538 = vand.u32 %v65, 4294901760
    %4539 = vmatpush1.msra.mxu0 %v4538
    %4540 = vmatprep.subr.mxu0 0.0
    %v4541 = vand.u32 %v64, 4294901760
    %4542 = vmatpush1.msra.mxu0 %v4541
    %4543 = vmatprep.subr.mxu0 0.0
    %v4544 = vand.u32 %v63, 4294901760
    %4545 = vmatpush1.msra.mxu0 %v4544
    %4546 = vmatprep.subr.mxu0 0.0
    %v4547 = vand.u32 %v62, 4294901760
    %4548 = vmatpush1.msra.mxu0 %v4547
    %4549 = vmatprep.subr.mxu0 0.0
    %v4550 = vand.u32 %v61, 4294901760
    %4551 = vmatpush1.msra.mxu0 %v4550
    %4552 = vmatprep.subr.mxu0 0.0
    %v4553 = vand.u32 %v60, 4294901760
    %4554 = vmatpush1.msra.mxu0 %v4553
    %4555 = vmatprep.subr.mxu0 0.0
    %4556 = vmatpush2.msra.mxu0 0.0
    %4557 = vmatprep.subr.mxu0 0.0
    %4558 = vmatpush2.msra.mxu0 0.0
    %4559 = vmatprep.subr.mxu0 0.0
    %4560 = vmatpush2.msra.mxu0 0.0
    %4561 = vmatprep.subr.mxu0 0.0
    %4562 = vmatpush2.msra.mxu0 0.0
    %4563 = vmatprep.subr.mxu0 0.0
    %4564 = vmatpush2.msra.mxu0 0.0
    %4565 = vmatprep.subr.mxu0 0.0
    %4566 = vmatpush2.msra.mxu0 0.0
    %4567 = vmatprep.subr.mxu0 0.0
    %4568 = vmatpush2.msra.mxu0 0.0
    %4569 = vmatprep.subr.mxu0 0.0
    %4570 = vmatpush2.msra.mxu0 0.0
    %4571 = vmatprep.subr.mxu0 0.0
    %4572 = vmatpush2.msra.mxu0 0.0
    %4573 = vmatprep.subr.mxu0 0.0
    %4574 = vmatpush2.msra.mxu0 0.0
    %4575 = vmatprep.subr.mxu0 0.0
    %4576 = vmatpush2.msra.mxu0 0.0
    %4577 = vmatprep.subr.mxu0 0.0
    %4578 = vmatpush2.msra.mxu0 0.0
    %4579 = vmatprep.subr.mxu0 0.0
    %4580 = vmatpush2.msra.mxu0 0.0
    %4581 = vmatprep.subr.mxu0 0.0
    %4582 = vmatpush2.msra.mxu0 0.0
    %4583 = vmatprep.subr.mxu0 0.0
    %4584 = vmatpush2.msra.mxu0 0.0
    %4585 = vmatprep.subr.mxu0 0.0
    %4586 = vmatpush2.msra.mxu0 0.0
    %4587 = vmatprep.mubr.f32.mxu0 0.0
    %v4588 = vand.u32 %v3948, 4294901760
    %4589 = vmatmul.mubr.f32.gmra.mxu0 %v4588
    %v4590 = vpop.f32.mrf.mxu0
    %v4591 = vadd.f32 %v4504, %v4590
    %v4592 = vpop.f32.mrf.mxu0
    %4593 = vdwg.mxu0
    %v4594 = vadd.f32 %v3952, %v4591
    %s4595 = scalar_lea.vmem [#allocation9], 48
    %4596 = vst [vmem:[%s4595] sm:$0xff] %v4594
    %s4597 = scalar_lea.vmem [#allocation3], 56
    %v4598 = vld [vmem:[%s4597] sm:$0xff]
    %4599 = vmatprep.subr.mxu0 0.0
    %v4600 = vand.u32 %v75, 4294901760
    %4601 = vmatpush1.msra.mxu0 %v4600
    %4602 = vmatprep.subr.mxu0 0.0
    %v4603 = vand.u32 %v74, 4294901760
    %4604 = vmatpush1.msra.mxu0 %v4603
    %4605 = vmatprep.subr.mxu0 0.0
    %v4606 = vand.u32 %v73, 4294901760
    %4607 = vmatpush1.msra.mxu0 %v4606
    %4608 = vmatprep.subr.mxu0 0.0
    %v4609 = vand.u32 %v72, 4294901760
    %4610 = vmatpush1.msra.mxu0 %v4609
    %4611 = vmatprep.subr.mxu0 0.0
    %v4612 = vand.u32 %v71, 4294901760
    %4613 = vmatpush1.msra.mxu0 %v4612
    %4614 = vmatprep.subr.mxu0 0.0
    %v4615 = vand.u32 %v70, 4294901760
    %4616 = vmatpush1.msra.mxu0 %v4615
    %4617 = vmatprep.subr.mxu0 0.0
    %v4618 = vand.u32 %v69, 4294901760
    %4619 = vmatpush1.msra.mxu0 %v4618
    %4620 = vmatprep.subr.mxu0 0.0
    %v4621 = vand.u32 %v68, 4294901760
    %4622 = vmatpush1.msra.mxu0 %v4621
    %4623 = vmatprep.subr.mxu0 0.0
    %v4624 = vand.u32 %v67, 4294901760
    %4625 = vmatpush1.msra.mxu0 %v4624
    %4626 = vmatprep.subr.mxu0 0.0
    %v4627 = vand.u32 %v66, 4294901760
    %4628 = vmatpush1.msra.mxu0 %v4627
    %4629 = vmatprep.subr.mxu0 0.0
    %v4630 = vand.u32 %v65, 4294901760
    %4631 = vmatpush1.msra.mxu0 %v4630
    %4632 = vmatprep.subr.mxu0 0.0
    %v4633 = vand.u32 %v64, 4294901760
    %4634 = vmatpush1.msra.mxu0 %v4633
    %4635 = vmatprep.subr.mxu0 0.0
    %v4636 = vand.u32 %v63, 4294901760
    %4637 = vmatpush1.msra.mxu0 %v4636
    %4638 = vmatprep.subr.mxu0 0.0
    %v4639 = vand.u32 %v62, 4294901760
    %4640 = vmatpush1.msra.mxu0 %v4639
    %4641 = vmatprep.subr.mxu0 0.0
    %v4642 = vand.u32 %v61, 4294901760
    %4643 = vmatpush1.msra.mxu0 %v4642
    %4644 = vmatprep.subr.mxu0 0.0
    %v4645 = vand.u32 %v60, 4294901760
    %4646 = vmatpush1.msra.mxu0 %v4645
    %4647 = vmatprep.subr.mxu0 0.0
    %4648 = vmatpush2.msra.mxu0 0.0
    %4649 = vmatprep.subr.mxu0 0.0
    %4650 = vmatpush2.msra.mxu0 0.0
    %4651 = vmatprep.subr.mxu0 0.0
    %4652 = vmatpush2.msra.mxu0 0.0
    %4653 = vmatprep.subr.mxu0 0.0
    %4654 = vmatpush2.msra.mxu0 0.0
    %4655 = vmatprep.subr.mxu0 0.0
    %4656 = vmatpush2.msra.mxu0 0.0
    %4657 = vmatprep.subr.mxu0 0.0
    %4658 = vmatpush2.msra.mxu0 0.0
    %4659 = vmatprep.subr.mxu0 0.0
    %4660 = vmatpush2.msra.mxu0 0.0
    %4661 = vmatprep.subr.mxu0 0.0
    %4662 = vmatpush2.msra.mxu0 0.0
    %4663 = vmatprep.subr.mxu0 0.0
    %4664 = vmatpush2.msra.mxu0 0.0
    %4665 = vmatprep.subr.mxu0 0.0
    %4666 = vmatpush2.msra.mxu0 0.0
    %4667 = vmatprep.subr.mxu0 0.0
    %4668 = vmatpush2.msra.mxu0 0.0
    %4669 = vmatprep.subr.mxu0 0.0
    %4670 = vmatpush2.msra.mxu0 0.0
    %4671 = vmatprep.subr.mxu0 0.0
    %4672 = vmatpush2.msra.mxu0 0.0
    %4673 = vmatprep.subr.mxu0 0.0
    %4674 = vmatpush2.msra.mxu0 0.0
    %4675 = vmatprep.subr.mxu0 0.0
    %4676 = vmatpush2.msra.mxu0 0.0
    %4677 = vmatprep.subr.mxu0 0.0
    %4678 = vmatpush2.msra.mxu0 0.0
    %4679 = vmatprep.mubr.f32.mxu0 0.0
    %v4680 = vand.u32 %v4594, 4294901760
    %v4681 = vsub.f32 %v4594, %v4680
    %v4682 = vand.u32 %v4681, 4294901760
    %v4683 = vsub.f32 %v4681, %v4682
    %v4684 = vand.u32 %v4683, 4294901760
    %4685 = vmatmul.mubr.f32.gmra.mxu0 %v4684
    %v4686 = vpop.f32.mrf.mxu0
    %v4687 = vadd.f32 0.0, %v4686
    %v4688 = vpop.f32.mrf.mxu0
    %4689 = vdwg.mxu0
    %4690 = vmatprep.subr.mxu0 0.0
    %v4691 = vand.u32 %v75, 4294901760
    %v4692 = vsub.f32 %v75, %v4691
    %v4693 = vand.u32 %v4692, 4294901760
    %v4694 = vsub.f32 %v4692, %v4693
    %v4695 = vand.u32 %v4694, 4294901760
    %4696 = vmatpush1.msra.mxu0 %v4695
    %4697 = vmatprep.subr.mxu0 0.0
    %v4698 = vand.u32 %v74, 4294901760
    %v4699 = vsub.f32 %v74, %v4698
    %v4700 = vand.u32 %v4699, 4294901760
    %v4701 = vsub.f32 %v4699, %v4700
    %v4702 = vand.u32 %v4701, 4294901760
    %4703 = vmatpush1.msra.mxu0 %v4702
    %4704 = vmatprep.subr.mxu0 0.0
    %v4705 = vand.u32 %v73, 4294901760
    %v4706 = vsub.f32 %v73, %v4705
    %v4707 = vand.u32 %v4706, 4294901760
    %v4708 = vsub.f32 %v4706, %v4707
    %v4709 = vand.u32 %v4708, 4294901760
    %4710 = vmatpush1.msra.mxu0 %v4709
    %4711 = vmatprep.subr.mxu0 0.0
    %v4712 = vand.u32 %v72, 4294901760
    %v4713 = vsub.f32 %v72, %v4712
    %v4714 = vand.u32 %v4713, 4294901760
    %v4715 = vsub.f32 %v4713, %v4714
    %v4716 = vand.u32 %v4715, 4294901760
    %4717 = vmatpush1.msra.mxu0 %v4716
    %4718 = vmatprep.subr.mxu0 0.0
    %v4719 = vand.u32 %v71, 4294901760
    %v4720 = vsub.f32 %v71, %v4719
    %v4721 = vand.u32 %v4720, 4294901760
    %v4722 = vsub.f32 %v4720, %v4721
    %v4723 = vand.u32 %v4722, 4294901760
    %4724 = vmatpush1.msra.mxu0 %v4723
    %4725 = vmatprep.subr.mxu0 0.0
    %v4726 = vand.u32 %v70, 4294901760
    %v4727 = vsub.f32 %v70, %v4726
    %v4728 = vand.u32 %v4727, 4294901760
    %v4729 = vsub.f32 %v4727, %v4728
    %v4730 = vand.u32 %v4729, 4294901760
    %4731 = vmatpush1.msra.mxu0 %v4730
    %4732 = vmatprep.subr.mxu0 0.0
    %v4733 = vand.u32 %v69, 4294901760
    %v4734 = vsub.f32 %v69, %v4733
    %v4735 = vand.u32 %v4734, 4294901760
    %v4736 = vsub.f32 %v4734, %v4735
    %v4737 = vand.u32 %v4736, 4294901760
    %4738 = vmatpush1.msra.mxu0 %v4737
    %4739 = vmatprep.subr.mxu0 0.0
    %v4740 = vand.u32 %v68, 4294901760
    %v4741 = vsub.f32 %v68, %v4740
    %v4742 = vand.u32 %v4741, 4294901760
    %v4743 = vsub.f32 %v4741, %v4742
    %v4744 = vand.u32 %v4743, 4294901760
    %4745 = vmatpush1.msra.mxu0 %v4744
    %4746 = vmatprep.subr.mxu0 0.0
    %v4747 = vand.u32 %v67, 4294901760
    %v4748 = vsub.f32 %v67, %v4747
    %v4749 = vand.u32 %v4748, 4294901760
    %v4750 = vsub.f32 %v4748, %v4749
    %v4751 = vand.u32 %v4750, 4294901760
    %4752 = vmatpush1.msra.mxu0 %v4751
    %4753 = vmatprep.subr.mxu0 0.0
    %v4754 = vand.u32 %v66, 4294901760
    %v4755 = vsub.f32 %v66, %v4754
    %v4756 = vand.u32 %v4755, 4294901760
    %v4757 = vsub.f32 %v4755, %v4756
    %v4758 = vand.u32 %v4757, 4294901760
    %4759 = vmatpush1.msra.mxu0 %v4758
    %4760 = vmatprep.subr.mxu0 0.0
    %v4761 = vand.u32 %v65, 4294901760
    %v4762 = vsub.f32 %v65, %v4761
    %v4763 = vand.u32 %v4762, 4294901760
    %v4764 = vsub.f32 %v4762, %v4763
    %v4765 = vand.u32 %v4764, 4294901760
    %4766 = vmatpush1.msra.mxu0 %v4765
    %4767 = vmatprep.subr.mxu0 0.0
    %v4768 = vand.u32 %v64, 4294901760
    %v4769 = vsub.f32 %v64, %v4768
    %v4770 = vand.u32 %v4769, 4294901760
    %v4771 = vsub.f32 %v4769, %v4770
    %v4772 = vand.u32 %v4771, 4294901760
    %4773 = vmatpush1.msra.mxu0 %v4772
    %4774 = vmatprep.subr.mxu0 0.0
    %v4775 = vand.u32 %v63, 4294901760
    %v4776 = vsub.f32 %v63, %v4775
    %v4777 = vand.u32 %v4776, 4294901760
    %v4778 = vsub.f32 %v4776, %v4777
    %v4779 = vand.u32 %v4778, 4294901760
    %4780 = vmatpush1.msra.mxu0 %v4779
    %4781 = vmatprep.subr.mxu0 0.0
    %v4782 = vand.u32 %v62, 4294901760
    %v4783 = vsub.f32 %v62, %v4782
    %v4784 = vand.u32 %v4783, 4294901760
    %v4785 = vsub.f32 %v4783, %v4784
    %v4786 = vand.u32 %v4785, 4294901760
    %4787 = vmatpush1.msra.mxu0 %v4786
    %4788 = vmatprep.subr.mxu0 0.0
    %v4789 = vand.u32 %v61, 4294901760
    %v4790 = vsub.f32 %v61, %v4789
    %v4791 = vand.u32 %v4790, 4294901760
    %v4792 = vsub.f32 %v4790, %v4791
    %v4793 = vand.u32 %v4792, 4294901760
    %4794 = vmatpush1.msra.mxu0 %v4793
    %4795 = vmatprep.subr.mxu0 0.0
    %v4796 = vand.u32 %v60, 4294901760
    %v4797 = vsub.f32 %v60, %v4796
    %v4798 = vand.u32 %v4797, 4294901760
    %v4799 = vsub.f32 %v4797, %v4798
    %v4800 = vand.u32 %v4799, 4294901760
    %4801 = vmatpush1.msra.mxu0 %v4800
    %4802 = vmatprep.subr.mxu0 0.0
    %4803 = vmatpush2.msra.mxu0 0.0
    %4804 = vmatprep.subr.mxu0 0.0
    %4805 = vmatpush2.msra.mxu0 0.0
    %4806 = vmatprep.subr.mxu0 0.0
    %4807 = vmatpush2.msra.mxu0 0.0
    %4808 = vmatprep.subr.mxu0 0.0
    %4809 = vmatpush2.msra.mxu0 0.0
    %4810 = vmatprep.subr.mxu0 0.0
    %4811 = vmatpush2.msra.mxu0 0.0
    %4812 = vmatprep.subr.mxu0 0.0
    %4813 = vmatpush2.msra.mxu0 0.0
    %4814 = vmatprep.subr.mxu0 0.0
    %4815 = vmatpush2.msra.mxu0 0.0
    %4816 = vmatprep.subr.mxu0 0.0
    %4817 = vmatpush2.msra.mxu0 0.0
    %4818 = vmatprep.subr.mxu0 0.0
    %4819 = vmatpush2.msra.mxu0 0.0
    %4820 = vmatprep.subr.mxu0 0.0
    %4821 = vmatpush2.msra.mxu0 0.0
    %4822 = vmatprep.subr.mxu0 0.0
    %4823 = vmatpush2.msra.mxu0 0.0
    %4824 = vmatprep.subr.mxu0 0.0
    %4825 = vmatpush2.msra.mxu0 0.0
    %4826 = vmatprep.subr.mxu0 0.0
    %4827 = vmatpush2.msra.mxu0 0.0
    %4828 = vmatprep.subr.mxu0 0.0
    %4829 = vmatpush2.msra.mxu0 0.0
    %4830 = vmatprep.subr.mxu0 0.0
    %4831 = vmatpush2.msra.mxu0 0.0
    %4832 = vmatprep.subr.mxu0 0.0
    %4833 = vmatpush2.msra.mxu0 0.0
    %4834 = vmatprep.mubr.f32.mxu0 0.0
    %v4835 = vand.u32 %v4594, 4294901760
    %4836 = vmatmul.mubr.f32.gmra.mxu0 %v4835
    %v4837 = vpop.f32.mrf.mxu0
    %v4838 = vadd.f32 %v4687, %v4837
    %v4839 = vpop.f32.mrf.mxu0
    %4840 = vdwg.mxu0
    %4841 = vmatprep.subr.mxu0 0.0
    %v4842 = vand.u32 %v75, 4294901760
    %v4843 = vsub.f32 %v75, %v4842
    %4844 = vmatpush1.msra.mxu0 %v4843
    %4845 = vmatprep.subr.mxu0 0.0
    %v4846 = vand.u32 %v74, 4294901760
    %v4847 = vsub.f32 %v74, %v4846
    %4848 = vmatpush1.msra.mxu0 %v4847
    %4849 = vmatprep.subr.mxu0 0.0
    %v4850 = vand.u32 %v73, 4294901760
    %v4851 = vsub.f32 %v73, %v4850
    %4852 = vmatpush1.msra.mxu0 %v4851
    %4853 = vmatprep.subr.mxu0 0.0
    %v4854 = vand.u32 %v72, 4294901760
    %v4855 = vsub.f32 %v72, %v4854
    %4856 = vmatpush1.msra.mxu0 %v4855
    %4857 = vmatprep.subr.mxu0 0.0
    %v4858 = vand.u32 %v71, 4294901760
    %v4859 = vsub.f32 %v71, %v4858
    %4860 = vmatpush1.msra.mxu0 %v4859
    %4861 = vmatprep.subr.mxu0 0.0
    %v4862 = vand.u32 %v70, 4294901760
    %v4863 = vsub.f32 %v70, %v4862
    %4864 = vmatpush1.msra.mxu0 %v4863
    %4865 = vmatprep.subr.mxu0 0.0
    %v4866 = vand.u32 %v69, 4294901760
    %v4867 = vsub.f32 %v69, %v4866
    %4868 = vmatpush1.msra.mxu0 %v4867
    %4869 = vmatprep.subr.mxu0 0.0
    %v4870 = vand.u32 %v68, 4294901760
    %v4871 = vsub.f32 %v68, %v4870
    %4872 = vmatpush1.msra.mxu0 %v4871
    %4873 = vmatprep.subr.mxu0 0.0
    %v4874 = vand.u32 %v67, 4294901760
    %v4875 = vsub.f32 %v67, %v4874
    %4876 = vmatpush1.msra.mxu0 %v4875
    %4877 = vmatprep.subr.mxu0 0.0
    %v4878 = vand.u32 %v66, 4294901760
    %v4879 = vsub.f32 %v66, %v4878
    %4880 = vmatpush1.msra.mxu0 %v4879
    %4881 = vmatprep.subr.mxu0 0.0
    %v4882 = vand.u32 %v65, 4294901760
    %v4883 = vsub.f32 %v65, %v4882
    %4884 = vmatpush1.msra.mxu0 %v4883
    %4885 = vmatprep.subr.mxu0 0.0
    %v4886 = vand.u32 %v64, 4294901760
    %v4887 = vsub.f32 %v64, %v4886
    %4888 = vmatpush1.msra.mxu0 %v4887
    %4889 = vmatprep.subr.mxu0 0.0
    %v4890 = vand.u32 %v63, 4294901760
    %v4891 = vsub.f32 %v63, %v4890
    %4892 = vmatpush1.msra.mxu0 %v4891
    %4893 = vmatprep.subr.mxu0 0.0
    %v4894 = vand.u32 %v62, 4294901760
    %v4895 = vsub.f32 %v62, %v4894
    %4896 = vmatpush1.msra.mxu0 %v4895
    %4897 = vmatprep.subr.mxu0 0.0
    %v4898 = vand.u32 %v61, 4294901760
    %v4899 = vsub.f32 %v61, %v4898
    %4900 = vmatpush1.msra.mxu0 %v4899
    %4901 = vmatprep.subr.mxu0 0.0
    %v4902 = vand.u32 %v60, 4294901760
    %v4903 = vsub.f32 %v60, %v4902
    %4904 = vmatpush1.msra.mxu0 %v4903
    %4905 = vmatprep.subr.mxu0 0.0
    %4906 = vmatpush2.msra.mxu0 0.0
    %4907 = vmatprep.subr.mxu0 0.0
    %4908 = vmatpush2.msra.mxu0 0.0
    %4909 = vmatprep.subr.mxu0 0.0
    %4910 = vmatpush2.msra.mxu0 0.0
    %4911 = vmatprep.subr.mxu0 0.0
    %4912 = vmatpush2.msra.mxu0 0.0
    %4913 = vmatprep.subr.mxu0 0.0
    %4914 = vmatpush2.msra.mxu0 0.0
    %4915 = vmatprep.subr.mxu0 0.0
    %4916 = vmatpush2.msra.mxu0 0.0
    %4917 = vmatprep.subr.mxu0 0.0
    %4918 = vmatpush2.msra.mxu0 0.0
    %4919 = vmatprep.subr.mxu0 0.0
    %4920 = vmatpush2.msra.mxu0 0.0
    %4921 = vmatprep.subr.mxu0 0.0
    %4922 = vmatpush2.msra.mxu0 0.0
    %4923 = vmatprep.subr.mxu0 0.0
    %4924 = vmatpush2.msra.mxu0 0.0
    %4925 = vmatprep.subr.mxu0 0.0
    %4926 = vmatpush2.msra.mxu0 0.0
    %4927 = vmatprep.subr.mxu0 0.0
    %4928 = vmatpush2.msra.mxu0 0.0
    %4929 = vmatprep.subr.mxu0 0.0
    %4930 = vmatpush2.msra.mxu0 0.0
    %4931 = vmatprep.subr.mxu0 0.0
    %4932 = vmatpush2.msra.mxu0 0.0
    %4933 = vmatprep.subr.mxu0 0.0
    %4934 = vmatpush2.msra.mxu0 0.0
    %4935 = vmatprep.subr.mxu0 0.0
    %4936 = vmatpush2.msra.mxu0 0.0
    %4937 = vmatprep.mubr.f32.mxu0 0.0
    %v4938 = vand.u32 %v4594, 4294901760
    %v4939 = vsub.f32 %v4594, %v4938
    %4940 = vmatmul.mubr.f32.gmra.mxu0 %v4939
    %v4941 = vpop.f32.mrf.mxu0
    %v4942 = vadd.f32 %v4838, %v4941
    %v4943 = vpop.f32.mrf.mxu0
    %4944 = vdwg.mxu0
    %4945 = vmatprep.subr.mxu0 0.0
    %v4946 = vand.u32 %v75, 4294901760
    %4947 = vmatpush1.msra.mxu0 %v4946
    %4948 = vmatprep.subr.mxu0 0.0
    %v4949 = vand.u32 %v74, 4294901760
    %4950 = vmatpush1.msra.mxu0 %v4949
    %4951 = vmatprep.subr.mxu0 0.0
    %v4952 = vand.u32 %v73, 4294901760
    %4953 = vmatpush1.msra.mxu0 %v4952
    %4954 = vmatprep.subr.mxu0 0.0
    %v4955 = vand.u32 %v72, 4294901760
    %4956 = vmatpush1.msra.mxu0 %v4955
    %4957 = vmatprep.subr.mxu0 0.0
    %v4958 = vand.u32 %v71, 4294901760
    %4959 = vmatpush1.msra.mxu0 %v4958
    %4960 = vmatprep.subr.mxu0 0.0
    %v4961 = vand.u32 %v70, 4294901760
    %4962 = vmatpush1.msra.mxu0 %v4961
    %4963 = vmatprep.subr.mxu0 0.0
    %v4964 = vand.u32 %v69, 4294901760
    %4965 = vmatpush1.msra.mxu0 %v4964
    %4966 = vmatprep.subr.mxu0 0.0
    %v4967 = vand.u32 %v68, 4294901760
    %4968 = vmatpush1.msra.mxu0 %v4967
    %4969 = vmatprep.subr.mxu0 0.0
    %v4970 = vand.u32 %v67, 4294901760
    %4971 = vmatpush1.msra.mxu0 %v4970
    %4972 = vmatprep.subr.mxu0 0.0
    %v4973 = vand.u32 %v66, 4294901760
    %4974 = vmatpush1.msra.mxu0 %v4973
    %4975 = vmatprep.subr.mxu0 0.0
    %v4976 = vand.u32 %v65, 4294901760
    %4977 = vmatpush1.msra.mxu0 %v4976
    %4978 = vmatprep.subr.mxu0 0.0
    %v4979 = vand.u32 %v64, 4294901760
    %4980 = vmatpush1.msra.mxu0 %v4979
    %4981 = vmatprep.subr.mxu0 0.0
    %v4982 = vand.u32 %v63, 4294901760
    %4983 = vmatpush1.msra.mxu0 %v4982
    %4984 = vmatprep.subr.mxu0 0.0
    %v4985 = vand.u32 %v62, 4294901760
    %4986 = vmatpush1.msra.mxu0 %v4985
    %4987 = vmatprep.subr.mxu0 0.0
    %v4988 = vand.u32 %v61, 4294901760
    %4989 = vmatpush1.msra.mxu0 %v4988
    %4990 = vmatprep.subr.mxu0 0.0
    %v4991 = vand.u32 %v60, 4294901760
    %4992 = vmatpush1.msra.mxu0 %v4991
    %4993 = vmatprep.subr.mxu0 0.0
    %4994 = vmatpush2.msra.mxu0 0.0
    %4995 = vmatprep.subr.mxu0 0.0
    %4996 = vmatpush2.msra.mxu0 0.0
    %4997 = vmatprep.subr.mxu0 0.0
    %4998 = vmatpush2.msra.mxu0 0.0
    %4999 = vmatprep.subr.mxu0 0.0
    %5000 = vmatpush2.msra.mxu0 0.0
    %5001 = vmatprep.subr.mxu0 0.0
    %5002 = vmatpush2.msra.mxu0 0.0
    %5003 = vmatprep.subr.mxu0 0.0
    %5004 = vmatpush2.msra.mxu0 0.0
    %5005 = vmatprep.subr.mxu0 0.0
    %5006 = vmatpush2.msra.mxu0 0.0
    %5007 = vmatprep.subr.mxu0 0.0
    %5008 = vmatpush2.msra.mxu0 0.0
    %5009 = vmatprep.subr.mxu0 0.0
    %5010 = vmatpush2.msra.mxu0 0.0
    %5011 = vmatprep.subr.mxu0 0.0
    %5012 = vmatpush2.msra.mxu0 0.0
    %5013 = vmatprep.subr.mxu0 0.0
    %5014 = vmatpush2.msra.mxu0 0.0
    %5015 = vmatprep.subr.mxu0 0.0
    %5016 = vmatpush2.msra.mxu0 0.0
    %5017 = vmatprep.subr.mxu0 0.0
    %5018 = vmatpush2.msra.mxu0 0.0
    %5019 = vmatprep.subr.mxu0 0.0
    %5020 = vmatpush2.msra.mxu0 0.0
    %5021 = vmatprep.subr.mxu0 0.0
    %5022 = vmatpush2.msra.mxu0 0.0
    %5023 = vmatprep.subr.mxu0 0.0
    %5024 = vmatpush2.msra.mxu0 0.0
    %5025 = vmatprep.mubr.f32.mxu0 0.0
    %v5026 = vand.u32 %v4594, 4294901760
    %v5027 = vsub.f32 %v4594, %v5026
    %v5028 = vand.u32 %v5027, 4294901760
    %5029 = vmatmul.mubr.f32.gmra.mxu0 %v5028
    %v5030 = vpop.f32.mrf.mxu0
    %v5031 = vadd.f32 %v4942, %v5030
    %v5032 = vpop.f32.mrf.mxu0
    %5033 = vdwg.mxu0
    %5034 = vmatprep.subr.mxu0 0.0
    %v5035 = vand.u32 %v75, 4294901760
    %v5036 = vsub.f32 %v75, %v5035
    %v5037 = vand.u32 %v5036, 4294901760
    %5038 = vmatpush1.msra.mxu0 %v5037
    %5039 = vmatprep.subr.mxu0 0.0
    %v5040 = vand.u32 %v74, 4294901760
    %v5041 = vsub.f32 %v74, %v5040
    %v5042 = vand.u32 %v5041, 4294901760
    %5043 = vmatpush1.msra.mxu0 %v5042
    %5044 = vmatprep.subr.mxu0 0.0
    %v5045 = vand.u32 %v73, 4294901760
    %v5046 = vsub.f32 %v73, %v5045
    %v5047 = vand.u32 %v5046, 4294901760
    %5048 = vmatpush1.msra.mxu0 %v5047
    %5049 = vmatprep.subr.mxu0 0.0
    %v5050 = vand.u32 %v72, 4294901760
    %v5051 = vsub.f32 %v72, %v5050
    %v5052 = vand.u32 %v5051, 4294901760
    %5053 = vmatpush1.msra.mxu0 %v5052
    %5054 = vmatprep.subr.mxu0 0.0
    %v5055 = vand.u32 %v71, 4294901760
    %v5056 = vsub.f32 %v71, %v5055
    %v5057 = vand.u32 %v5056, 4294901760
    %5058 = vmatpush1.msra.mxu0 %v5057
    %5059 = vmatprep.subr.mxu0 0.0
    %v5060 = vand.u32 %v70, 4294901760
    %v5061 = vsub.f32 %v70, %v5060
    %v5062 = vand.u32 %v5061, 4294901760
    %5063 = vmatpush1.msra.mxu0 %v5062
    %5064 = vmatprep.subr.mxu0 0.0
    %v5065 = vand.u32 %v69, 4294901760
    %v5066 = vsub.f32 %v69, %v5065
    %v5067 = vand.u32 %v5066, 4294901760
    %5068 = vmatpush1.msra.mxu0 %v5067
    %5069 = vmatprep.subr.mxu0 0.0
    %v5070 = vand.u32 %v68, 4294901760
    %v5071 = vsub.f32 %v68, %v5070
    %v5072 = vand.u32 %v5071, 4294901760
    %5073 = vmatpush1.msra.mxu0 %v5072
    %5074 = vmatprep.subr.mxu0 0.0
    %v5075 = vand.u32 %v67, 4294901760
    %v5076 = vsub.f32 %v67, %v5075
    %v5077 = vand.u32 %v5076, 4294901760
    %5078 = vmatpush1.msra.mxu0 %v5077
    %5079 = vmatprep.subr.mxu0 0.0
    %v5080 = vand.u32 %v66, 4294901760
    %v5081 = vsub.f32 %v66, %v5080
    %v5082 = vand.u32 %v5081, 4294901760
    %5083 = vmatpush1.msra.mxu0 %v5082
    %5084 = vmatprep.subr.mxu0 0.0
    %v5085 = vand.u32 %v65, 4294901760
    %v5086 = vsub.f32 %v65, %v5085
    %v5087 = vand.u32 %v5086, 4294901760
    %5088 = vmatpush1.msra.mxu0 %v5087
    %5089 = vmatprep.subr.mxu0 0.0
    %v5090 = vand.u32 %v64, 4294901760
    %v5091 = vsub.f32 %v64, %v5090
    %v5092 = vand.u32 %v5091, 4294901760
    %5093 = vmatpush1.msra.mxu0 %v5092
    %5094 = vmatprep.subr.mxu0 0.0
    %v5095 = vand.u32 %v63, 4294901760
    %v5096 = vsub.f32 %v63, %v5095
    %v5097 = vand.u32 %v5096, 4294901760
    %5098 = vmatpush1.msra.mxu0 %v5097
    %5099 = vmatprep.subr.mxu0 0.0
    %v5100 = vand.u32 %v62, 4294901760
    %v5101 = vsub.f32 %v62, %v5100
    %v5102 = vand.u32 %v5101, 4294901760
    %5103 = vmatpush1.msra.mxu0 %v5102
    %5104 = vmatprep.subr.mxu0 0.0
    %v5105 = vand.u32 %v61, 4294901760
    %v5106 = vsub.f32 %v61, %v5105
    %v5107 = vand.u32 %v5106, 4294901760
    %5108 = vmatpush1.msra.mxu0 %v5107
    %5109 = vmatprep.subr.mxu0 0.0
    %v5110 = vand.u32 %v60, 4294901760
    %v5111 = vsub.f32 %v60, %v5110
    %v5112 = vand.u32 %v5111, 4294901760
    %5113 = vmatpush1.msra.mxu0 %v5112
    %5114 = vmatprep.subr.mxu0 0.0
    %5115 = vmatpush2.msra.mxu0 0.0
    %5116 = vmatprep.subr.mxu0 0.0
    %5117 = vmatpush2.msra.mxu0 0.0
    %5118 = vmatprep.subr.mxu0 0.0
    %5119 = vmatpush2.msra.mxu0 0.0
    %5120 = vmatprep.subr.mxu0 0.0
    %5121 = vmatpush2.msra.mxu0 0.0
    %5122 = vmatprep.subr.mxu0 0.0
    %5123 = vmatpush2.msra.mxu0 0.0
    %5124 = vmatprep.subr.mxu0 0.0
    %5125 = vmatpush2.msra.mxu0 0.0
    %5126 = vmatprep.subr.mxu0 0.0
    %5127 = vmatpush2.msra.mxu0 0.0
    %5128 = vmatprep.subr.mxu0 0.0
    %5129 = vmatpush2.msra.mxu0 0.0
    %5130 = vmatprep.subr.mxu0 0.0
    %5131 = vmatpush2.msra.mxu0 0.0
    %5132 = vmatprep.subr.mxu0 0.0
    %5133 = vmatpush2.msra.mxu0 0.0
    %5134 = vmatprep.subr.mxu0 0.0
    %5135 = vmatpush2.msra.mxu0 0.0
    %5136 = vmatprep.subr.mxu0 0.0
    %5137 = vmatpush2.msra.mxu0 0.0
    %5138 = vmatprep.subr.mxu0 0.0
    %5139 = vmatpush2.msra.mxu0 0.0
    %5140 = vmatprep.subr.mxu0 0.0
    %5141 = vmatpush2.msra.mxu0 0.0
    %5142 = vmatprep.subr.mxu0 0.0
    %5143 = vmatpush2.msra.mxu0 0.0
    %5144 = vmatprep.subr.mxu0 0.0
    %5145 = vmatpush2.msra.mxu0 0.0
    %5146 = vmatprep.mubr.f32.mxu0 0.0
    %v5147 = vand.u32 %v4594, 4294901760
    %5148 = vmatmul.mubr.f32.gmra.mxu0 %v5147
    %v5149 = vpop.f32.mrf.mxu0
    %v5150 = vadd.f32 %v5031, %v5149
    %v5151 = vpop.f32.mrf.mxu0
    %5152 = vdwg.mxu0
    %5153 = vmatprep.subr.mxu0 0.0
    %v5154 = vand.u32 %v75, 4294901760
    %5155 = vmatpush1.msra.mxu0 %v5154
    %5156 = vmatprep.subr.mxu0 0.0
    %v5157 = vand.u32 %v74, 4294901760
    %5158 = vmatpush1.msra.mxu0 %v5157
    %5159 = vmatprep.subr.mxu0 0.0
    %v5160 = vand.u32 %v73, 4294901760
    %5161 = vmatpush1.msra.mxu0 %v5160
    %5162 = vmatprep.subr.mxu0 0.0
    %v5163 = vand.u32 %v72, 4294901760
    %5164 = vmatpush1.msra.mxu0 %v5163
    %5165 = vmatprep.subr.mxu0 0.0
    %v5166 = vand.u32 %v71, 4294901760
    %5167 = vmatpush1.msra.mxu0 %v5166
    %5168 = vmatprep.subr.mxu0 0.0
    %v5169 = vand.u32 %v70, 4294901760
    %5170 = vmatpush1.msra.mxu0 %v5169
    %5171 = vmatprep.subr.mxu0 0.0
    %v5172 = vand.u32 %v69, 4294901760
    %5173 = vmatpush1.msra.mxu0 %v5172
    %5174 = vmatprep.subr.mxu0 0.0
    %v5175 = vand.u32 %v68, 4294901760
    %5176 = vmatpush1.msra.mxu0 %v5175
    %5177 = vmatprep.subr.mxu0 0.0
    %v5178 = vand.u32 %v67, 4294901760
    %5179 = vmatpush1.msra.mxu0 %v5178
    %5180 = vmatprep.subr.mxu0 0.0
    %v5181 = vand.u32 %v66, 4294901760
    %5182 = vmatpush1.msra.mxu0 %v5181
    %5183 = vmatprep.subr.mxu0 0.0
    %v5184 = vand.u32 %v65, 4294901760
    %5185 = vmatpush1.msra.mxu0 %v5184
    %5186 = vmatprep.subr.mxu0 0.0
    %v5187 = vand.u32 %v64, 4294901760
    %5188 = vmatpush1.msra.mxu0 %v5187
    %5189 = vmatprep.subr.mxu0 0.0
    %v5190 = vand.u32 %v63, 4294901760
    %5191 = vmatpush1.msra.mxu0 %v5190
    %5192 = vmatprep.subr.mxu0 0.0
    %v5193 = vand.u32 %v62, 4294901760
    %5194 = vmatpush1.msra.mxu0 %v5193
    %5195 = vmatprep.subr.mxu0 0.0
    %v5196 = vand.u32 %v61, 4294901760
    %5197 = vmatpush1.msra.mxu0 %v5196
    %5198 = vmatprep.subr.mxu0 0.0
    %v5199 = vand.u32 %v60, 4294901760
    %5200 = vmatpush1.msra.mxu0 %v5199
    %5201 = vmatprep.subr.mxu0 0.0
    %5202 = vmatpush2.msra.mxu0 0.0
    %5203 = vmatprep.subr.mxu0 0.0
    %5204 = vmatpush2.msra.mxu0 0.0
    %5205 = vmatprep.subr.mxu0 0.0
    %5206 = vmatpush2.msra.mxu0 0.0
    %5207 = vmatprep.subr.mxu0 0.0
    %5208 = vmatpush2.msra.mxu0 0.0
    %5209 = vmatprep.subr.mxu0 0.0
    %5210 = vmatpush2.msra.mxu0 0.0
    %5211 = vmatprep.subr.mxu0 0.0
    %5212 = vmatpush2.msra.mxu0 0.0
    %5213 = vmatprep.subr.mxu0 0.0
    %5214 = vmatpush2.msra.mxu0 0.0
    %5215 = vmatprep.subr.mxu0 0.0
    %5216 = vmatpush2.msra.mxu0 0.0
    %5217 = vmatprep.subr.mxu0 0.0
    %5218 = vmatpush2.msra.mxu0 0.0
    %5219 = vmatprep.subr.mxu0 0.0
    %5220 = vmatpush2.msra.mxu0 0.0
    %5221 = vmatprep.subr.mxu0 0.0
    %5222 = vmatpush2.msra.mxu0 0.0
    %5223 = vmatprep.subr.mxu0 0.0
    %5224 = vmatpush2.msra.mxu0 0.0
    %5225 = vmatprep.subr.mxu0 0.0
    %5226 = vmatpush2.msra.mxu0 0.0
    %5227 = vmatprep.subr.mxu0 0.0
    %5228 = vmatpush2.msra.mxu0 0.0
    %5229 = vmatprep.subr.mxu0 0.0
    %5230 = vmatpush2.msra.mxu0 0.0
    %5231 = vmatprep.subr.mxu0 0.0
    %5232 = vmatpush2.msra.mxu0 0.0
    %5233 = vmatprep.mubr.f32.mxu0 0.0
    %v5234 = vand.u32 %v4594, 4294901760
    %5235 = vmatmul.mubr.f32.gmra.mxu0 %v5234
    %v5236 = vpop.f32.mrf.mxu0
    %v5237 = vadd.f32 %v5150, %v5236
    %v5238 = vpop.f32.mrf.mxu0
    %5239 = vdwg.mxu0
    %v5240 = vadd.f32 %v4598, %v5237
    %s5241 = scalar_lea.vmem [#allocation9], 56
    %5242 = vst [vmem:[%s5241] sm:$0xff] %v5240
    %5243 = vst [vmem:[#allocation2] sm:$0xff] %v5240
    %v5244 = vld [vmem:[#allocation9] sm:$0xff]
    %v5245 = vld [vmem:[#allocation9 + $0x8] sm:$0xff]
    %v5246 = vld [vmem:[#allocation9 + $0x10] sm:$0xff]
    %v5247 = vld [vmem:[#allocation9 + $0x18] sm:$0xff]
    %v5248 = vld [vmem:[#allocation9 + $0x20] sm:$0xff]
    %v5249 = vld [vmem:[#allocation9 + $0x28] sm:$0xff]
    %v5250 = vld [vmem:[#allocation9 + $0x30] sm:$0xff]
    %v5251 = vld [vmem:[#allocation9 + $0x38] sm:$0xff]
    %v5252 = vlaneseq
    %v5253 = vand.u32 %v5252, 127
    %vm5254 = vcmp.ge.s32.totalorder %v5253, 32
    %vm5255 = vcmp.lt.s32.totalorder %v5253, 40
    %vm5256 = vmand %vm5254, %vm5255
    %v5257 = vsel %vm5256, %v5244, -inf
    %v5258 = vsel %vm5256, %v5245, -inf
    %v5259 = vsel %vm5256, %v5246, -inf
    %v5260 = vsel %vm5256, %v5247, -inf
    %v5261 = vsel %vm5256, %v5248, -inf
    %v5262 = vsel %vm5256, %v5249, -inf
    %v5263 = vsel %vm5256, %v5250, -inf
    %v5264 = vsel %vm5256, %v5251, -inf
    %5265 = vmax.xlane.f32.xlu0 %v5257
    %v5266 = vpop.xlane.xlu0 %5265
    %5267 = vmax.xlane.f32.xlu0 %v5258
    %v5268 = vpop.xlane.xlu0 %5267
    %5269 = vmax.xlane.f32.xlu0 %v5259
    %v5270 = vpop.xlane.xlu0 %5269
    %5271 = vmax.xlane.f32.xlu0 %v5260
    %v5272 = vpop.xlane.xlu0 %5271
    %5273 = vmax.xlane.f32.xlu0 %v5261
    %v5274 = vpop.xlane.xlu0 %5273
    %5275 = vmax.xlane.f32.xlu0 %v5262
    %v5276 = vpop.xlane.xlu0 %5275
    %5277 = vmax.xlane.f32.xlu0 %v5263
    %v5278 = vpop.xlane.xlu0 %5277
    %5279 = vmax.xlane.f32.xlu0 %v5264
    %v5280 = vpop.xlane.xlu0 %5279
    %v5281 = vsub.f32 %v5257, %v5266
    %v5282 = vsub.f32 %v5258, %v5268
    %v5283 = vsub.f32 %v5259, %v5270
    %v5284 = vsub.f32 %v5260, %v5272
    %v5285 = vsub.f32 %v5261, %v5274
    %v5286 = vsub.f32 %v5262, %v5276
    %v5287 = vsub.f32 %v5263, %v5278
    %v5288 = vsub.f32 %v5264, %v5280
    %v5289 = vmul.f32 %v5281, 1.442695
    %v5290 = vpow.pop %v5289
    %v5291 = vmul.f32 %v5282, 1.442695
    %v5292 = vpow.pop %v5291
    %v5293 = vmul.f32 %v5283, 1.442695
    %v5294 = vpow.pop %v5293
    %v5295 = vmul.f32 %v5284, 1.442695
    %v5296 = vpow.pop %v5295
    %v5297 = vmul.f32 %v5285, 1.442695
    %v5298 = vpow.pop %v5297
    %v5299 = vmul.f32 %v5286, 1.442695
    %v5300 = vpow.pop %v5299
    %v5301 = vmul.f32 %v5287, 1.442695
    %v5302 = vpow.pop %v5301
    %v5303 = vmul.f32 %v5288, 1.442695
    %v5304 = vpow.pop %v5303
    %5305 = vadd.xlane.f32.xlu0 %v5290
    %v5306 = vpop.xlane.xlu0 %5305
    %5307 = vadd.xlane.f32.xlu0 %v5292
    %v5308 = vpop.xlane.xlu0 %5307
    %5309 = vadd.xlane.f32.xlu0 %v5294
    %v5310 = vpop.xlane.xlu0 %5309
    %5311 = vadd.xlane.f32.xlu0 %v5296
    %v5312 = vpop.xlane.xlu0 %5311
    %5313 = vadd.xlane.f32.xlu0 %v5298
    %v5314 = vpop.xlane.xlu0 %5313
    %5315 = vadd.xlane.f32.xlu0 %v5300
    %v5316 = vpop.xlane.xlu0 %5315
    %5317 = vadd.xlane.f32.xlu0 %v5302
    %v5318 = vpop.xlane.xlu0 %5317
    %5319 = vadd.xlane.f32.xlu0 %v5304
    %v5320 = vpop.xlane.xlu0 %5319
    %v5321 = vlog2.pop %v5306
    %v5322 = vmul.f32 %v5321, 0.6931472
    %v5323 = vlog2.pop %v5308
    %v5324 = vmul.f32 %v5323, 0.6931472
    %v5325 = vlog2.pop %v5310
    %v5326 = vmul.f32 %v5325, 0.6931472
    %v5327 = vlog2.pop %v5312
    %v5328 = vmul.f32 %v5327, 0.6931472
    %v5329 = vlog2.pop %v5314
    %v5330 = vmul.f32 %v5329, 0.6931472
    %v5331 = vlog2.pop %v5316
    %v5332 = vmul.f32 %v5331, 0.6931472
    %v5333 = vlog2.pop %v5318
    %v5334 = vmul.f32 %v5333, 0.6931472
    %v5335 = vlog2.pop %v5320
    %v5336 = vmul.f32 %v5335, 0.6931472
    %v5337 = vsub.f32 %v5244, %v5266
    %v5338 = vsub.f32 %v5245, %v5268
    %v5339 = vsub.f32 %v5246, %v5270
    %v5340 = vsub.f32 %v5247, %v5272
    %v5341 = vsub.f32 %v5248, %v5274
    %v5342 = vsub.f32 %v5249, %v5276
    %v5343 = vsub.f32 %v5250, %v5278
    %v5344 = vsub.f32 %v5251, %v5280
    %v5345 = vsub.f32 %v5337, %v5322
    %v5346 = vsub.f32 %v5338, %v5324
    %v5347 = vsub.f32 %v5339, %v5326
    %v5348 = vsub.f32 %v5340, %v5328
    %v5349 = vsub.f32 %v5341, %v5330
    %v5350 = vsub.f32 %v5342, %v5332
    %v5351 = vsub.f32 %v5343, %v5334
    %v5352 = vsub.f32 %v5344, %v5336
    %v5353 = vsel %vm5256, %v5345, %v5244
    %v5354 = vsel %vm5256, %v5346, %v5245
    %v5355 = vsel %vm5256, %v5347, %v5246
    %v5356 = vsel %vm5256, %v5348, %v5247
    %v5357 = vsel %vm5256, %v5349, %v5248
    %v5358 = vsel %vm5256, %v5350, %v5249
    %v5359 = vsel %vm5256, %v5351, %v5250
    %v5360 = vsel %vm5256, %v5352, %v5251
    %5361 = vst [vmem:[#allocation9] sm:$0xff] %v5353
    %5362 = vst [vmem:[#allocation9 + $0x8] sm:$0xff] %v5354
    %5363 = vst [vmem:[#allocation9 + $0x10] sm:$0xff] %v5355
    %5364 = vst [vmem:[#allocation9 + $0x18] sm:$0xff] %v5356
    %5365 = vst [vmem:[#allocation9 + $0x20] sm:$0xff] %v5357
    %5366 = vst [vmem:[#allocation9 + $0x28] sm:$0xff] %v5358
    %5367 = vst [vmem:[#allocation9 + $0x30] sm:$0xff] %v5359
    %5368 = vst [vmem:[#allocation9 + $0x38] sm:$0xff] %v5360
    // Predicated region
    $region30: #{tpu_custom_call.1} parent=1 // pred_check
      _
    $region31: #{tpu_custom_call.1} parent=1 // pred_check_branch
      %5370 = sbr.rel (0) target = $region33
    $region32: #{tpu_custom_call.1} parent=1 // pred_region
      %s5372 = ssub.s32 1024, 1024
      %5373 = vsyncadd [#allocation5], %s5372
      %s5374 = sshll.u32 [#allocation9], 4
      %s5375 = int_to_ptr.vmem [resolvable:$true] %s5374
      %5380 = dma.vmem_to_hbm [thread:$0]  %s5375, 1024, %s3, [#allocation5], 128, 128, 8
    $region33: #{tpu_custom_call.1} parent=1 // pred_fallthru
      _
    // Predicated region
    $region34: #{tpu_custom_call.1} parent=1 // pred_check
      _
    $region35: #{tpu_custom_call.1} parent=1 // pred_check_branch
      %5382 = sbr.rel (0) target = $region37
    $region36: #{tpu_custom_call.1} parent=1 // pred_region
      %5383 = dma.done [#allocation5], 1024
    $region37: #{tpu_custom_call.1} parent=1 // pred_fallthru
      _
    %5384 = vsyncpa [#allocation4], 1
    %5385 = vsyncpa [#allocation7], 1
    %5386 = vsyncpa [#allocation5], 1

</llo_original>
